<compile_context>
chip_gen: v7x
topology: tpu7x:2x2x1
jax: 0.10.0
libtpu: 0.0.40
codegen_flags: <defaults>
</compile_context>

<pallas_src>
import functools
import math

import jax
import jax.numpy as jnp
from jax.experimental import pallas as pl
from jax.experimental.pallas import tpu as pltpu


# ----------------------------- in-kernel helpers -----------------------------

def _gelu(x):
    # TODO(synk): PyTorch's activation='gelu' is the exact erf-GELU; the tanh
    # approximation is used to avoid relying on erf lowering in Mosaic
    # (~1e-3 level mismatch).
    c = 0.7978845608028654  # sqrt(2/pi)
    return 0.5 * x * (1.0 + jnp.tanh(c * (x + 0.044715 * x * x * x)))


def _layer_norm(x, w, b, eps=1e-5):
    mu = jnp.mean(x, axis=-1, keepdims=True)
    var = jnp.mean(jnp.square(x - mu), axis=-1, keepdims=True)
    return (x - mu) * jax.lax.rsqrt(var + eps) * w + b


def _mha(h_flat, tb, num_heads, in_w, in_b, out_w, out_b):
    """PyTorch nn.MultiheadAttention (batch_first, eval) on a (TB*S, E) slab.

    h_flat: (TB*S, E) f32;  in_w: (E, 3E) bf16 (pre-transposed, q columns
    pre-scaled by 1/sqrt(hd));  out_w: (E, E) bf16;  biases f32.
    Returns a (TB*S, E) f32 slab.
    """
    BS, E = h_flat.shape
    S = BS // tb
    hd = E // num_heads

    qkv = (jnp.dot(h_flat.astype(jnp.bfloat16), in_w,
                   preferred_element_type=jnp.float32) + in_b)        # (TB*S, 3E)

    # TODO(synk): the per-head lane slices below could become a single
    # (tb,S,3,H,hd) reshape + (b,h)-batched einsum once Mosaic supports the
    # required non-minor-dim transposes; until then the big-N qkv matmul plus
    # static lane slices is the portable formulation.
    parts = []
    for hh in range(num_heads):
        lo = hh * hd
        qh = qkv[:, lo:lo + hd].reshape(tb, S, hd).astype(jnp.bfloat16)
        kh = qkv[:, E + lo:E + lo + hd].reshape(tb, S, hd).astype(jnp.bfloat16)
        vh = qkv[:, 2 * E + lo:2 * E + lo + hd].reshape(tb, S, hd).astype(jnp.bfloat16)
        # TODO(synk): for very large S on v7x (64 MiB VMEM), tile the kv axis
        # with an online softmax instead of the full (tb,S,S) score block.
        s = jnp.einsum('bqd,bkd->bqk', qh, kh,
                       preferred_element_type=jnp.float32)            # (TB, S, S)
        s = s - jnp.max(s, axis=-1, keepdims=True)
        e = jnp.exp(s)
        p = e * pl.reciprocal(jnp.sum(e, axis=-1, keepdims=True), approx=True)
        oh = jnp.einsum('bqk,bkd->bqd', p.astype(jnp.bfloat16), vh,
                        preferred_element_type=jnp.float32)           # (TB, S, hd)
        parts.append(oh.reshape(BS, hd))
    # Single re-assembly of the heads, then one K=E out-projection matmul.
    o = parts[0] if num_heads == 1 else jnp.concatenate(parts, axis=-1)  # (TB*S, E)
    return (jnp.dot(o.astype(jnp.bfloat16), out_w,
                    preferred_element_type=jnp.float32) + out_b)


# --------------------------------- the kernel --------------------------------

def fmri_transformer_kernel(
    x_ref,                                               # (TB, S, R) bf16
    pool_ref,                                            # (n_net, S) bf16
    proj_w_ref, proj_b_ref,                              # (R, E) bf16, (1, E) f32
    enc_inw_ref, enc_inb_ref, enc_ow_ref, enc_ob_ref,    # (L,E,3E),(L,1,3E),(L,E,E),(L,1,E)
    enc_l1w_ref, enc_l1b_ref, enc_l2w_ref, enc_l2b_ref,  # (L,E,2E),(L,1,2E),(L,2E,E),(L,1,E)
    enc_n1w_ref, enc_n1b_ref, enc_n2w_ref, enc_n2b_ref,  # (L,1,E) x4
    agg_inw_ref, agg_inb_ref, agg_ow_ref, agg_ob_ref,    # (E,3E),(1,3E),(E,E),(1,E)
    cls_lnw_ref, cls_lnb_ref, cls_w1_ref, cls_b1_ref, cls_w2_ref, cls_b2_ref,
    o_ref,                                               # (1, TB, C_pad) f32
    *, tb, n_rois, roi_dim, d_model, num_heads, num_layers, n_networks,
):
    S, E = n_rois, d_model

    # ROI projection: Linear(roi_dim -> d_model) on the flattened token slab.
    x = x_ref[...].reshape(tb * S, roi_dim)                            # bf16
    h = (jnp.dot(x, proj_w_ref[...], preferred_element_type=jnp.float32)
         + proj_b_ref[...])                                            # (TB*S, E) f32

    # TransformerEncoder: post-LN layers, GELU FFN, dropout inactive (eval).
    # Rolled loop with dynamic layer indexing bounds live ranges per layer.
    # TODO(synk): for large L*E, keep the stacked encoder weights in HBM
    # (memory_space=pl.ANY) and stream them per layer with a 2-deep
    # make_async_copy buffer instead of keeping all layers VMEM-resident.
    def layer_body(l, hc):
        sa = _mha(hc, tb, num_heads, enc_inw_ref[l], enc_inb_ref[l],
                  enc_ow_ref[l], enc_ob_ref[l])
        hc = _layer_norm(hc + sa, enc_n1w_ref[l], enc_n1b_ref[l])
        ff_h = _gelu(jnp.dot(hc.astype(jnp.bfloat16), enc_l1w_ref[l],
                             preferred_element_type=jnp.float32) + enc_l1b_ref[l])
        ff = jnp.dot(ff_h.astype(jnp.bfloat16), enc_l2w_ref[l],
                     preferred_element_type=jnp.float32) + enc_l2b_ref[l]
        return _layer_norm(hc + ff, enc_n2w_ref[l], enc_n2b_ref[l])

    h = jax.lax.fori_loop(0, num_layers, layer_body, h)                # (TB*S, E)

    # Network pooling: per-network mean (last group absorbs the remainder) as
    # a batched bf16 contraction against a small (n_net, S) averaging matrix.
    pool = jnp.broadcast_to(pool_ref[...], (tb, n_networks, S))
    net = jnp.einsum('bns,bse->bne', pool,
                     h.reshape(tb, S, E).astype(jnp.bfloat16),
                     preferred_element_type=jnp.float32)               # (TB, n_net, E)
    net = net.reshape(tb * n_networks, E)

    # Network aggregation self-attention (layer_dropout identity in eval).
    att = _mha(net, tb, num_heads, agg_inw_ref[...], agg_inb_ref[...],
               agg_ow_ref[...], agg_ob_ref[...])                       # (TB*n_net, E)

    # Global mean over the n_networks network tokens (tiny; unrolled adds).
    att3 = att.reshape(tb, n_networks, E)
    g = att3[:, 0]
    for i in range(1, n_networks):
        g = g + att3[:, i]
    g = g * (1.0 / n_networks)                                         # (TB, E)

    # Classifier: LayerNorm -> Linear -> GELU -> Linear (lane-dense padded out).
    z = _layer_norm(g, cls_lnw_ref[...], cls_lnb_ref[...])
    z = _gelu(jnp.dot(z.astype(jnp.bfloat16), cls_w1_ref[...],
                      preferred_element_type=jnp.float32) + cls_b1_ref[...])
    logits = (jnp.dot(z.astype(jnp.bfloat16), cls_w2_ref[...],
                      preferred_element_type=jnp.float32) + cls_b2_ref[...])
    o_ref[0] = logits


# ------------------------------ parameter setup -------------------------------

PARAM_ORDER = [
    "proj_w", "proj_b",
    "enc_inw", "enc_inb", "enc_ow", "enc_ob",
    "enc_l1w", "enc_l1b", "enc_l2w", "enc_l2b",
    "enc_n1w", "enc_n1b", "enc_n2w", "enc_n2b",
    "agg_inw", "agg_inb", "agg_ow", "agg_ob",
    "cls_lnw", "cls_lnb", "cls_w1", "cls_b1", "cls_w2", "cls_b2",
]

BF16_WEIGHTS = frozenset({
    "proj_w", "enc_inw", "enc_ow", "enc_l1w", "enc_l2w",
    "agg_inw", "agg_ow", "cls_w1", "cls_w2",
})


def init_params(key, *, roi_dim, d_model, num_layers, num_classes):
    """Xavier-uniform weights, zero biases, unit LayerNorm (as in _init_weights)."""
    E, F, L = d_model, 2 * d_model, num_layers
    keys = iter(jax.random.split(key, 128))

    def xavier(shape, fan_in, fan_out):
        a = math.sqrt(6.0 / (fan_in + fan_out))
        return jax.random.uniform(next(keys), shape, jnp.float32, -a, a)

    def stack(fn):
        return jnp.stack([fn() for _ in range(L)])

    p = {}
    p["proj_w"] = xavier((roi_dim, E), roi_dim, E)
    p["proj_b"] = jnp.zeros((1, E), jnp.float32)
    p["enc_inw"] = stack(lambda: xavier((E, 3 * E), E, 3 * E))
    p["enc_inb"] = jnp.zeros((L, 1, 3 * E), jnp.float32)
    p["enc_ow"] = stack(lambda: xavier((E, E), E, E))
    p["enc_ob"] = jnp.zeros((L, 1, E), jnp.float32)
    p["enc_l1w"] = stack(lambda: xavier((E, F), E, F))
    p["enc_l1b"] = jnp.zeros((L, 1, F), jnp.float32)
    p["enc_l2w"] = stack(lambda: xavier((F, E), F, E))
    p["enc_l2b"] = jnp.zeros((L, 1, E), jnp.float32)
    p["enc_n1w"] = jnp.ones((L, 1, E), jnp.float32)
    p["enc_n1b"] = jnp.zeros((L, 1, E), jnp.float32)
    p["enc_n2w"] = jnp.ones((L, 1, E), jnp.float32)
    p["enc_n2b"] = jnp.zeros((L, 1, E), jnp.float32)
    p["agg_inw"] = xavier((E, 3 * E), E, 3 * E)
    p["agg_inb"] = jnp.zeros((1, 3 * E), jnp.float32)
    p["agg_ow"] = xavier((E, E), E, E)
    p["agg_ob"] = jnp.zeros((1, E), jnp.float32)
    p["cls_lnw"] = jnp.ones((1, E), jnp.float32)
    p["cls_lnb"] = jnp.zeros((1, E), jnp.float32)
    p["cls_w1"] = xavier((E, E // 2), E, E // 2)
    p["cls_b1"] = jnp.zeros((1, E // 2), jnp.float32)
    p["cls_w2"] = xavier((E // 2, num_classes), E // 2, num_classes)
    p["cls_b2"] = jnp.zeros((1, num_classes), jnp.float32)
    return p


# --------------------------------- wrapper ------------------------------------

def _pick_vmem_limit_bytes():
    """Scoped-VMEM request sized to the local TPU generation:
    v5e/v6e (128 MiB physical) -> ~96 MiB; v7x (64 MiB per TC) -> ~48 MiB."""
    cap = 128 * 1024 * 1024
    try:
        cap = int(pltpu.get_tpu_info().vmem_capacity_bytes)
    except Exception:
        try:
            kind = jax.devices()[0].device_kind.lower()
            if any(t in kind for t in ("v7", "tpu7", "7x")):
                cap = 64 * 1024 * 1024
        except Exception:
            pass
    return min((cap * 3) // 4, 100 * 1024 * 1024)


def fmri_network_transformer_forward(fmri_features, params, *, n_rois, roi_dim,
                                     d_model, num_heads, num_layers,
                                     num_classes, n_networks=8, batch_tile=8):
    B = fmri_features.shape[0]
    total = n_rois * roi_dim
    x = fmri_features[:, :total].reshape(B, n_rois, roi_dim)

    # Batch tile: keep the grid length >= 2 so the "parallel" batch axis can
    # split across both TensorCores on v7x (and amortize per-step overhead).
    TB = min(batch_tile, max(1, (B + 1) // 2))
    G = -(-B // TB)                      # number of grid steps
    B_pad = G * TB
    if B_pad != B:
        x = jnp.pad(x, ((0, B_pad - B), (0, 0), (0, 0)))
    x = x.astype(jnp.bfloat16)

    E = d_model
    hd = d_model // num_heads

    # Lane-dense logits slab: pad the final classifier layer to 128 lanes.
    C_pad = ((num_classes + 127) // 128) * 128
    prm = dict(params)
    w2, b2 = params["cls_w2"], params["cls_b2"]
    prm["cls_w2"] = jnp.zeros((w2.shape[0], C_pad), jnp.float32).at[:, :num_classes].set(w2)
    prm["cls_b2"] = jnp.zeros((1, C_pad), jnp.float32).at[:, :num_classes].set(b2)

    # Fold the 1/sqrt(hd) attention scale into the q columns of the in-proj
    # weights/biases (one-time parameter transform).
    scale = 1.0 / math.sqrt(hd)
    prm["enc_inw"] = prm["enc_inw"].at[..., :E].multiply(scale)
    prm["enc_inb"] = prm["enc_inb"].at[..., :E].multiply(scale)
    prm["agg_inw"] = prm["agg_inw"].at[..., :E].multiply(scale)
    prm["agg_inb"] = prm["agg_inb"].at[..., :E].multiply(scale)

    weights = []
    for name in PARAM_ORDER:
        w = prm[name]
        if name in BF16_WEIGHTS:
            w = w.astype(jnp.bfloat16)
        weights.append(w)

    # Per-network averaging matrix (n_networks, S) in bf16:
    #   network_id(i) = min(i // (n_rois // n_networks), n_networks - 1),
    # last network absorbs the remainder.  Applied in-kernel as a batched
    # bf16 contraction (no block-diagonal kron, no f32 MXU passes).
    rpn = n_rois // n_networks
    assign = jnp.minimum(jnp.arange(n_rois) // rpn, n_networks - 1)
    onehot = (jnp.arange(n_networks)[:, None] == assign[None, :]).astype(jnp.float32)
    pool = (onehot / jnp.sum(onehot, axis=1, keepdims=True)).astype(jnp.bfloat16)

    kernel = functools.partial(
        fmri_transformer_kernel,
        tb=TB, n_rois=n_rois, roi_dim=roi_dim, d_model=d_model,
        num_heads=num_heads, num_layers=num_layers, n_networks=n_networks)

    def full_spec(arr):
        nd = arr.ndim
        # TODO(synk): once BlockSpec pipeline_mode=pl.Buffered(1) is honored by
        # the Mosaic pallas_call pipeliner, mark these constant-index weight
        # blocks single-buffered to halve their VMEM residency on v7x.
        return pl.BlockSpec(arr.shape, lambda b, _n=nd: (0,) * _n)

    in_specs = ([pl.BlockSpec((TB, n_rois, roi_dim), lambda b: (b, 0, 0)),
                 full_spec(pool)]
                + [full_spec(w) for w in weights])
    out_spec = pl.BlockSpec((1, TB, C_pad), lambda b: (b, 0, 0))

    out = pl.pallas_call(
        kernel,
        out_shape=jax.ShapeDtypeStruct((G, TB, C_pad), jnp.float32),
        grid_spec=pltpu.PrefetchScalarGridSpec(
            num_scalar_prefetch=0,
            grid=(G,),
            in_specs=in_specs,
            out_specs=out_spec,
        ),
        compiler_params=pltpu.CompilerParams(
            dimension_semantics=("parallel",),
            vmem_limit_bytes=_pick_vmem_limit_bytes()),
    )(x, pool, *weights)
    return out.reshape(B_pad, C_pad)[:B, :num_classes]   # (B, num_classes)


# ----------------------------------- main --------------------------------------

if __name__ == "__main__":
    # Small shapes consistent with the module's forward:
    B = 2
    n_rois, roi_dim = 16, 8          # feat_dim = 128
    d_model, num_heads = 32, 4
    num_layers, num_classes = 2, 2
    feat_dim = n_rois * roi_dim

    key = jax.random.PRNGKey(0)
    k_in, k_p = jax.random.split(key)
    fmri_features = jax.random.normal(k_in, (B, feat_dim), jnp.float32)
    params = init_params(k_p, roi_dim=roi_dim, d_model=d_model,
                         num_layers=num_layers, num_classes=num_classes)

    logits = fmri_network_transformer_forward(
        fmri_features, params,
        n_rois=n_rois, roi_dim=roi_dim, d_model=d_model,
        num_heads=num_heads, num_layers=num_layers, num_classes=num_classes)
    logits = jax.block_until_ready(logits)

    assert logits.shape == (B, num_classes), logits.shape
    assert bool(jnp.all(jnp.isfinite(logits)))
    print("KERNEL_OK")
</pallas_src>

<mosaic_0001>
module attributes {stable_mosaic.version = 11 : i64} {
  func.func @fmri_transformer_kernel(%arg0: i32, %arg1: memref<1x16x8xbf16, #tpu.memory_space<vmem>>, %arg2: memref<8x16xbf16, #tpu.memory_space<vmem>>, %arg3: memref<8x32xbf16, #tpu.memory_space<vmem>>, %arg4: memref<1x32xf32, #tpu.memory_space<vmem>>, %arg5: memref<2x32x96xbf16, #tpu.memory_space<vmem>>, %arg6: memref<2x1x96xf32, #tpu.memory_space<vmem>>, %arg7: memref<2x32x32xbf16, #tpu.memory_space<vmem>>, %arg8: memref<2x1x32xf32, #tpu.memory_space<vmem>>, %arg9: memref<2x32x64xbf16, #tpu.memory_space<vmem>>, %arg10: memref<2x1x64xf32, #tpu.memory_space<vmem>>, %arg11: memref<2x64x32xbf16, #tpu.memory_space<vmem>>, %arg12: memref<2x1x32xf32, #tpu.memory_space<vmem>>, %arg13: memref<2x1x32xf32, #tpu.memory_space<vmem>>, %arg14: memref<2x1x32xf32, #tpu.memory_space<vmem>>, %arg15: memref<2x1x32xf32, #tpu.memory_space<vmem>>, %arg16: memref<2x1x32xf32, #tpu.memory_space<vmem>>, %arg17: memref<32x96xbf16, #tpu.memory_space<vmem>>, %arg18: memref<1x96xf32, #tpu.memory_space<vmem>>, %arg19: memref<32x32xbf16, #tpu.memory_space<vmem>>, %arg20: memref<1x32xf32, #tpu.memory_space<vmem>>, %arg21: memref<1x32xf32, #tpu.memory_space<vmem>>, %arg22: memref<1x32xf32, #tpu.memory_space<vmem>>, %arg23: memref<32x16xbf16, #tpu.memory_space<vmem>>, %arg24: memref<1x16xf32, #tpu.memory_space<vmem>>, %arg25: memref<16x128xbf16, #tpu.memory_space<vmem>>, %arg26: memref<1x128xf32, #tpu.memory_space<vmem>>, %arg27: memref<1x1x128xf32, #tpu.memory_space<vmem>>) attributes {dimension_semantics = [#tpu.dimension_semantics<parallel>], iteration_bounds = array<i64: 2>, scalar_prefetch = 0 : i64, scratch_operands = 0 : i64, tpu.core_type = #tpu.core_type<tc>, window_params = [{transform_indices = @transform_0, window_bounds = array<i64: 1, 16, 8>}, {pipeline_mode = #tpu.pipeline_mode<synchronous>, transform_indices = @transform_1, window_bounds = array<i64: 8, 16>}, {pipeline_mode = #tpu.pipeline_mode<synchronous>, transform_indices = @transform_2, window_bounds = array<i64: 8, 32>}, {pipeline_mode = #tpu.pipeline_mode<synchronous>, transform_indices = @transform_3, window_bounds = array<i64: 1, 32>}, {pipeline_mode = #tpu.pipeline_mode<synchronous>, transform_indices = @transform_4, window_bounds = array<i64: 2, 32, 96>}, {pipeline_mode = #tpu.pipeline_mode<synchronous>, transform_indices = @transform_5, window_bounds = array<i64: 2, 1, 96>}, {pipeline_mode = #tpu.pipeline_mode<synchronous>, transform_indices = @transform_6, window_bounds = array<i64: 2, 32, 32>}, {pipeline_mode = #tpu.pipeline_mode<synchronous>, transform_indices = @transform_7, window_bounds = array<i64: 2, 1, 32>}, {pipeline_mode = #tpu.pipeline_mode<synchronous>, transform_indices = @transform_8, window_bounds = array<i64: 2, 32, 64>}, {pipeline_mode = #tpu.pipeline_mode<synchronous>, transform_indices = @transform_9, window_bounds = array<i64: 2, 1, 64>}, {pipeline_mode = #tpu.pipeline_mode<synchronous>, transform_indices = @transform_10, window_bounds = array<i64: 2, 64, 32>}, {pipeline_mode = #tpu.pipeline_mode<synchronous>, transform_indices = @transform_11, window_bounds = array<i64: 2, 1, 32>}, {pipeline_mode = #tpu.pipeline_mode<synchronous>, transform_indices = @transform_12, window_bounds = array<i64: 2, 1, 32>}, {pipeline_mode = #tpu.pipeline_mode<synchronous>, transform_indices = @transform_13, window_bounds = array<i64: 2, 1, 32>}, {pipeline_mode = #tpu.pipeline_mode<synchronous>, transform_indices = @transform_14, window_bounds = array<i64: 2, 1, 32>}, {pipeline_mode = #tpu.pipeline_mode<synchronous>, transform_indices = @transform_15, window_bounds = array<i64: 2, 1, 32>}, {pipeline_mode = #tpu.pipeline_mode<synchronous>, transform_indices = @transform_16, window_bounds = array<i64: 32, 96>}, {pipeline_mode = #tpu.pipeline_mode<synchronous>, transform_indices = @transform_17, window_bounds = array<i64: 1, 96>}, {pipeline_mode = #tpu.pipeline_mode<synchronous>, transform_indices = @transform_18, window_bounds = array<i64: 32, 32>}, {pipeline_mode = #tpu.pipeline_mode<synchronous>, transform_indices = @transform_19, window_bounds = array<i64: 1, 32>}, {pipeline_mode = #tpu.pipeline_mode<synchronous>, transform_indices = @transform_20, window_bounds = array<i64: 1, 32>}, {pipeline_mode = #tpu.pipeline_mode<synchronous>, transform_indices = @transform_21, window_bounds = array<i64: 1, 32>}, {pipeline_mode = #tpu.pipeline_mode<synchronous>, transform_indices = @transform_22, window_bounds = array<i64: 32, 16>}, {pipeline_mode = #tpu.pipeline_mode<synchronous>, transform_indices = @transform_23, window_bounds = array<i64: 1, 16>}, {pipeline_mode = #tpu.pipeline_mode<synchronous>, transform_indices = @transform_24, window_bounds = array<i64: 16, 128>}, {pipeline_mode = #tpu.pipeline_mode<synchronous>, transform_indices = @transform_25, window_bounds = array<i64: 1, 128>}, {transform_indices = @transform_26, window_bounds = array<i64: 1, 1, 128>}]} {
    %c0 = arith.constant 0 : index
    %c0_0 = arith.constant 0 : index
    %c0_1 = arith.constant 0 : index
    %0 = vector.load %arg1[%c0, %c0_0, %c0_1] : memref<1x16x8xbf16, #tpu.memory_space<vmem>>, vector<1x16x8xbf16>
    %1 = vector.shape_cast %0 : vector<1x16x8xbf16> to vector<16x8xbf16>
    %c0_2 = arith.constant 0 : index
    %c0_3 = arith.constant 0 : index
    %2 = vector.load %arg3[%c0_2, %c0_3] : memref<8x32xbf16, #tpu.memory_space<vmem>>, vector<8x32xbf16>
    %cst = arith.constant dense<0.000000e+00> : vector<16x32xf32>
    %3 = tpu.matmul %1, %2, %cst {dimension_numbers = #tpu.dot_dimension_numbers<[1], [0], [0], [1], [0, 0, 1, 1], [], []>} : vector<16x8xbf16>, vector<8x32xbf16>, vector<16x32xf32> -> vector<16x32xf32>
    %c0_4 = arith.constant 0 : index
    %c0_5 = arith.constant 0 : index
    %4 = vector.load %arg4[%c0_4, %c0_5] : memref<1x32xf32, #tpu.memory_space<vmem>>, vector<1x32xf32>
    %5 = vector.broadcast %4 : vector<1x32xf32> to vector<16x32xf32>
    %6 = arith.addf %3, %5 : vector<16x32xf32>
    %c0_i32 = arith.constant 0 : i32
    %c2_i32 = arith.constant 2 : i32
    %7 = arith.addi %c0_i32, %c2_i32 : i32
    %c1_i32 = arith.constant 1 : i32
    %8 = scf.for %arg28 = %c0_i32 to %7 step %c1_i32 iter_args(%arg29 = %6) -> (vector<16x32xf32>)  : i32 {
      %194 = arith.index_cast %arg28 : i32 to index
      %c0_63 = arith.constant 0 : index
      %c0_64 = arith.constant 0 : index
      %195 = vector.load %arg5[%194, %c0_63, %c0_64] : memref<2x32x96xbf16, #tpu.memory_space<vmem>>, vector<1x32x96xbf16>
      %196 = vector.shape_cast %195 : vector<1x32x96xbf16> to vector<32x96xbf16>
      %197 = arith.index_cast %arg28 : i32 to index
      %c0_65 = arith.constant 0 : index
      %c0_66 = arith.constant 0 : index
      %198 = vector.load %arg6[%197, %c0_65, %c0_66] : memref<2x1x96xf32, #tpu.memory_space<vmem>>, vector<1x1x96xf32>
      %199 = vector.shape_cast %198 : vector<1x1x96xf32> to vector<1x96xf32>
      %200 = arith.index_cast %arg28 : i32 to index
      %c0_67 = arith.constant 0 : index
      %c0_68 = arith.constant 0 : index
      %201 = vector.load %arg7[%200, %c0_67, %c0_68] : memref<2x32x32xbf16, #tpu.memory_space<vmem>>, vector<1x32x32xbf16>
      %202 = vector.shape_cast %201 : vector<1x32x32xbf16> to vector<32x32xbf16>
      %203 = arith.index_cast %arg28 : i32 to index
      %c0_69 = arith.constant 0 : index
      %c0_70 = arith.constant 0 : index
      %204 = vector.load %arg8[%203, %c0_69, %c0_70] : memref<2x1x32xf32, #tpu.memory_space<vmem>>, vector<1x1x32xf32>
      %205 = vector.shape_cast %204 : vector<1x1x32xf32> to vector<1x32xf32>
      %206 = arith.truncf %arg29 : vector<16x32xf32> to vector<16x32xbf16>
      %cst_71 = arith.constant dense<0.000000e+00> : vector<16x96xf32>
      %207 = tpu.matmul %206, %196, %cst_71 {dimension_numbers = #tpu.dot_dimension_numbers<[1], [0], [0], [1], [0, 0, 1, 1], [], []>} : vector<16x32xbf16>, vector<32x96xbf16>, vector<16x96xf32> -> vector<16x96xf32>
      %208 = vector.broadcast %199 : vector<1x96xf32> to vector<16x96xf32>
      %209 = arith.addf %207, %208 : vector<16x96xf32>
      %210 = vector.extract_strided_slice %209 {offsets = [0, 0], sizes = [16, 8], strides = [1, 1]} : vector<16x96xf32> to vector<16x8xf32>
      %211 = vector.shape_cast %210 : vector<16x8xf32> to vector<1x16x8xf32>
      %212 = arith.truncf %211 : vector<1x16x8xf32> to vector<1x16x8xbf16>
      %213 = vector.extract_strided_slice %209 {offsets = [0, 32], sizes = [16, 8], strides = [1, 1]} : vector<16x96xf32> to vector<16x8xf32>
      %214 = vector.shape_cast %213 : vector<16x8xf32> to vector<1x16x8xf32>
      %215 = arith.truncf %214 : vector<1x16x8xf32> to vector<1x16x8xbf16>
      %216 = vector.extract_strided_slice %209 {offsets = [0, 64], sizes = [16, 8], strides = [1, 1]} : vector<16x96xf32> to vector<16x8xf32>
      %217 = vector.shape_cast %216 : vector<16x8xf32> to vector<1x16x8xf32>
      %218 = arith.truncf %217 : vector<1x16x8xf32> to vector<1x16x8xbf16>
      "tpu.trace_start"() <{level = 10 : i32, message = "bqd,bkd->bqk"}> : () -> ()
      %cst_72 = arith.constant dense<0.000000e+00> : vector<1x16x16xf32>
      %219 = tpu.matmul %212, %215, %cst_72 {dimension_numbers = #tpu.dot_dimension_numbers<[2], [2], [1], [1], [0, 0, 0, 1, 1, 1], [0], [0]>} : vector<1x16x8xbf16>, vector<1x16x8xbf16>, vector<1x16x16xf32> -> vector<1x16x16xf32>
      "tpu.trace_stop"() : () -> ()
      %cst_73 = arith.constant dense<0xFF800000> : vector<1x16xf32>
      %220 = vector.multi_reduction <maximumf>, %219, %cst_73 [2] : vector<1x16x16xf32> to vector<1x16xf32>
      %221 = vector.shape_cast %220 : vector<1x16xf32> to vector<1x16x1xf32>
      %222 = vector.broadcast %221 : vector<1x16x1xf32> to vector<1x16x16xf32>
      %223 = arith.subf %219, %222 : vector<1x16x16xf32>
      %224 = math.exp %223 : vector<1x16x16xf32>
      %cst_74 = arith.constant dense<0.000000e+00> : vector<1x16xf32>
      %225 = vector.multi_reduction <add>, %224, %cst_74 [2] : vector<1x16x16xf32> to vector<1x16xf32>
      %226 = vector.shape_cast %225 : vector<1x16xf32> to vector<1x16x1xf32>
      %227 = tpu.reciprocal %226 {approx = true} : vector<1x16x1xf32> -> vector<1x16x1xf32>
      %228 = vector.broadcast %227 : vector<1x16x1xf32> to vector<1x16x16xf32>
      %229 = arith.mulf %224, %228 : vector<1x16x16xf32>
      %230 = arith.truncf %229 : vector<1x16x16xf32> to vector<1x16x16xbf16>
      "tpu.trace_start"() <{level = 10 : i32, message = "bqk,bkd->bqd"}> : () -> ()
      %cst_75 = arith.constant dense<0.000000e+00> : vector<1x16x8xf32>
      %231 = tpu.matmul %230, %218, %cst_75 {dimension_numbers = #tpu.dot_dimension_numbers<[2], [1], [1], [2], [0, 0, 0, 1, 1, 2], [0], [0]>} : vector<1x16x16xbf16>, vector<1x16x8xbf16>, vector<1x16x8xf32> -> vector<1x16x8xf32>
      "tpu.trace_stop"() : () -> ()
      %232 = vector.shape_cast %231 : vector<1x16x8xf32> to vector<16x8xf32>
      %233 = vector.extract_strided_slice %209 {offsets = [0, 8], sizes = [16, 8], strides = [1, 1]} : vector<16x96xf32> to vector<16x8xf32>
      %234 = vector.shape_cast %233 : vector<16x8xf32> to vector<1x16x8xf32>
      %235 = arith.truncf %234 : vector<1x16x8xf32> to vector<1x16x8xbf16>
      %236 = vector.extract_strided_slice %209 {offsets = [0, 40], sizes = [16, 8], strides = [1, 1]} : vector<16x96xf32> to vector<16x8xf32>
      %237 = vector.shape_cast %236 : vector<16x8xf32> to vector<1x16x8xf32>
      %238 = arith.truncf %237 : vector<1x16x8xf32> to vector<1x16x8xbf16>
      %239 = vector.extract_strided_slice %209 {offsets = [0, 72], sizes = [16, 8], strides = [1, 1]} : vector<16x96xf32> to vector<16x8xf32>
      %240 = vector.shape_cast %239 : vector<16x8xf32> to vector<1x16x8xf32>
      %241 = arith.truncf %240 : vector<1x16x8xf32> to vector<1x16x8xbf16>
      "tpu.trace_start"() <{level = 10 : i32, message = "bqd,bkd->bqk"}> : () -> ()
      %cst_76 = arith.constant dense<0.000000e+00> : vector<1x16x16xf32>
      %242 = tpu.matmul %235, %238, %cst_76 {dimension_numbers = #tpu.dot_dimension_numbers<[2], [2], [1], [1], [0, 0, 0, 1, 1, 1], [0], [0]>} : vector<1x16x8xbf16>, vector<1x16x8xbf16>, vector<1x16x16xf32> -> vector<1x16x16xf32>
      "tpu.trace_stop"() : () -> ()
      %cst_77 = arith.constant dense<0xFF800000> : vector<1x16xf32>
      %243 = vector.multi_reduction <maximumf>, %242, %cst_77 [2] : vector<1x16x16xf32> to vector<1x16xf32>
      %244 = vector.shape_cast %243 : vector<1x16xf32> to vector<1x16x1xf32>
      %245 = vector.broadcast %244 : vector<1x16x1xf32> to vector<1x16x16xf32>
      %246 = arith.subf %242, %245 : vector<1x16x16xf32>
      %247 = math.exp %246 : vector<1x16x16xf32>
      %cst_78 = arith.constant dense<0.000000e+00> : vector<1x16xf32>
      %248 = vector.multi_reduction <add>, %247, %cst_78 [2] : vector<1x16x16xf32> to vector<1x16xf32>
      %249 = vector.shape_cast %248 : vector<1x16xf32> to vector<1x16x1xf32>
      %250 = tpu.reciprocal %249 {approx = true} : vector<1x16x1xf32> -> vector<1x16x1xf32>
      %251 = vector.broadcast %250 : vector<1x16x1xf32> to vector<1x16x16xf32>
      %252 = arith.mulf %247, %251 : vector<1x16x16xf32>
      %253 = arith.truncf %252 : vector<1x16x16xf32> to vector<1x16x16xbf16>
      "tpu.trace_start"() <{level = 10 : i32, message = "bqk,bkd->bqd"}> : () -> ()
      %cst_79 = arith.constant dense<0.000000e+00> : vector<1x16x8xf32>
      %254 = tpu.matmul %253, %241, %cst_79 {dimension_numbers = #tpu.dot_dimension_numbers<[2], [1], [1], [2], [0, 0, 0, 1, 1, 2], [0], [0]>} : vector<1x16x16xbf16>, vector<1x16x8xbf16>, vector<1x16x8xf32> -> vector<1x16x8xf32>
      "tpu.trace_stop"() : () -> ()
      %255 = vector.shape_cast %254 : vector<1x16x8xf32> to vector<16x8xf32>
      %256 = vector.extract_strided_slice %209 {offsets = [0, 16], sizes = [16, 8], strides = [1, 1]} : vector<16x96xf32> to vector<16x8xf32>
      %257 = vector.shape_cast %256 : vector<16x8xf32> to vector<1x16x8xf32>
      %258 = arith.truncf %257 : vector<1x16x8xf32> to vector<1x16x8xbf16>
      %259 = vector.extract_strided_slice %209 {offsets = [0, 48], sizes = [16, 8], strides = [1, 1]} : vector<16x96xf32> to vector<16x8xf32>
      %260 = vector.shape_cast %259 : vector<16x8xf32> to vector<1x16x8xf32>
      %261 = arith.truncf %260 : vector<1x16x8xf32> to vector<1x16x8xbf16>
      %262 = vector.extract_strided_slice %209 {offsets = [0, 80], sizes = [16, 8], strides = [1, 1]} : vector<16x96xf32> to vector<16x8xf32>
      %263 = vector.shape_cast %262 : vector<16x8xf32> to vector<1x16x8xf32>
      %264 = arith.truncf %263 : vector<1x16x8xf32> to vector<1x16x8xbf16>
      "tpu.trace_start"() <{level = 10 : i32, message = "bqd,bkd->bqk"}> : () -> ()
      %cst_80 = arith.constant dense<0.000000e+00> : vector<1x16x16xf32>
      %265 = tpu.matmul %258, %261, %cst_80 {dimension_numbers = #tpu.dot_dimension_numbers<[2], [2], [1], [1], [0, 0, 0, 1, 1, 1], [0], [0]>} : vector<1x16x8xbf16>, vector<1x16x8xbf16>, vector<1x16x16xf32> -> vector<1x16x16xf32>
      "tpu.trace_stop"() : () -> ()
      %cst_81 = arith.constant dense<0xFF800000> : vector<1x16xf32>
      %266 = vector.multi_reduction <maximumf>, %265, %cst_81 [2] : vector<1x16x16xf32> to vector<1x16xf32>
      %267 = vector.shape_cast %266 : vector<1x16xf32> to vector<1x16x1xf32>
      %268 = vector.broadcast %267 : vector<1x16x1xf32> to vector<1x16x16xf32>
      %269 = arith.subf %265, %268 : vector<1x16x16xf32>
      %270 = math.exp %269 : vector<1x16x16xf32>
      %cst_82 = arith.constant dense<0.000000e+00> : vector<1x16xf32>
      %271 = vector.multi_reduction <add>, %270, %cst_82 [2] : vector<1x16x16xf32> to vector<1x16xf32>
      %272 = vector.shape_cast %271 : vector<1x16xf32> to vector<1x16x1xf32>
      %273 = tpu.reciprocal %272 {approx = true} : vector<1x16x1xf32> -> vector<1x16x1xf32>
      %274 = vector.broadcast %273 : vector<1x16x1xf32> to vector<1x16x16xf32>
      %275 = arith.mulf %270, %274 : vector<1x16x16xf32>
      %276 = arith.truncf %275 : vector<1x16x16xf32> to vector<1x16x16xbf16>
      "tpu.trace_start"() <{level = 10 : i32, message = "bqk,bkd->bqd"}> : () -> ()
      %cst_83 = arith.constant dense<0.000000e+00> : vector<1x16x8xf32>
      %277 = tpu.matmul %276, %264, %cst_83 {dimension_numbers = #tpu.dot_dimension_numbers<[2], [1], [1], [2], [0, 0, 0, 1, 1, 2], [0], [0]>} : vector<1x16x16xbf16>, vector<1x16x8xbf16>, vector<1x16x8xf32> -> vector<1x16x8xf32>
      "tpu.trace_stop"() : () -> ()
      %278 = vector.shape_cast %277 : vector<1x16x8xf32> to vector<16x8xf32>
      %279 = vector.extract_strided_slice %209 {offsets = [0, 24], sizes = [16, 8], strides = [1, 1]} : vector<16x96xf32> to vector<16x8xf32>
      %280 = vector.shape_cast %279 : vector<16x8xf32> to vector<1x16x8xf32>
      %281 = arith.truncf %280 : vector<1x16x8xf32> to vector<1x16x8xbf16>
      %282 = vector.extract_strided_slice %209 {offsets = [0, 56], sizes = [16, 8], strides = [1, 1]} : vector<16x96xf32> to vector<16x8xf32>
      %283 = vector.shape_cast %282 : vector<16x8xf32> to vector<1x16x8xf32>
      %284 = arith.truncf %283 : vector<1x16x8xf32> to vector<1x16x8xbf16>
      %285 = vector.extract_strided_slice %209 {offsets = [0, 88], sizes = [16, 8], strides = [1, 1]} : vector<16x96xf32> to vector<16x8xf32>
      %286 = vector.shape_cast %285 : vector<16x8xf32> to vector<1x16x8xf32>
      %287 = arith.truncf %286 : vector<1x16x8xf32> to vector<1x16x8xbf16>
      "tpu.trace_start"() <{level = 10 : i32, message = "bqd,bkd->bqk"}> : () -> ()
      %cst_84 = arith.constant dense<0.000000e+00> : vector<1x16x16xf32>
      %288 = tpu.matmul %281, %284, %cst_84 {dimension_numbers = #tpu.dot_dimension_numbers<[2], [2], [1], [1], [0, 0, 0, 1, 1, 1], [0], [0]>} : vector<1x16x8xbf16>, vector<1x16x8xbf16>, vector<1x16x16xf32> -> vector<1x16x16xf32>
      "tpu.trace_stop"() : () -> ()
      %cst_85 = arith.constant dense<0xFF800000> : vector<1x16xf32>
      %289 = vector.multi_reduction <maximumf>, %288, %cst_85 [2] : vector<1x16x16xf32> to vector<1x16xf32>
      %290 = vector.shape_cast %289 : vector<1x16xf32> to vector<1x16x1xf32>
      %291 = vector.broadcast %290 : vector<1x16x1xf32> to vector<1x16x16xf32>
      %292 = arith.subf %288, %291 : vector<1x16x16xf32>
      %293 = math.exp %292 : vector<1x16x16xf32>
      %cst_86 = arith.constant dense<0.000000e+00> : vector<1x16xf32>
      %294 = vector.multi_reduction <add>, %293, %cst_86 [2] : vector<1x16x16xf32> to vector<1x16xf32>
      %295 = vector.shape_cast %294 : vector<1x16xf32> to vector<1x16x1xf32>
      %296 = tpu.reciprocal %295 {approx = true} : vector<1x16x1xf32> -> vector<1x16x1xf32>
      %297 = vector.broadcast %296 : vector<1x16x1xf32> to vector<1x16x16xf32>
      %298 = arith.mulf %293, %297 : vector<1x16x16xf32>
      %299 = arith.truncf %298 : vector<1x16x16xf32> to vector<1x16x16xbf16>
      "tpu.trace_start"() <{level = 10 : i32, message = "bqk,bkd->bqd"}> : () -> ()
      %cst_87 = arith.constant dense<0.000000e+00> : vector<1x16x8xf32>
      %300 = tpu.matmul %299, %287, %cst_87 {dimension_numbers = #tpu.dot_dimension_numbers<[2], [1], [1], [2], [0, 0, 0, 1, 1, 2], [0], [0]>} : vector<1x16x16xbf16>, vector<1x16x8xbf16>, vector<1x16x8xf32> -> vector<1x16x8xf32>
      "tpu.trace_stop"() : () -> ()
      %301 = vector.shape_cast %300 : vector<1x16x8xf32> to vector<16x8xf32>
      %302 = tpu.concatenate %232, %255, %278, %301 in 1 : vector<16x8xf32>, vector<16x8xf32>, vector<16x8xf32>, vector<16x8xf32> -> vector<16x32xf32>
      %303 = arith.truncf %302 : vector<16x32xf32> to vector<16x32xbf16>
      %cst_88 = arith.constant dense<0.000000e+00> : vector<16x32xf32>
      %304 = tpu.matmul %303, %202, %cst_88 {dimension_numbers = #tpu.dot_dimension_numbers<[1], [0], [0], [1], [0, 0, 1, 1], [], []>} : vector<16x32xbf16>, vector<32x32xbf16>, vector<16x32xf32> -> vector<16x32xf32>
      %305 = vector.broadcast %205 : vector<1x32xf32> to vector<16x32xf32>
      %306 = arith.addf %304, %305 : vector<16x32xf32>
      %307 = arith.addf %arg29, %306 : vector<16x32xf32>
      %308 = arith.index_cast %arg28 : i32 to index
      %c0_89 = arith.constant 0 : index
      %c0_90 = arith.constant 0 : index
      %309 = vector.load %arg13[%308, %c0_89, %c0_90] : memref<2x1x32xf32, #tpu.memory_space<vmem>>, vector<1x1x32xf32>
      %310 = vector.shape_cast %309 : vector<1x1x32xf32> to vector<1x32xf32>
      %311 = arith.index_cast %arg28 : i32 to index
      %c0_91 = arith.constant 0 : index
      %c0_92 = arith.constant 0 : index
      %312 = vector.load %arg14[%311, %c0_91, %c0_92] : memref<2x1x32xf32, #tpu.memory_space<vmem>>, vector<1x1x32xf32>
      %313 = vector.shape_cast %312 : vector<1x1x32xf32> to vector<1x32xf32>
      %cst_93 = arith.constant dense<0.000000e+00> : vector<16xf32>
      %314 = vector.multi_reduction <add>, %307, %cst_93 [1] : vector<16x32xf32> to vector<16xf32>
      %315 = vector.shape_cast %314 : vector<16xf32> to vector<16x1xf32>
      %cst_94 = arith.constant 3.200000e+01 : f32
      %316 = vector.broadcast %cst_94 : f32 to vector<16x1xf32>
      %317 = arith.divf %315, %316 : vector<16x1xf32>
      %318 = vector.broadcast %317 : vector<16x1xf32> to vector<16x32xf32>
      %319 = arith.subf %307, %318 : vector<16x32xf32>
      %320 = arith.mulf %319, %319 : vector<16x32xf32>
      %cst_95 = arith.constant dense<0.000000e+00> : vector<16xf32>
      %321 = vector.multi_reduction <add>, %320, %cst_95 [1] : vector<16x32xf32> to vector<16xf32>
      %322 = vector.shape_cast %321 : vector<16xf32> to vector<16x1xf32>
      %cst_96 = arith.constant 3.200000e+01 : f32
      %323 = vector.broadcast %cst_96 : f32 to vector<16x1xf32>
      %324 = arith.divf %322, %323 : vector<16x1xf32>
      %325 = vector.broadcast %317 : vector<16x1xf32> to vector<16x32xf32>
      %326 = arith.subf %307, %325 : vector<16x32xf32>
      %cst_97 = arith.constant 9.99999974E-6 : f32
      %327 = vector.broadcast %cst_97 : f32 to vector<16x1xf32>
      %328 = arith.addf %324, %327 : vector<16x1xf32>
      %329 = math.rsqrt %328 : vector<16x1xf32>
      %330 = vector.broadcast %329 : vector<16x1xf32> to vector<16x32xf32>
      %331 = arith.mulf %326, %330 : vector<16x32xf32>
      %332 = vector.broadcast %310 : vector<1x32xf32> to vector<16x32xf32>
      %333 = arith.mulf %331, %332 : vector<16x32xf32>
      %334 = vector.broadcast %313 : vector<1x32xf32> to vector<16x32xf32>
      %335 = arith.addf %333, %334 : vector<16x32xf32>
      %336 = arith.truncf %335 : vector<16x32xf32> to vector<16x32xbf16>
      %337 = arith.index_cast %arg28 : i32 to index
      %c0_98 = arith.constant 0 : index
      %c0_99 = arith.constant 0 : index
      %338 = vector.load %arg9[%337, %c0_98, %c0_99] : memref<2x32x64xbf16, #tpu.memory_space<vmem>>, vector<1x32x64xbf16>
      %339 = vector.shape_cast %338 : vector<1x32x64xbf16> to vector<32x64xbf16>
      %cst_100 = arith.constant dense<0.000000e+00> : vector<16x64xf32>
      %340 = tpu.matmul %336, %339, %cst_100 {dimension_numbers = #tpu.dot_dimension_numbers<[1], [0], [0], [1], [0, 0, 1, 1], [], []>} : vector<16x32xbf16>, vector<32x64xbf16>, vector<16x64xf32> -> vector<16x64xf32>
      %341 = arith.index_cast %arg28 : i32 to index
      %c0_101 = arith.constant 0 : index
      %c0_102 = arith.constant 0 : index
      %342 = vector.load %arg10[%341, %c0_101, %c0_102] : memref<2x1x64xf32, #tpu.memory_space<vmem>>, vector<1x1x64xf32>
      %343 = vector.shape_cast %342 : vector<1x1x64xf32> to vector<1x64xf32>
      %344 = vector.broadcast %343 : vector<1x64xf32> to vector<16x64xf32>
      %345 = arith.addf %340, %344 : vector<16x64xf32>
      %cst_103 = arith.constant 5.000000e-01 : f32
      %346 = vector.broadcast %cst_103 : f32 to vector<16x64xf32>
      %347 = arith.mulf %346, %345 : vector<16x64xf32>
      %cst_104 = arith.constant 4.471500e-02 : f32
      %348 = vector.broadcast %cst_104 : f32 to vector<16x64xf32>
      %349 = arith.mulf %348, %345 : vector<16x64xf32>
      %350 = arith.mulf %349, %345 : vector<16x64xf32>
      %351 = arith.mulf %350, %345 : vector<16x64xf32>
      %352 = arith.addf %345, %351 : vector<16x64xf32>
      %cst_105 = arith.constant 0.797884583 : f32
      %353 = vector.broadcast %cst_105 : f32 to vector<16x64xf32>
      %354 = arith.mulf %353, %352 : vector<16x64xf32>
      %355 = math.tanh %354 : vector<16x64xf32>
      %cst_106 = arith.constant 1.000000e+00 : f32
      %356 = vector.broadcast %cst_106 : f32 to vector<16x64xf32>
      %357 = arith.addf %356, %355 : vector<16x64xf32>
      %358 = arith.mulf %347, %357 : vector<16x64xf32>
      %359 = arith.truncf %358 : vector<16x64xf32> to vector<16x64xbf16>
      %360 = arith.index_cast %arg28 : i32 to index
      %c0_107 = arith.constant 0 : index
      %c0_108 = arith.constant 0 : index
      %361 = vector.load %arg11[%360, %c0_107, %c0_108] : memref<2x64x32xbf16, #tpu.memory_space<vmem>>, vector<1x64x32xbf16>
      %362 = vector.shape_cast %361 : vector<1x64x32xbf16> to vector<64x32xbf16>
      %cst_109 = arith.constant dense<0.000000e+00> : vector<16x32xf32>
      %363 = tpu.matmul %359, %362, %cst_109 {dimension_numbers = #tpu.dot_dimension_numbers<[1], [0], [0], [1], [0, 0, 1, 1], [], []>} : vector<16x64xbf16>, vector<64x32xbf16>, vector<16x32xf32> -> vector<16x32xf32>
      %364 = arith.index_cast %arg28 : i32 to index
      %c0_110 = arith.constant 0 : index
      %c0_111 = arith.constant 0 : index
      %365 = vector.load %arg12[%364, %c0_110, %c0_111] : memref<2x1x32xf32, #tpu.memory_space<vmem>>, vector<1x1x32xf32>
      %366 = vector.shape_cast %365 : vector<1x1x32xf32> to vector<1x32xf32>
      %367 = vector.broadcast %366 : vector<1x32xf32> to vector<16x32xf32>
      %368 = arith.addf %363, %367 : vector<16x32xf32>
      %369 = arith.addf %335, %368 : vector<16x32xf32>
      %370 = arith.index_cast %arg28 : i32 to index
      %c0_112 = arith.constant 0 : index
      %c0_113 = arith.constant 0 : index
      %371 = vector.load %arg15[%370, %c0_112, %c0_113] : memref<2x1x32xf32, #tpu.memory_space<vmem>>, vector<1x1x32xf32>
      %372 = vector.shape_cast %371 : vector<1x1x32xf32> to vector<1x32xf32>
      %373 = arith.index_cast %arg28 : i32 to index
      %c0_114 = arith.constant 0 : index
      %c0_115 = arith.constant 0 : index
      %374 = vector.load %arg16[%373, %c0_114, %c0_115] : memref<2x1x32xf32, #tpu.memory_space<vmem>>, vector<1x1x32xf32>
      %375 = vector.shape_cast %374 : vector<1x1x32xf32> to vector<1x32xf32>
      %cst_116 = arith.constant dense<0.000000e+00> : vector<16xf32>
      %376 = vector.multi_reduction <add>, %369, %cst_116 [1] : vector<16x32xf32> to vector<16xf32>
      %377 = vector.shape_cast %376 : vector<16xf32> to vector<16x1xf32>
      %cst_117 = arith.constant 3.200000e+01 : f32
      %378 = vector.broadcast %cst_117 : f32 to vector<16x1xf32>
      %379 = arith.divf %377, %378 : vector<16x1xf32>
      %380 = vector.broadcast %379 : vector<16x1xf32> to vector<16x32xf32>
      %381 = arith.subf %369, %380 : vector<16x32xf32>
      %382 = arith.mulf %381, %381 : vector<16x32xf32>
      %cst_118 = arith.constant dense<0.000000e+00> : vector<16xf32>
      %383 = vector.multi_reduction <add>, %382, %cst_118 [1] : vector<16x32xf32> to vector<16xf32>
      %384 = vector.shape_cast %383 : vector<16xf32> to vector<16x1xf32>
      %cst_119 = arith.constant 3.200000e+01 : f32
      %385 = vector.broadcast %cst_119 : f32 to vector<16x1xf32>
      %386 = arith.divf %384, %385 : vector<16x1xf32>
      %387 = vector.broadcast %379 : vector<16x1xf32> to vector<16x32xf32>
      %388 = arith.subf %369, %387 : vector<16x32xf32>
      %cst_120 = arith.constant 9.99999974E-6 : f32
      %389 = vector.broadcast %cst_120 : f32 to vector<16x1xf32>
      %390 = arith.addf %386, %389 : vector<16x1xf32>
      %391 = math.rsqrt %390 : vector<16x1xf32>
      %392 = vector.broadcast %391 : vector<16x1xf32> to vector<16x32xf32>
      %393 = arith.mulf %388, %392 : vector<16x32xf32>
      %394 = vector.broadcast %372 : vector<1x32xf32> to vector<16x32xf32>
      %395 = arith.mulf %393, %394 : vector<16x32xf32>
      %396 = vector.broadcast %375 : vector<1x32xf32> to vector<16x32xf32>
      %397 = arith.addf %395, %396 : vector<16x32xf32>
      scf.yield %397 : vector<16x32xf32>
    }
    %c2_i32_6 = arith.constant 2 : i32
    %c0_7 = arith.constant 0 : index
    %c0_8 = arith.constant 0 : index
    %9 = vector.load %arg2[%c0_7, %c0_8] : memref<8x16xbf16, #tpu.memory_space<vmem>>, vector<8x16xbf16>
    %10 = vector.shape_cast %9 : vector<8x16xbf16> to vector<1x8x16xbf16>
    %11 = vector.shape_cast %8 : vector<16x32xf32> to vector<1x16x32xf32>
    %12 = arith.truncf %11 : vector<1x16x32xf32> to vector<1x16x32xbf16>
    "tpu.trace_start"() <{level = 10 : i32, message = "bns,bse->bne"}> : () -> ()
    %cst_9 = arith.constant dense<0.000000e+00> : vector<1x8x32xf32>
    %13 = tpu.matmul %10, %12, %cst_9 {dimension_numbers = #tpu.dot_dimension_numbers<[2], [1], [1], [2], [0, 0, 0, 1, 1, 2], [0], [0]>} : vector<1x8x16xbf16>, vector<1x16x32xbf16>, vector<1x8x32xf32> -> vector<1x8x32xf32>
    "tpu.trace_stop"() : () -> ()
    %14 = vector.shape_cast %13 : vector<1x8x32xf32> to vector<8x32xf32>
    %c0_10 = arith.constant 0 : index
    %c0_11 = arith.constant 0 : index
    %15 = vector.load %arg17[%c0_10, %c0_11] : memref<32x96xbf16, #tpu.memory_space<vmem>>, vector<32x96xbf16>
    %c0_12 = arith.constant 0 : index
    %c0_13 = arith.constant 0 : index
    %16 = vector.load %arg18[%c0_12, %c0_13] : memref<1x96xf32, #tpu.memory_space<vmem>>, vector<1x96xf32>
    %c0_14 = arith.constant 0 : index
    %c0_15 = arith.constant 0 : index
    %17 = vector.load %arg19[%c0_14, %c0_15] : memref<32x32xbf16, #tpu.memory_space<vmem>>, vector<32x32xbf16>
    %c0_16 = arith.constant 0 : index
    %c0_17 = arith.constant 0 : index
    %18 = vector.load %arg20[%c0_16, %c0_17] : memref<1x32xf32, #tpu.memory_space<vmem>>, vector<1x32xf32>
    %19 = arith.truncf %14 : vector<8x32xf32> to vector<8x32xbf16>
    %cst_18 = arith.constant dense<0.000000e+00> : vector<8x96xf32>
    %20 = tpu.matmul %19, %15, %cst_18 {dimension_numbers = #tpu.dot_dimension_numbers<[1], [0], [0], [1], [0, 0, 1, 1], [], []>} : vector<8x32xbf16>, vector<32x96xbf16>, vector<8x96xf32> -> vector<8x96xf32>
    %21 = vector.broadcast %16 : vector<1x96xf32> to vector<8x96xf32>
    %22 = arith.addf %20, %21 : vector<8x96xf32>
    %23 = vector.extract_strided_slice %22 {offsets = [0, 0], sizes = [8, 8], strides = [1, 1]} : vector<8x96xf32> to vector<8x8xf32>
    %24 = vector.shape_cast %23 : vector<8x8xf32> to vector<1x8x8xf32>
    %25 = arith.truncf %24 : vector<1x8x8xf32> to vector<1x8x8xbf16>
    %26 = vector.extract_strided_slice %22 {offsets = [0, 32], sizes = [8, 8], strides = [1, 1]} : vector<8x96xf32> to vector<8x8xf32>
    %27 = vector.shape_cast %26 : vector<8x8xf32> to vector<1x8x8xf32>
    %28 = arith.truncf %27 : vector<1x8x8xf32> to vector<1x8x8xbf16>
    %29 = vector.extract_strided_slice %22 {offsets = [0, 64], sizes = [8, 8], strides = [1, 1]} : vector<8x96xf32> to vector<8x8xf32>
    %30 = vector.shape_cast %29 : vector<8x8xf32> to vector<1x8x8xf32>
    %31 = arith.truncf %30 : vector<1x8x8xf32> to vector<1x8x8xbf16>
    "tpu.trace_start"() <{level = 10 : i32, message = "bqd,bkd->bqk"}> : () -> ()
    %cst_19 = arith.constant dense<0.000000e+00> : vector<1x8x8xf32>
    %32 = tpu.matmul %25, %28, %cst_19 {dimension_numbers = #tpu.dot_dimension_numbers<[2], [2], [1], [1], [0, 0, 0, 1, 1, 1], [0], [0]>} : vector<1x8x8xbf16>, vector<1x8x8xbf16>, vector<1x8x8xf32> -> vector<1x8x8xf32>
    "tpu.trace_stop"() : () -> ()
    %cst_20 = arith.constant dense<0xFF800000> : vector<1x8xf32>
    %33 = vector.multi_reduction <maximumf>, %32, %cst_20 [2] : vector<1x8x8xf32> to vector<1x8xf32>
    %34 = vector.shape_cast %33 : vector<1x8xf32> to vector<1x8x1xf32>
    %35 = vector.broadcast %34 : vector<1x8x1xf32> to vector<1x8x8xf32>
    %36 = arith.subf %32, %35 : vector<1x8x8xf32>
    %37 = math.exp %36 : vector<1x8x8xf32>
    %cst_21 = arith.constant dense<0.000000e+00> : vector<1x8xf32>
    %38 = vector.multi_reduction <add>, %37, %cst_21 [2] : vector<1x8x8xf32> to vector<1x8xf32>
    %39 = vector.shape_cast %38 : vector<1x8xf32> to vector<1x8x1xf32>
    %40 = tpu.reciprocal %39 {approx = true} : vector<1x8x1xf32> -> vector<1x8x1xf32>
    %41 = vector.broadcast %40 : vector<1x8x1xf32> to vector<1x8x8xf32>
    %42 = arith.mulf %37, %41 : vector<1x8x8xf32>
    %43 = arith.truncf %42 : vector<1x8x8xf32> to vector<1x8x8xbf16>
    "tpu.trace_start"() <{level = 10 : i32, message = "bqk,bkd->bqd"}> : () -> ()
    %cst_22 = arith.constant dense<0.000000e+00> : vector<1x8x8xf32>
    %44 = tpu.matmul %43, %31, %cst_22 {dimension_numbers = #tpu.dot_dimension_numbers<[2], [1], [1], [2], [0, 0, 0, 1, 1, 2], [0], [0]>} : vector<1x8x8xbf16>, vector<1x8x8xbf16>, vector<1x8x8xf32> -> vector<1x8x8xf32>
    "tpu.trace_stop"() : () -> ()
    %45 = vector.shape_cast %44 : vector<1x8x8xf32> to vector<8x8xf32>
    %46 = vector.extract_strided_slice %22 {offsets = [0, 8], sizes = [8, 8], strides = [1, 1]} : vector<8x96xf32> to vector<8x8xf32>
    %47 = vector.shape_cast %46 : vector<8x8xf32> to vector<1x8x8xf32>
    %48 = arith.truncf %47 : vector<1x8x8xf32> to vector<1x8x8xbf16>
    %49 = vector.extract_strided_slice %22 {offsets = [0, 40], sizes = [8, 8], strides = [1, 1]} : vector<8x96xf32> to vector<8x8xf32>
    %50 = vector.shape_cast %49 : vector<8x8xf32> to vector<1x8x8xf32>
    %51 = arith.truncf %50 : vector<1x8x8xf32> to vector<1x8x8xbf16>
    %52 = vector.extract_strided_slice %22 {offsets = [0, 72], sizes = [8, 8], strides = [1, 1]} : vector<8x96xf32> to vector<8x8xf32>
    %53 = vector.shape_cast %52 : vector<8x8xf32> to vector<1x8x8xf32>
    %54 = arith.truncf %53 : vector<1x8x8xf32> to vector<1x8x8xbf16>
    "tpu.trace_start"() <{level = 10 : i32, message = "bqd,bkd->bqk"}> : () -> ()
    %cst_23 = arith.constant dense<0.000000e+00> : vector<1x8x8xf32>
    %55 = tpu.matmul %48, %51, %cst_23 {dimension_numbers = #tpu.dot_dimension_numbers<[2], [2], [1], [1], [0, 0, 0, 1, 1, 1], [0], [0]>} : vector<1x8x8xbf16>, vector<1x8x8xbf16>, vector<1x8x8xf32> -> vector<1x8x8xf32>
    "tpu.trace_stop"() : () -> ()
    %cst_24 = arith.constant dense<0xFF800000> : vector<1x8xf32>
    %56 = vector.multi_reduction <maximumf>, %55, %cst_24 [2] : vector<1x8x8xf32> to vector<1x8xf32>
    %57 = vector.shape_cast %56 : vector<1x8xf32> to vector<1x8x1xf32>
    %58 = vector.broadcast %57 : vector<1x8x1xf32> to vector<1x8x8xf32>
    %59 = arith.subf %55, %58 : vector<1x8x8xf32>
    %60 = math.exp %59 : vector<1x8x8xf32>
    %cst_25 = arith.constant dense<0.000000e+00> : vector<1x8xf32>
    %61 = vector.multi_reduction <add>, %60, %cst_25 [2] : vector<1x8x8xf32> to vector<1x8xf32>
    %62 = vector.shape_cast %61 : vector<1x8xf32> to vector<1x8x1xf32>
    %63 = tpu.reciprocal %62 {approx = true} : vector<1x8x1xf32> -> vector<1x8x1xf32>
    %64 = vector.broadcast %63 : vector<1x8x1xf32> to vector<1x8x8xf32>
    %65 = arith.mulf %60, %64 : vector<1x8x8xf32>
    %66 = arith.truncf %65 : vector<1x8x8xf32> to vector<1x8x8xbf16>
    "tpu.trace_start"() <{level = 10 : i32, message = "bqk,bkd->bqd"}> : () -> ()
    %cst_26 = arith.constant dense<0.000000e+00> : vector<1x8x8xf32>
    %67 = tpu.matmul %66, %54, %cst_26 {dimension_numbers = #tpu.dot_dimension_numbers<[2], [1], [1], [2], [0, 0, 0, 1, 1, 2], [0], [0]>} : vector<1x8x8xbf16>, vector<1x8x8xbf16>, vector<1x8x8xf32> -> vector<1x8x8xf32>
    "tpu.trace_stop"() : () -> ()
    %68 = vector.shape_cast %67 : vector<1x8x8xf32> to vector<8x8xf32>
    %69 = vector.extract_strided_slice %22 {offsets = [0, 16], sizes = [8, 8], strides = [1, 1]} : vector<8x96xf32> to vector<8x8xf32>
    %70 = vector.shape_cast %69 : vector<8x8xf32> to vector<1x8x8xf32>
    %71 = arith.truncf %70 : vector<1x8x8xf32> to vector<1x8x8xbf16>
    %72 = vector.extract_strided_slice %22 {offsets = [0, 48], sizes = [8, 8], strides = [1, 1]} : vector<8x96xf32> to vector<8x8xf32>
    %73 = vector.shape_cast %72 : vector<8x8xf32> to vector<1x8x8xf32>
    %74 = arith.truncf %73 : vector<1x8x8xf32> to vector<1x8x8xbf16>
    %75 = vector.extract_strided_slice %22 {offsets = [0, 80], sizes = [8, 8], strides = [1, 1]} : vector<8x96xf32> to vector<8x8xf32>
    %76 = vector.shape_cast %75 : vector<8x8xf32> to vector<1x8x8xf32>
    %77 = arith.truncf %76 : vector<1x8x8xf32> to vector<1x8x8xbf16>
    "tpu.trace_start"() <{level = 10 : i32, message = "bqd,bkd->bqk"}> : () -> ()
    %cst_27 = arith.constant dense<0.000000e+00> : vector<1x8x8xf32>
    %78 = tpu.matmul %71, %74, %cst_27 {dimension_numbers = #tpu.dot_dimension_numbers<[2], [2], [1], [1], [0, 0, 0, 1, 1, 1], [0], [0]>} : vector<1x8x8xbf16>, vector<1x8x8xbf16>, vector<1x8x8xf32> -> vector<1x8x8xf32>
    "tpu.trace_stop"() : () -> ()
    %cst_28 = arith.constant dense<0xFF800000> : vector<1x8xf32>
    %79 = vector.multi_reduction <maximumf>, %78, %cst_28 [2] : vector<1x8x8xf32> to vector<1x8xf32>
    %80 = vector.shape_cast %79 : vector<1x8xf32> to vector<1x8x1xf32>
    %81 = vector.broadcast %80 : vector<1x8x1xf32> to vector<1x8x8xf32>
    %82 = arith.subf %78, %81 : vector<1x8x8xf32>
    %83 = math.exp %82 : vector<1x8x8xf32>
    %cst_29 = arith.constant dense<0.000000e+00> : vector<1x8xf32>
    %84 = vector.multi_reduction <add>, %83, %cst_29 [2] : vector<1x8x8xf32> to vector<1x8xf32>
    %85 = vector.shape_cast %84 : vector<1x8xf32> to vector<1x8x1xf32>
    %86 = tpu.reciprocal %85 {approx = true} : vector<1x8x1xf32> -> vector<1x8x1xf32>
    %87 = vector.broadcast %86 : vector<1x8x1xf32> to vector<1x8x8xf32>
    %88 = arith.mulf %83, %87 : vector<1x8x8xf32>
    %89 = arith.truncf %88 : vector<1x8x8xf32> to vector<1x8x8xbf16>
    "tpu.trace_start"() <{level = 10 : i32, message = "bqk,bkd->bqd"}> : () -> ()
    %cst_30 = arith.constant dense<0.000000e+00> : vector<1x8x8xf32>
    %90 = tpu.matmul %89, %77, %cst_30 {dimension_numbers = #tpu.dot_dimension_numbers<[2], [1], [1], [2], [0, 0, 0, 1, 1, 2], [0], [0]>} : vector<1x8x8xbf16>, vector<1x8x8xbf16>, vector<1x8x8xf32> -> vector<1x8x8xf32>
    "tpu.trace_stop"() : () -> ()
    %91 = vector.shape_cast %90 : vector<1x8x8xf32> to vector<8x8xf32>
    %92 = vector.extract_strided_slice %22 {offsets = [0, 24], sizes = [8, 8], strides = [1, 1]} : vector<8x96xf32> to vector<8x8xf32>
    %93 = vector.shape_cast %92 : vector<8x8xf32> to vector<1x8x8xf32>
    %94 = arith.truncf %93 : vector<1x8x8xf32> to vector<1x8x8xbf16>
    %95 = vector.extract_strided_slice %22 {offsets = [0, 56], sizes = [8, 8], strides = [1, 1]} : vector<8x96xf32> to vector<8x8xf32>
    %96 = vector.shape_cast %95 : vector<8x8xf32> to vector<1x8x8xf32>
    %97 = arith.truncf %96 : vector<1x8x8xf32> to vector<1x8x8xbf16>
    %98 = vector.extract_strided_slice %22 {offsets = [0, 88], sizes = [8, 8], strides = [1, 1]} : vector<8x96xf32> to vector<8x8xf32>
    %99 = vector.shape_cast %98 : vector<8x8xf32> to vector<1x8x8xf32>
    %100 = arith.truncf %99 : vector<1x8x8xf32> to vector<1x8x8xbf16>
    "tpu.trace_start"() <{level = 10 : i32, message = "bqd,bkd->bqk"}> : () -> ()
    %cst_31 = arith.constant dense<0.000000e+00> : vector<1x8x8xf32>
    %101 = tpu.matmul %94, %97, %cst_31 {dimension_numbers = #tpu.dot_dimension_numbers<[2], [2], [1], [1], [0, 0, 0, 1, 1, 1], [0], [0]>} : vector<1x8x8xbf16>, vector<1x8x8xbf16>, vector<1x8x8xf32> -> vector<1x8x8xf32>
    "tpu.trace_stop"() : () -> ()
    %cst_32 = arith.constant dense<0xFF800000> : vector<1x8xf32>
    %102 = vector.multi_reduction <maximumf>, %101, %cst_32 [2] : vector<1x8x8xf32> to vector<1x8xf32>
    %103 = vector.shape_cast %102 : vector<1x8xf32> to vector<1x8x1xf32>
    %104 = vector.broadcast %103 : vector<1x8x1xf32> to vector<1x8x8xf32>
    %105 = arith.subf %101, %104 : vector<1x8x8xf32>
    %106 = math.exp %105 : vector<1x8x8xf32>
    %cst_33 = arith.constant dense<0.000000e+00> : vector<1x8xf32>
    %107 = vector.multi_reduction <add>, %106, %cst_33 [2] : vector<1x8x8xf32> to vector<1x8xf32>
    %108 = vector.shape_cast %107 : vector<1x8xf32> to vector<1x8x1xf32>
    %109 = tpu.reciprocal %108 {approx = true} : vector<1x8x1xf32> -> vector<1x8x1xf32>
    %110 = vector.broadcast %109 : vector<1x8x1xf32> to vector<1x8x8xf32>
    %111 = arith.mulf %106, %110 : vector<1x8x8xf32>
    %112 = arith.truncf %111 : vector<1x8x8xf32> to vector<1x8x8xbf16>
    "tpu.trace_start"() <{level = 10 : i32, message = "bqk,bkd->bqd"}> : () -> ()
    %cst_34 = arith.constant dense<0.000000e+00> : vector<1x8x8xf32>
    %113 = tpu.matmul %112, %100, %cst_34 {dimension_numbers = #tpu.dot_dimension_numbers<[2], [1], [1], [2], [0, 0, 0, 1, 1, 2], [0], [0]>} : vector<1x8x8xbf16>, vector<1x8x8xbf16>, vector<1x8x8xf32> -> vector<1x8x8xf32>
    "tpu.trace_stop"() : () -> ()
    %114 = vector.shape_cast %113 : vector<1x8x8xf32> to vector<8x8xf32>
    %115 = tpu.concatenate %45, %68, %91, %114 in 1 : vector<8x8xf32>, vector<8x8xf32>, vector<8x8xf32>, vector<8x8xf32> -> vector<8x32xf32>
    %116 = arith.truncf %115 : vector<8x32xf32> to vector<8x32xbf16>
    %cst_35 = arith.constant dense<0.000000e+00> : vector<8x32xf32>
    %117 = tpu.matmul %116, %17, %cst_35 {dimension_numbers = #tpu.dot_dimension_numbers<[1], [0], [0], [1], [0, 0, 1, 1], [], []>} : vector<8x32xbf16>, vector<32x32xbf16>, vector<8x32xf32> -> vector<8x32xf32>
    %118 = vector.broadcast %18 : vector<1x32xf32> to vector<8x32xf32>
    %119 = arith.addf %117, %118 : vector<8x32xf32>
    %120 = vector.shape_cast %119 : vector<8x32xf32> to vector<1x8x32xf32>
    %121 = vector.extract_strided_slice %120 {offsets = [0, 0, 0], sizes = [1, 1, 32], strides = [1, 1, 1]} : vector<1x8x32xf32> to vector<1x1x32xf32>
    %122 = vector.shape_cast %121 : vector<1x1x32xf32> to vector<1x32xf32>
    %123 = vector.extract_strided_slice %120 {offsets = [0, 1, 0], sizes = [1, 1, 32], strides = [1, 1, 1]} : vector<1x8x32xf32> to vector<1x1x32xf32>
    %124 = vector.shape_cast %123 : vector<1x1x32xf32> to vector<1x32xf32>
    %125 = arith.addf %122, %124 : vector<1x32xf32>
    %126 = vector.extract_strided_slice %120 {offsets = [0, 2, 0], sizes = [1, 1, 32], strides = [1, 1, 1]} : vector<1x8x32xf32> to vector<1x1x32xf32>
    %127 = vector.shape_cast %126 : vector<1x1x32xf32> to vector<1x32xf32>
    %128 = arith.addf %125, %127 : vector<1x32xf32>
    %129 = vector.extract_strided_slice %120 {offsets = [0, 3, 0], sizes = [1, 1, 32], strides = [1, 1, 1]} : vector<1x8x32xf32> to vector<1x1x32xf32>
    %130 = vector.shape_cast %129 : vector<1x1x32xf32> to vector<1x32xf32>
    %131 = arith.addf %128, %130 : vector<1x32xf32>
    %132 = vector.extract_strided_slice %120 {offsets = [0, 4, 0], sizes = [1, 1, 32], strides = [1, 1, 1]} : vector<1x8x32xf32> to vector<1x1x32xf32>
    %133 = vector.shape_cast %132 : vector<1x1x32xf32> to vector<1x32xf32>
    %134 = arith.addf %131, %133 : vector<1x32xf32>
    %135 = vector.extract_strided_slice %120 {offsets = [0, 5, 0], sizes = [1, 1, 32], strides = [1, 1, 1]} : vector<1x8x32xf32> to vector<1x1x32xf32>
    %136 = vector.shape_cast %135 : vector<1x1x32xf32> to vector<1x32xf32>
    %137 = arith.addf %134, %136 : vector<1x32xf32>
    %138 = vector.extract_strided_slice %120 {offsets = [0, 6, 0], sizes = [1, 1, 32], strides = [1, 1, 1]} : vector<1x8x32xf32> to vector<1x1x32xf32>
    %139 = vector.shape_cast %138 : vector<1x1x32xf32> to vector<1x32xf32>
    %140 = arith.addf %137, %139 : vector<1x32xf32>
    %141 = vector.extract_strided_slice %120 {offsets = [0, 7, 0], sizes = [1, 1, 32], strides = [1, 1, 1]} : vector<1x8x32xf32> to vector<1x1x32xf32>
    %142 = vector.shape_cast %141 : vector<1x1x32xf32> to vector<1x32xf32>
    %143 = arith.addf %140, %142 : vector<1x32xf32>
    %cst_36 = arith.constant 1.250000e-01 : f32
    %144 = vector.broadcast %cst_36 : f32 to vector<1x32xf32>
    %145 = arith.mulf %143, %144 : vector<1x32xf32>
    %c0_37 = arith.constant 0 : index
    %c0_38 = arith.constant 0 : index
    %146 = vector.load %arg21[%c0_37, %c0_38] : memref<1x32xf32, #tpu.memory_space<vmem>>, vector<1x32xf32>
    %c0_39 = arith.constant 0 : index
    %c0_40 = arith.constant 0 : index
    %147 = vector.load %arg22[%c0_39, %c0_40] : memref<1x32xf32, #tpu.memory_space<vmem>>, vector<1x32xf32>
    %cst_41 = arith.constant dense<0.000000e+00> : vector<1xf32>
    %148 = vector.multi_reduction <add>, %145, %cst_41 [1] : vector<1x32xf32> to vector<1xf32>
    %149 = vector.shape_cast %148 : vector<1xf32> to vector<1x1xf32>
    %cst_42 = arith.constant 3.200000e+01 : f32
    %150 = vector.broadcast %cst_42 : f32 to vector<1x1xf32>
    %151 = arith.divf %149, %150 : vector<1x1xf32>
    %152 = vector.broadcast %151 : vector<1x1xf32> to vector<1x32xf32>
    %153 = arith.subf %145, %152 : vector<1x32xf32>
    %154 = arith.mulf %153, %153 : vector<1x32xf32>
    %cst_43 = arith.constant dense<0.000000e+00> : vector<1xf32>
    %155 = vector.multi_reduction <add>, %154, %cst_43 [1] : vector<1x32xf32> to vector<1xf32>
    %156 = vector.shape_cast %155 : vector<1xf32> to vector<1x1xf32>
    %cst_44 = arith.constant 3.200000e+01 : f32
    %157 = vector.broadcast %cst_44 : f32 to vector<1x1xf32>
    %158 = arith.divf %156, %157 : vector<1x1xf32>
    %159 = vector.broadcast %151 : vector<1x1xf32> to vector<1x32xf32>
    %160 = arith.subf %145, %159 : vector<1x32xf32>
    %cst_45 = arith.constant 9.99999974E-6 : f32
    %161 = vector.broadcast %cst_45 : f32 to vector<1x1xf32>
    %162 = arith.addf %158, %161 : vector<1x1xf32>
    %163 = math.rsqrt %162 : vector<1x1xf32>
    %164 = vector.broadcast %163 : vector<1x1xf32> to vector<1x32xf32>
    %165 = arith.mulf %160, %164 : vector<1x32xf32>
    %166 = arith.mulf %165, %146 : vector<1x32xf32>
    %167 = arith.addf %166, %147 : vector<1x32xf32>
    %168 = arith.truncf %167 : vector<1x32xf32> to vector<1x32xbf16>
    %c0_46 = arith.constant 0 : index
    %c0_47 = arith.constant 0 : index
    %169 = vector.load %arg23[%c0_46, %c0_47] : memref<32x16xbf16, #tpu.memory_space<vmem>>, vector<32x16xbf16>
    %cst_48 = arith.constant dense<0.000000e+00> : vector<1x16xf32>
    %170 = tpu.matmul %168, %169, %cst_48 {dimension_numbers = #tpu.dot_dimension_numbers<[1], [0], [0], [1], [0, 0, 1, 1], [], []>} : vector<1x32xbf16>, vector<32x16xbf16>, vector<1x16xf32> -> vector<1x16xf32>
    %c0_49 = arith.constant 0 : index
    %c0_50 = arith.constant 0 : index
    %171 = vector.load %arg24[%c0_49, %c0_50] : memref<1x16xf32, #tpu.memory_space<vmem>>, vector<1x16xf32>
    %172 = arith.addf %170, %171 : vector<1x16xf32>
    %cst_51 = arith.constant 5.000000e-01 : f32
    %173 = vector.broadcast %cst_51 : f32 to vector<1x16xf32>
    %174 = arith.mulf %173, %172 : vector<1x16xf32>
    %cst_52 = arith.constant 4.471500e-02 : f32
    %175 = vector.broadcast %cst_52 : f32 to vector<1x16xf32>
    %176 = arith.mulf %175, %172 : vector<1x16xf32>
    %177 = arith.mulf %176, %172 : vector<1x16xf32>
    %178 = arith.mulf %177, %172 : vector<1x16xf32>
    %179 = arith.addf %172, %178 : vector<1x16xf32>
    %cst_53 = arith.constant 0.797884583 : f32
    %180 = vector.broadcast %cst_53 : f32 to vector<1x16xf32>
    %181 = arith.mulf %180, %179 : vector<1x16xf32>
    %182 = math.tanh %181 : vector<1x16xf32>
    %cst_54 = arith.constant 1.000000e+00 : f32
    %183 = vector.broadcast %cst_54 : f32 to vector<1x16xf32>
    %184 = arith.addf %183, %182 : vector<1x16xf32>
    %185 = arith.mulf %174, %184 : vector<1x16xf32>
    %186 = arith.truncf %185 : vector<1x16xf32> to vector<1x16xbf16>
    %c0_55 = arith.constant 0 : index
    %c0_56 = arith.constant 0 : index
    %187 = vector.load %arg25[%c0_55, %c0_56] : memref<16x128xbf16, #tpu.memory_space<vmem>>, vector<16x128xbf16>
    %cst_57 = arith.constant dense<0.000000e+00> : vector<1x128xf32>
    %188 = tpu.matmul %186, %187, %cst_57 {dimension_numbers = #tpu.dot_dimension_numbers<[1], [0], [0], [1], [0, 0, 1, 1], [], []>} : vector<1x16xbf16>, vector<16x128xbf16>, vector<1x128xf32> -> vector<1x128xf32>
    %c0_58 = arith.constant 0 : index
    %c0_59 = arith.constant 0 : index
    %189 = vector.load %arg26[%c0_58, %c0_59] : memref<1x128xf32, #tpu.memory_space<vmem>>, vector<1x128xf32>
    %190 = arith.addf %188, %189 : vector<1x128xf32>
    %c0_60 = arith.constant 0 : index
    %c0_61 = arith.constant 0 : index
    %c0_62 = arith.constant 0 : index
    %191 = vector.load %arg27[%c0_60, %c0_61, %c0_62] : memref<1x1x128xf32, #tpu.memory_space<vmem>>, vector<1x1x128xf32>
    %192 = vector.shape_cast %191 : vector<1x1x128xf32> to vector<1x128xf32>
    %193 = vector.shape_cast %190 : vector<1x128xf32> to vector<1x1x128xf32>
    tpu.vector_store %arg27[%c0_60, %c0_61, %c0_62], %193 {strides = array<i32>} : memref<1x1x128xf32, #tpu.memory_space<vmem>>, vector<1x1x128xf32>,
    return
  }
  func.func @transform_0(%arg0: i32) -> (i32, i32, i32) {
    %c0_i32 = arith.constant 0 : i32
    %c0_i32_0 = arith.constant 0 : i32
    %c0_i32_1 = arith.constant 0 : i32
    return %arg0, %c0_i32, %c0_i32_0 : i32, i32, i32
  }
  func.func @transform_1(%arg0: i32) -> (i32, i32) {
    %c0_i32 = arith.constant 0 : i32
    %c0_i32_0 = arith.constant 0 : i32
    %c0_i32_1 = arith.constant 0 : i32
    return %c0_i32, %c0_i32_0 : i32, i32
  }
  func.func @transform_2(%arg0: i32) -> (i32, i32) {
    %c0_i32 = arith.constant 0 : i32
    %c0_i32_0 = arith.constant 0 : i32
    %c0_i32_1 = arith.constant 0 : i32
    return %c0_i32, %c0_i32_0 : i32, i32
  }
  func.func @transform_3(%arg0: i32) -> (i32, i32) {
    %c0_i32 = arith.constant 0 : i32
    %c0_i32_0 = arith.constant 0 : i32
    %c0_i32_1 = arith.constant 0 : i32
    return %c0_i32, %c0_i32_0 : i32, i32
  }
  func.func @transform_4(%arg0: i32) -> (i32, i32, i32) {
    %c0_i32 = arith.constant 0 : i32
    %c0_i32_0 = arith.constant 0 : i32
    %c0_i32_1 = arith.constant 0 : i32
    %c0_i32_2 = arith.constant 0 : i32
    return %c0_i32, %c0_i32_0, %c0_i32_1 : i32, i32, i32
  }
  func.func @transform_5(%arg0: i32) -> (i32, i32, i32) {
    %c0_i32 = arith.constant 0 : i32
    %c0_i32_0 = arith.constant 0 : i32
    %c0_i32_1 = arith.constant 0 : i32
    %c0_i32_2 = arith.constant 0 : i32
    return %c0_i32, %c0_i32_0, %c0_i32_1 : i32, i32, i32
  }
  func.func @transform_6(%arg0: i32) -> (i32, i32, i32) {
    %c0_i32 = arith.constant 0 : i32
    %c0_i32_0 = arith.constant 0 : i32
    %c0_i32_1 = arith.constant 0 : i32
    %c0_i32_2 = arith.constant 0 : i32
    return %c0_i32, %c0_i32_0, %c0_i32_1 : i32, i32, i32
  }
  func.func @transform_7(%arg0: i32) -> (i32, i32, i32) {
    %c0_i32 = arith.constant 0 : i32
    %c0_i32_0 = arith.constant 0 : i32
    %c0_i32_1 = arith.constant 0 : i32
    %c0_i32_2 = arith.constant 0 : i32
    return %c0_i32, %c0_i32_0, %c0_i32_1 : i32, i32, i32
  }
  func.func @transform_8(%arg0: i32) -> (i32, i32, i32) {
    %c0_i32 = arith.constant 0 : i32
    %c0_i32_0 = arith.constant 0 : i32
    %c0_i32_1 = arith.constant 0 : i32
    %c0_i32_2 = arith.constant 0 : i32
    return %c0_i32, %c0_i32_0, %c0_i32_1 : i32, i32, i32
  }
  func.func @transform_9(%arg0: i32) -> (i32, i32, i32) {
    %c0_i32 = arith.constant 0 : i32
    %c0_i32_0 = arith.constant 0 : i32
    %c0_i32_1 = arith.constant 0 : i32
    %c0_i32_2 = arith.constant 0 : i32
    return %c0_i32, %c0_i32_0, %c0_i32_1 : i32, i32, i32
  }
  func.func @transform_10(%arg0: i32) -> (i32, i32, i32) {
    %c0_i32 = arith.constant 0 : i32
    %c0_i32_0 = arith.constant 0 : i32
    %c0_i32_1 = arith.constant 0 : i32
    %c0_i32_2 = arith.constant 0 : i32
    return %c0_i32, %c0_i32_0, %c0_i32_1 : i32, i32, i32
  }
  func.func @transform_11(%arg0: i32) -> (i32, i32, i32) {
    %c0_i32 = arith.constant 0 : i32
    %c0_i32_0 = arith.constant 0 : i32
    %c0_i32_1 = arith.constant 0 : i32
    %c0_i32_2 = arith.constant 0 : i32
    return %c0_i32, %c0_i32_0, %c0_i32_1 : i32, i32, i32
  }
  func.func @transform_12(%arg0: i32) -> (i32, i32, i32) {
    %c0_i32 = arith.constant 0 : i32
    %c0_i32_0 = arith.constant 0 : i32
    %c0_i32_1 = arith.constant 0 : i32
    %c0_i32_2 = arith.constant 0 : i32
    return %c0_i32, %c0_i32_0, %c0_i32_1 : i32, i32, i32
  }
  func.func @transform_13(%arg0: i32) -> (i32, i32, i32) {
    %c0_i32 = arith.constant 0 : i32
    %c0_i32_0 = arith.constant 0 : i32
    %c0_i32_1 = arith.constant 0 : i32
    %c0_i32_2 = arith.constant 0 : i32
    return %c0_i32, %c0_i32_0, %c0_i32_1 : i32, i32, i32
  }
  func.func @transform_14(%arg0: i32) -> (i32, i32, i32) {
    %c0_i32 = arith.constant 0 : i32
    %c0_i32_0 = arith.constant 0 : i32
    %c0_i32_1 = arith.constant 0 : i32
    %c0_i32_2 = arith.constant 0 : i32
    return %c0_i32, %c0_i32_0, %c0_i32_1 : i32, i32, i32
  }
  func.func @transform_15(%arg0: i32) -> (i32, i32, i32) {
    %c0_i32 = arith.constant 0 : i32
    %c0_i32_0 = arith.constant 0 : i32
    %c0_i32_1 = arith.constant 0 : i32
    %c0_i32_2 = arith.constant 0 : i32
    return %c0_i32, %c0_i32_0, %c0_i32_1 : i32, i32, i32
  }
  func.func @transform_16(%arg0: i32) -> (i32, i32) {
    %c0_i32 = arith.constant 0 : i32
    %c0_i32_0 = arith.constant 0 : i32
    %c0_i32_1 = arith.constant 0 : i32
    return %c0_i32, %c0_i32_0 : i32, i32
  }
  func.func @transform_17(%arg0: i32) -> (i32, i32) {
    %c0_i32 = arith.constant 0 : i32
    %c0_i32_0 = arith.constant 0 : i32
    %c0_i32_1 = arith.constant 0 : i32
    return %c0_i32, %c0_i32_0 : i32, i32
  }
  func.func @transform_18(%arg0: i32) -> (i32, i32) {
    %c0_i32 = arith.constant 0 : i32
    %c0_i32_0 = arith.constant 0 : i32
    %c0_i32_1 = arith.constant 0 : i32
    return %c0_i32, %c0_i32_0 : i32, i32
  }
  func.func @transform_19(%arg0: i32) -> (i32, i32) {
    %c0_i32 = arith.constant 0 : i32
    %c0_i32_0 = arith.constant 0 : i32
    %c0_i32_1 = arith.constant 0 : i32
    return %c0_i32, %c0_i32_0 : i32, i32
  }
  func.func @transform_20(%arg0: i32) -> (i32, i32) {
    %c0_i32 = arith.constant 0 : i32
    %c0_i32_0 = arith.constant 0 : i32
    %c0_i32_1 = arith.constant 0 : i32
    return %c0_i32, %c0_i32_0 : i32, i32
  }
  func.func @transform_21(%arg0: i32) -> (i32, i32) {
    %c0_i32 = arith.constant 0 : i32
    %c0_i32_0 = arith.constant 0 : i32
    %c0_i32_1 = arith.constant 0 : i32
    return %c0_i32, %c0_i32_0 : i32, i32
  }
  func.func @transform_22(%arg0: i32) -> (i32, i32) {
    %c0_i32 = arith.constant 0 : i32
    %c0_i32_0 = arith.constant 0 : i32
    %c0_i32_1 = arith.constant 0 : i32
    return %c0_i32, %c0_i32_0 : i32, i32
  }
  func.func @transform_23(%arg0: i32) -> (i32, i32) {
    %c0_i32 = arith.constant 0 : i32
    %c0_i32_0 = arith.constant 0 : i32
    %c0_i32_1 = arith.constant 0 : i32
    return %c0_i32, %c0_i32_0 : i32, i32
  }
  func.func @transform_24(%arg0: i32) -> (i32, i32) {
    %c0_i32 = arith.constant 0 : i32
    %c0_i32_0 = arith.constant 0 : i32
    %c0_i32_1 = arith.constant 0 : i32
    return %c0_i32, %c0_i32_0 : i32, i32
  }
  func.func @transform_25(%arg0: i32) -> (i32, i32) {
    %c0_i32 = arith.constant 0 : i32
    %c0_i32_0 = arith.constant 0 : i32
    %c0_i32_1 = arith.constant 0 : i32
    return %c0_i32, %c0_i32_0 : i32, i32
  }
  func.func @transform_26(%arg0: i32) -> (i32, i32, i32) {
    %c0_i32 = arith.constant 0 : i32
    %c0_i32_0 = arith.constant 0 : i32
    %c0_i32_1 = arith.constant 0 : i32
    return %arg0, %c0_i32, %c0_i32_0 : i32, i32, i32
  }
}

</mosaic_0001>

<llo_original>
// kernel: tpu_custom_call.1
$region0: #{tpu_custom_call.1}
  #allocation0 [shape = 'u32[]', space=smem, size = 0x4, offset = 0x4, fixed_abs, tag = 'smem constant byte address 0x4 - core index']
  #allocation1 [shape = 'u32[144,128]{1,0:T(1,128)}', space=vmem, size = 0x12000, scoped, tag = 'internal scratch']
  %s0 = inlined_call_operand.hbm [shape: bf16[2,16,8], index: 0, kind: input, shape index: {}]
  %s1 = inlined_call_operand.hbm [shape: bf16[8,16], index: 1, kind: input, shape index: {}]
  %s2 = inlined_call_operand.hbm [shape: bf16[8,32], index: 2, kind: input, shape index: {}]
  %s3 = inlined_call_operand.hbm [shape: f32[1,32], index: 3, kind: input, shape index: {}]
  %s4 = inlined_call_operand.hbm [shape: bf16[2,32,96], index: 4, kind: input, shape index: {}]
  %s5 = inlined_call_operand.hbm [shape: f32[2,1,96], index: 5, kind: input, shape index: {}]
  %s6 = inlined_call_operand.hbm [shape: bf16[2,32,32], index: 6, kind: input, shape index: {}]
  %s7 = inlined_call_operand.hbm [shape: f32[2,1,32], index: 7, kind: input, shape index: {}]
  %s8 = inlined_call_operand.hbm [shape: bf16[2,32,64], index: 8, kind: input, shape index: {}]
  %s9 = inlined_call_operand.hbm [shape: f32[2,1,64], index: 9, kind: input, shape index: {}]
  %s10 = inlined_call_operand.hbm [shape: bf16[2,64,32], index: 10, kind: input, shape index: {}]
  %s11 = inlined_call_operand.hbm [shape: f32[2,1,32], index: 11, kind: input, shape index: {}]
  %s12 = inlined_call_operand.hbm [shape: f32[2,1,32], index: 12, kind: input, shape index: {}]
  %s13 = inlined_call_operand.hbm [shape: f32[2,1,32], index: 13, kind: input, shape index: {}]
  %s14 = inlined_call_operand.hbm [shape: f32[2,1,32], index: 14, kind: input, shape index: {}]
  %s15 = inlined_call_operand.hbm [shape: f32[2,1,32], index: 15, kind: input, shape index: {}]
  %s16 = inlined_call_operand.hbm [shape: bf16[32,96], index: 16, kind: input, shape index: {}]
  %s17 = inlined_call_operand.hbm [shape: f32[1,96], index: 17, kind: input, shape index: {}]
  %s18 = inlined_call_operand.hbm [shape: bf16[32,32], index: 18, kind: input, shape index: {}]
  %s19 = inlined_call_operand.hbm [shape: f32[1,32], index: 19, kind: input, shape index: {}]
  %s20 = inlined_call_operand.hbm [shape: f32[1,32], index: 20, kind: input, shape index: {}]
  %s21 = inlined_call_operand.hbm [shape: f32[1,32], index: 21, kind: input, shape index: {}]
  %s22 = inlined_call_operand.hbm [shape: bf16[32,16], index: 22, kind: input, shape index: {}]
  %s23 = inlined_call_operand.hbm [shape: f32[1,16], index: 23, kind: input, shape index: {}]
  %s24 = inlined_call_operand.hbm [shape: bf16[16,128], index: 24, kind: input, shape index: {}]
  %s25 = inlined_call_operand.hbm [shape: f32[1,128], index: 25, kind: input, shape index: {}]
  %s26 = inlined_call_operand.hbm [shape: f32[2,1,128], index: 26, kind: output, shape index: {}]
  %s27 = sld [smem:[#allocation0]]
  $region248: #{tpu_custom_call.1} parent=0
    _
  %s29 = ssub.s32 1, %s27
  %s30 = scalar_select 0, %s29, %s27
  $region1: #{tpu_custom_call.1} parent=0
    #allocation2 [shape = 'u8[8192]{0}', space=vmem, size = 0x2000, scoped, tag = 'input window, operand 0']
    #allocation3 [shape = 's32[2]{0}', space=sflag, size = 0x8, scoped, tag = 'scoped memory for tpu_custom_call.1']
    #allocation4 [shape = 's32[2]{0}', space=sflag, size = 0x8, scoped, tag = 'scoped memory for tpu_custom_call.1']
    #allocation5 [shape = 'u8[2048]{0}', space=vmem, size = 0x800, scoped, tag = 'input window, operand 1, single buffered']
    #allocation6 [shape = 's32[1]{0}', space=sflag, size = 0x4, scoped, tag = 'scoped memory for tpu_custom_call.1']
    #allocation7 [shape = 'u8[2048]{0}', space=vmem, size = 0x800, scoped, tag = 'input window, operand 2, single buffered']
    #allocation8 [shape = 'u8[512]{0}', space=vmem, size = 0x400, scoped, tag = 'input window, operand 3, single buffered']
    #allocation9 [shape = 's32[1]{0}', space=sflag, size = 0x4, scoped, tag = 'scoped memory for tpu_custom_call.1']
    #allocation10 [shape = 'u8[16384]{0}', space=vmem, size = 0x4000, scoped, tag = 'input window, operand 4, single buffered']
    #allocation11 [shape = 'u8[1024]{0}', space=vmem, size = 0x400, scoped, tag = 'input window, operand 5, single buffered']
    #allocation12 [shape = 's32[1]{0}', space=sflag, size = 0x4, scoped, tag = 'scoped memory for tpu_custom_call.1']
    #allocation13 [shape = 'u8[16384]{0}', space=vmem, size = 0x4000, scoped, tag = 'input window, operand 6, single buffered']
    #allocation14 [shape = 'u8[1024]{0}', space=vmem, size = 0x400, scoped, tag = 'input window, operand 7, single buffered']
    #allocation15 [shape = 's32[1]{0}', space=sflag, size = 0x4, scoped, tag = 'scoped memory for tpu_custom_call.1']
    #allocation16 [shape = 'u8[16384]{0}', space=vmem, size = 0x4000, scoped, tag = 'input window, operand 8, single buffered']
    #allocation17 [shape = 'u8[1024]{0}', space=vmem, size = 0x400, scoped, tag = 'input window, operand 9, single buffered']
    #allocation18 [shape = 's32[1]{0}', space=sflag, size = 0x4, scoped, tag = 'scoped memory for tpu_custom_call.1']
    #allocation19 [shape = 'u8[32768]{0}', space=vmem, size = 0x8000, scoped, tag = 'input window, operand 10, single buffered']
    #allocation20 [shape = 'u8[1024]{0}', space=vmem, size = 0x400, scoped, tag = 'input window, operand 11, single buffered']
    #allocation21 [shape = 's32[1]{0}', space=sflag, size = 0x4, scoped, tag = 'scoped memory for tpu_custom_call.1']
    #allocation22 [shape = 'u8[1024]{0}', space=vmem, size = 0x400, scoped, tag = 'input window, operand 12, single buffered']
    #allocation23 [shape = 'u8[1024]{0}', space=vmem, size = 0x400, scoped, tag = 'input window, operand 13, single buffered']
    #allocation24 [shape = 's32[1]{0}', space=sflag, size = 0x4, scoped, tag = 'scoped memory for tpu_custom_call.1']
    #allocation25 [shape = 'u8[1024]{0}', space=vmem, size = 0x400, scoped, tag = 'input window, operand 14, single buffered']
    #allocation26 [shape = 'u8[1024]{0}', space=vmem, size = 0x400, scoped, tag = 'input window, operand 15, single buffered']
    #allocation27 [shape = 's32[1]{0}', space=sflag, size = 0x4, scoped, tag = 'scoped memory for tpu_custom_call.1']
    #allocation28 [shape = 'u8[8192]{0}', space=vmem, size = 0x2000, scoped, tag = 'input window, operand 16, single buffered']
    #allocation29 [shape = 'u8[512]{0}', space=vmem, size = 0x400, scoped, tag = 'input window, operand 17, single buffered']
    #allocation30 [shape = 's32[1]{0}', space=sflag, size = 0x4, scoped, tag = 'scoped memory for tpu_custom_call.1']
    #allocation31 [shape = 'u8[8192]{0}', space=vmem, size = 0x2000, scoped, tag = 'input window, operand 18, single buffered']
    #allocation32 [shape = 'u8[512]{0}', space=vmem, size = 0x400, scoped, tag = 'input window, operand 19, single buffered']
    #allocation33 [shape = 's32[1]{0}', space=sflag, size = 0x4, scoped, tag = 'scoped memory for tpu_custom_call.1']
    #allocation34 [shape = 'u8[512]{0}', space=vmem, size = 0x400, scoped, tag = 'input window, operand 20, single buffered']
    #allocation35 [shape = 'u8[512]{0}', space=vmem, size = 0x400, scoped, tag = 'input window, operand 21, single buffered']
    #allocation36 [shape = 's32[1]{0}', space=sflag, size = 0x4, scoped, tag = 'scoped memory for tpu_custom_call.1']
    #allocation37 [shape = 'u8[8192]{0}', space=vmem, size = 0x2000, scoped, tag = 'input window, operand 22, single buffered']
    #allocation38 [shape = 'u8[512]{0}', space=vmem, size = 0x400, scoped, tag = 'input window, operand 23, single buffered']
    #allocation39 [shape = 's32[1]{0}', space=sflag, size = 0x4, scoped, tag = 'scoped memory for tpu_custom_call.1']
    #allocation40 [shape = 'u8[4096]{0}', space=vmem, size = 0x1000, scoped, tag = 'input window, operand 24, single buffered']
    #allocation41 [shape = 'u8[512]{0}', space=vmem, size = 0x400, scoped, tag = 'input window, operand 25, single buffered']
    #allocation42 [shape = 's32[1]{0}', space=sflag, size = 0x4, scoped, tag = 'scoped memory for tpu_custom_call.1']
    #allocation43 [shape = 'u8[1024]{0}', space=vmem, size = 0x400, scoped, tag = 'output window, operand 0']
    %31 = vsyncpa [#allocation3], 0
    %s32 = scalar_lea.sflag [#allocation3], 1
    %33 = vsyncpa %s32, 0
    %34 = vsyncpa [#allocation6], 0
    %35 = vsyncpa [#allocation9], 0
    %36 = vsyncpa [#allocation12], 0
    %37 = vsyncpa [#allocation15], 0
    %38 = vsyncpa [#allocation18], 0
    %39 = vsyncpa [#allocation21], 0
    %40 = vsyncpa [#allocation24], 0
    %41 = vsyncpa [#allocation27], 0
    %42 = vsyncpa [#allocation30], 0
    %43 = vsyncpa [#allocation33], 0
    %44 = vsyncpa [#allocation36], 0
    %45 = vsyncpa [#allocation39], 0
    %46 = vsyncpa [#allocation42], 0
    %47 = vsyncpa [#allocation4], 0
    %s48 = scalar_lea.sflag [#allocation4], 1
    %49 = vsyncpa %s48, 0
    loop: start=0, step=1, limit=4
    $region2: #{tpu_custom_call.1} parent=1 // loop_pre_header
      _
    $region3: #{tpu_custom_call.1} parent=1 // loop_header
      %s51 = sphi 0, %s55
      %p52 = scmp.ge.s32.totalorder %s51, 4
      %s61 = sphi 0, %s63
      %s64 = sphi 0, %s61
      %s65 = sphi 0, %s64
      %s81 = sphi 0, %s65
      %s85 = sphi 0, %s85
      %s87 = sphi 0, %s85
      %s88 = sphi 0, %s87
      %s102 = sphi 0, %s88
      %s106 = sphi 0, %s106
      %s108 = sphi 0, %s106
      %s109 = sphi 0, %s108
      %s123 = sphi 0, %s109
      %s127 = sphi 0, %s127
      %s129 = sphi 0, %s127
      %s130 = sphi 0, %s129
      %s144 = sphi 0, %s130
      %s148 = sphi 0, %s148
      %s150 = sphi 0, %s148
      %s151 = sphi 0, %s150
      %s165 = sphi 0, %s151
      %s169 = sphi 0, %s169
      %s171 = sphi 0, %s169
      %s172 = sphi 0, %s171
      %s186 = sphi 0, %s172
      %s190 = sphi 0, %s190
      %s192 = sphi 0, %s190
      %s193 = sphi 0, %s192
      %s207 = sphi 0, %s193
      %s211 = sphi 0, %s211
      %s213 = sphi 0, %s211
      %s214 = sphi 0, %s213
      %s228 = sphi 0, %s214
      %s232 = sphi 0, %s232
      %s234 = sphi 0, %s232
      %s235 = sphi 0, %s234
      %s249 = sphi 0, %s235
      %s253 = sphi 0, %s253
      %s255 = sphi 0, %s253
      %s256 = sphi 0, %s255
      %s270 = sphi 0, %s256
      %s274 = sphi 0, %s274
      %s276 = sphi 0, %s274
      %s277 = sphi 0, %s276
      %s291 = sphi 0, %s277
      %s295 = sphi 0, %s295
      %s297 = sphi 0, %s295
      %s298 = sphi 0, %s297
      %s312 = sphi 0, %s298
      %s316 = sphi 0, %s316
      %s318 = sphi 0, %s316
      %s319 = sphi 0, %s318
      %s333 = sphi 0, %s319
      %s337 = sphi 0, %s337
      %s339 = sphi 0, %s337
      %s340 = sphi 0, %s339
      %s354 = sphi 0, %s340
      %s358 = sphi 0, %s358
      %s360 = sphi 0, %s358
      %s361 = sphi 0, %s360
      %s375 = sphi 0, %s361
      %s379 = sphi 0, %s379
      %s381 = sphi 0, %s379
      %s382 = sphi 0, %s381
      %s396 = sphi 0, %s382
      %s400 = sphi 0, %s400
      %s402 = sphi 0, %s400
      %s403 = sphi 0, %s402
      %s417 = sphi 0, %s403
      %s421 = sphi 0, %s421
      %s423 = sphi 0, %s421
      %s424 = sphi 0, %s423
      %s438 = sphi 0, %s424
      %s442 = sphi 0, %s442
      %s444 = sphi 0, %s442
      %s445 = sphi 0, %s444
      %s459 = sphi 0, %s445
      %s463 = sphi 0, %s463
      %s465 = sphi 0, %s463
      %s466 = sphi 0, %s465
      %s480 = sphi 0, %s466
      %s484 = sphi 0, %s484
      %s486 = sphi 0, %s484
      %s487 = sphi 0, %s486
      %s501 = sphi 0, %s487
      %s505 = sphi 0, %s505
      %s507 = sphi 0, %s505
      %s508 = sphi 0, %s507
      %s522 = sphi 0, %s508
      %s526 = sphi 0, %s526
      %s528 = sphi 0, %s526
      %s529 = sphi 0, %s528
      %s543 = sphi 0, %s529
      %s547 = sphi 0, %s547
      %s549 = sphi 0, %s547
      %s550 = sphi 0, %s549
      %s564 = sphi 0, %s550
      %s568 = sphi 0, %s568
      %s570 = sphi 0, %s568
      %s571 = sphi 0, %s570
      %s585 = sphi 0, %s571
      %s589 = sphi 0, %s589
      %s591 = sphi 0, %s589
      %s592 = sphi 0, %s591
      %s606 = sphi 0, %s592
      %s612 = sphi 0, %s614
      %s615 = sphi 0, %s612
      %s616 = sphi 0, %s615
      %s632 = sphi 0, %s616
    $region4: #{tpu_custom_call.1} parent=1 // loop_header_branch
      %54 = sbr.rel (%p52) target = $region8
    $region5: #{tpu_custom_call.1} parent=1 // loop_body
      %s56 = ssub.s32 %s51, 1
      %s57 = ssub.s32 %s51, 2
      %s58 = sadd.s32 %s51, 1
      %s59 = ssub.s32 %s51, %s58
      %p60 = scmp.eq.s32.totalorder %s59, 0
      %s62 = sadd.s32 %s61, 1
      %s63 = scalar_select %p60, %s61, %s62
      %p66 = pneg %p60
      %p67 = scmp.eq.s32.totalorder %s51, 1
      %p68 = por %p66, %p67
      %p69 = scmp.ne.s32.totalorder %s61, %s64
      %p70 = scmp.eq.s32.totalorder %s51, 0
      %p71 = por %p69, %p70
      %p72 = scmp.ne.s32.totalorder %s61, %s64
      %p73 = scmp.eq.s32.totalorder %s56, 1
      %p74 = por %p72, %p73
      %p75 = scmp.ne.s32.totalorder %s64, %s65
      %p76 = scmp.eq.s32.totalorder %s56, 0
      %p77 = por %p75, %p76
      %p78 = scmp.ne.s32.totalorder %s64, %s65
      %p79 = scmp.eq.s32.totalorder %s57, 1
      %p80 = por %p78, %p79
      %p82 = scmp.ne.s32.totalorder %s65, %s81
      %p83 = scmp.eq.s32.totalorder %s57, 0
      %p84 = por %p82, %p83
      %s86 = sadd.s32 %s85, 1
      %p89 = scmp.eq.s32.totalorder %s51, 1
      %p90 = scmp.ne.s32.totalorder %s85, %s87
      %p91 = scmp.eq.s32.totalorder %s51, 0
      %p92 = por %p90, %p91
      %p93 = scmp.ne.s32.totalorder %s85, %s87
      %p94 = scmp.eq.s32.totalorder %s56, 1
      %p95 = por %p93, %p94
      %p96 = scmp.ne.s32.totalorder %s87, %s88
      %p97 = scmp.eq.s32.totalorder %s56, 0
      %p98 = por %p96, %p97
      %p99 = scmp.ne.s32.totalorder %s87, %s88
      %p100 = scmp.eq.s32.totalorder %s57, 1
      %p101 = por %p99, %p100
      %p103 = scmp.ne.s32.totalorder %s88, %s102
      %p104 = scmp.eq.s32.totalorder %s57, 0
      %p105 = por %p103, %p104
      %s107 = sadd.s32 %s106, 1
      %p110 = scmp.eq.s32.totalorder %s51, 1
      %p111 = scmp.ne.s32.totalorder %s106, %s108
      %p112 = scmp.eq.s32.totalorder %s51, 0
      %p113 = por %p111, %p112
      %p114 = scmp.ne.s32.totalorder %s106, %s108
      %p115 = scmp.eq.s32.totalorder %s56, 1
      %p116 = por %p114, %p115
      %p117 = scmp.ne.s32.totalorder %s108, %s109
      %p118 = scmp.eq.s32.totalorder %s56, 0
      %p119 = por %p117, %p118
      %p120 = scmp.ne.s32.totalorder %s108, %s109
      %p121 = scmp.eq.s32.totalorder %s57, 1
      %p122 = por %p120, %p121
      %p124 = scmp.ne.s32.totalorder %s109, %s123
      %p125 = scmp.eq.s32.totalorder %s57, 0
      %p126 = por %p124, %p125
      %s128 = sadd.s32 %s127, 1
      %p131 = scmp.eq.s32.totalorder %s51, 1
      %p132 = scmp.ne.s32.totalorder %s127, %s129
      %p133 = scmp.eq.s32.totalorder %s51, 0
      %p134 = por %p132, %p133
      %p135 = scmp.ne.s32.totalorder %s127, %s129
      %p136 = scmp.eq.s32.totalorder %s56, 1
      %p137 = por %p135, %p136
      %p138 = scmp.ne.s32.totalorder %s129, %s130
      %p139 = scmp.eq.s32.totalorder %s56, 0
      %p140 = por %p138, %p139
      %p141 = scmp.ne.s32.totalorder %s129, %s130
      %p142 = scmp.eq.s32.totalorder %s57, 1
      %p143 = por %p141, %p142
      %p145 = scmp.ne.s32.totalorder %s130, %s144
      %p146 = scmp.eq.s32.totalorder %s57, 0
      %p147 = por %p145, %p146
      %s149 = sadd.s32 %s148, 1
      %p152 = scmp.eq.s32.totalorder %s51, 1
      %p153 = scmp.ne.s32.totalorder %s148, %s150
      %p154 = scmp.eq.s32.totalorder %s51, 0
      %p155 = por %p153, %p154
      %p156 = scmp.ne.s32.totalorder %s148, %s150
      %p157 = scmp.eq.s32.totalorder %s56, 1
      %p158 = por %p156, %p157
      %p159 = scmp.ne.s32.totalorder %s150, %s151
      %p160 = scmp.eq.s32.totalorder %s56, 0
      %p161 = por %p159, %p160
      %p162 = scmp.ne.s32.totalorder %s150, %s151
      %p163 = scmp.eq.s32.totalorder %s57, 1
      %p164 = por %p162, %p163
      %p166 = scmp.ne.s32.totalorder %s151, %s165
      %p167 = scmp.eq.s32.totalorder %s57, 0
      %p168 = por %p166, %p167
      %s170 = sadd.s32 %s169, 1
      %p173 = scmp.eq.s32.totalorder %s51, 1
      %p174 = scmp.ne.s32.totalorder %s169, %s171
      %p175 = scmp.eq.s32.totalorder %s51, 0
      %p176 = por %p174, %p175
      %p177 = scmp.ne.s32.totalorder %s169, %s171
      %p178 = scmp.eq.s32.totalorder %s56, 1
      %p179 = por %p177, %p178
      %p180 = scmp.ne.s32.totalorder %s171, %s172
      %p181 = scmp.eq.s32.totalorder %s56, 0
      %p182 = por %p180, %p181
      %p183 = scmp.ne.s32.totalorder %s171, %s172
      %p184 = scmp.eq.s32.totalorder %s57, 1
      %p185 = por %p183, %p184
      %p187 = scmp.ne.s32.totalorder %s172, %s186
      %p188 = scmp.eq.s32.totalorder %s57, 0
      %p189 = por %p187, %p188
      %s191 = sadd.s32 %s190, 1
      %p194 = scmp.eq.s32.totalorder %s51, 1
      %p195 = scmp.ne.s32.totalorder %s190, %s192
      %p196 = scmp.eq.s32.totalorder %s51, 0
      %p197 = por %p195, %p196
      %p198 = scmp.ne.s32.totalorder %s190, %s192
      %p199 = scmp.eq.s32.totalorder %s56, 1
      %p200 = por %p198, %p199
      %p201 = scmp.ne.s32.totalorder %s192, %s193
      %p202 = scmp.eq.s32.totalorder %s56, 0
      %p203 = por %p201, %p202
      %p204 = scmp.ne.s32.totalorder %s192, %s193
      %p205 = scmp.eq.s32.totalorder %s57, 1
      %p206 = por %p204, %p205
      %p208 = scmp.ne.s32.totalorder %s193, %s207
      %p209 = scmp.eq.s32.totalorder %s57, 0
      %p210 = por %p208, %p209
      %s212 = sadd.s32 %s211, 1
      %p215 = scmp.eq.s32.totalorder %s51, 1
      %p216 = scmp.ne.s32.totalorder %s211, %s213
      %p217 = scmp.eq.s32.totalorder %s51, 0
      %p218 = por %p216, %p217
      %p219 = scmp.ne.s32.totalorder %s211, %s213
      %p220 = scmp.eq.s32.totalorder %s56, 1
      %p221 = por %p219, %p220
      %p222 = scmp.ne.s32.totalorder %s213, %s214
      %p223 = scmp.eq.s32.totalorder %s56, 0
      %p224 = por %p222, %p223
      %p225 = scmp.ne.s32.totalorder %s213, %s214
      %p226 = scmp.eq.s32.totalorder %s57, 1
      %p227 = por %p225, %p226
      %p229 = scmp.ne.s32.totalorder %s214, %s228
      %p230 = scmp.eq.s32.totalorder %s57, 0
      %p231 = por %p229, %p230
      %s233 = sadd.s32 %s232, 1
      %p236 = scmp.eq.s32.totalorder %s51, 1
      %p237 = scmp.ne.s32.totalorder %s232, %s234
      %p238 = scmp.eq.s32.totalorder %s51, 0
      %p239 = por %p237, %p238
      %p240 = scmp.ne.s32.totalorder %s232, %s234
      %p241 = scmp.eq.s32.totalorder %s56, 1
      %p242 = por %p240, %p241
      %p243 = scmp.ne.s32.totalorder %s234, %s235
      %p244 = scmp.eq.s32.totalorder %s56, 0
      %p245 = por %p243, %p244
      %p246 = scmp.ne.s32.totalorder %s234, %s235
      %p247 = scmp.eq.s32.totalorder %s57, 1
      %p248 = por %p246, %p247
      %p250 = scmp.ne.s32.totalorder %s235, %s249
      %p251 = scmp.eq.s32.totalorder %s57, 0
      %p252 = por %p250, %p251
      %s254 = sadd.s32 %s253, 1
      %p257 = scmp.eq.s32.totalorder %s51, 1
      %p258 = scmp.ne.s32.totalorder %s253, %s255
      %p259 = scmp.eq.s32.totalorder %s51, 0
      %p260 = por %p258, %p259
      %p261 = scmp.ne.s32.totalorder %s253, %s255
      %p262 = scmp.eq.s32.totalorder %s56, 1
      %p263 = por %p261, %p262
      %p264 = scmp.ne.s32.totalorder %s255, %s256
      %p265 = scmp.eq.s32.totalorder %s56, 0
      %p266 = por %p264, %p265
      %p267 = scmp.ne.s32.totalorder %s255, %s256
      %p268 = scmp.eq.s32.totalorder %s57, 1
      %p269 = por %p267, %p268
      %p271 = scmp.ne.s32.totalorder %s256, %s270
      %p272 = scmp.eq.s32.totalorder %s57, 0
      %p273 = por %p271, %p272
      %s275 = sadd.s32 %s274, 1
      %p278 = scmp.eq.s32.totalorder %s51, 1
      %p279 = scmp.ne.s32.totalorder %s274, %s276
      %p280 = scmp.eq.s32.totalorder %s51, 0
      %p281 = por %p279, %p280
      %p282 = scmp.ne.s32.totalorder %s274, %s276
      %p283 = scmp.eq.s32.totalorder %s56, 1
      %p284 = por %p282, %p283
      %p285 = scmp.ne.s32.totalorder %s276, %s277
      %p286 = scmp.eq.s32.totalorder %s56, 0
      %p287 = por %p285, %p286
      %p288 = scmp.ne.s32.totalorder %s276, %s277
      %p289 = scmp.eq.s32.totalorder %s57, 1
      %p290 = por %p288, %p289
      %p292 = scmp.ne.s32.totalorder %s277, %s291
      %p293 = scmp.eq.s32.totalorder %s57, 0
      %p294 = por %p292, %p293
      %s296 = sadd.s32 %s295, 1
      %p299 = scmp.eq.s32.totalorder %s51, 1
      %p300 = scmp.ne.s32.totalorder %s295, %s297
      %p301 = scmp.eq.s32.totalorder %s51, 0
      %p302 = por %p300, %p301
      %p303 = scmp.ne.s32.totalorder %s295, %s297
      %p304 = scmp.eq.s32.totalorder %s56, 1
      %p305 = por %p303, %p304
      %p306 = scmp.ne.s32.totalorder %s297, %s298
      %p307 = scmp.eq.s32.totalorder %s56, 0
      %p308 = por %p306, %p307
      %p309 = scmp.ne.s32.totalorder %s297, %s298
      %p310 = scmp.eq.s32.totalorder %s57, 1
      %p311 = por %p309, %p310
      %p313 = scmp.ne.s32.totalorder %s298, %s312
      %p314 = scmp.eq.s32.totalorder %s57, 0
      %p315 = por %p313, %p314
      %s317 = sadd.s32 %s316, 1
      %p320 = scmp.eq.s32.totalorder %s51, 1
      %p321 = scmp.ne.s32.totalorder %s316, %s318
      %p322 = scmp.eq.s32.totalorder %s51, 0
      %p323 = por %p321, %p322
      %p324 = scmp.ne.s32.totalorder %s316, %s318
      %p325 = scmp.eq.s32.totalorder %s56, 1
      %p326 = por %p324, %p325
      %p327 = scmp.ne.s32.totalorder %s318, %s319
      %p328 = scmp.eq.s32.totalorder %s56, 0
      %p329 = por %p327, %p328
      %p330 = scmp.ne.s32.totalorder %s318, %s319
      %p331 = scmp.eq.s32.totalorder %s57, 1
      %p332 = por %p330, %p331
      %p334 = scmp.ne.s32.totalorder %s319, %s333
      %p335 = scmp.eq.s32.totalorder %s57, 0
      %p336 = por %p334, %p335
      %s338 = sadd.s32 %s337, 1
      %p341 = scmp.eq.s32.totalorder %s51, 1
      %p342 = scmp.ne.s32.totalorder %s337, %s339
      %p343 = scmp.eq.s32.totalorder %s51, 0
      %p344 = por %p342, %p343
      %p345 = scmp.ne.s32.totalorder %s337, %s339
      %p346 = scmp.eq.s32.totalorder %s56, 1
      %p347 = por %p345, %p346
      %p348 = scmp.ne.s32.totalorder %s339, %s340
      %p349 = scmp.eq.s32.totalorder %s56, 0
      %p350 = por %p348, %p349
      %p351 = scmp.ne.s32.totalorder %s339, %s340
      %p352 = scmp.eq.s32.totalorder %s57, 1
      %p353 = por %p351, %p352
      %p355 = scmp.ne.s32.totalorder %s340, %s354
      %p356 = scmp.eq.s32.totalorder %s57, 0
      %p357 = por %p355, %p356
      %s359 = sadd.s32 %s358, 1
      %p362 = scmp.eq.s32.totalorder %s51, 1
      %p363 = scmp.ne.s32.totalorder %s358, %s360
      %p364 = scmp.eq.s32.totalorder %s51, 0
      %p365 = por %p363, %p364
      %p366 = scmp.ne.s32.totalorder %s358, %s360
      %p367 = scmp.eq.s32.totalorder %s56, 1
      %p368 = por %p366, %p367
      %p369 = scmp.ne.s32.totalorder %s360, %s361
      %p370 = scmp.eq.s32.totalorder %s56, 0
      %p371 = por %p369, %p370
      %p372 = scmp.ne.s32.totalorder %s360, %s361
      %p373 = scmp.eq.s32.totalorder %s57, 1
      %p374 = por %p372, %p373
      %p376 = scmp.ne.s32.totalorder %s361, %s375
      %p377 = scmp.eq.s32.totalorder %s57, 0
      %p378 = por %p376, %p377
      %s380 = sadd.s32 %s379, 1
      %p383 = scmp.eq.s32.totalorder %s51, 1
      %p384 = scmp.ne.s32.totalorder %s379, %s381
      %p385 = scmp.eq.s32.totalorder %s51, 0
      %p386 = por %p384, %p385
      %p387 = scmp.ne.s32.totalorder %s379, %s381
      %p388 = scmp.eq.s32.totalorder %s56, 1
      %p389 = por %p387, %p388
      %p390 = scmp.ne.s32.totalorder %s381, %s382
      %p391 = scmp.eq.s32.totalorder %s56, 0
      %p392 = por %p390, %p391
      %p393 = scmp.ne.s32.totalorder %s381, %s382
      %p394 = scmp.eq.s32.totalorder %s57, 1
      %p395 = por %p393, %p394
      %p397 = scmp.ne.s32.totalorder %s382, %s396
      %p398 = scmp.eq.s32.totalorder %s57, 0
      %p399 = por %p397, %p398
      %s401 = sadd.s32 %s400, 1
      %p404 = scmp.eq.s32.totalorder %s51, 1
      %p405 = scmp.ne.s32.totalorder %s400, %s402
      %p406 = scmp.eq.s32.totalorder %s51, 0
      %p407 = por %p405, %p406
      %p408 = scmp.ne.s32.totalorder %s400, %s402
      %p409 = scmp.eq.s32.totalorder %s56, 1
      %p410 = por %p408, %p409
      %p411 = scmp.ne.s32.totalorder %s402, %s403
      %p412 = scmp.eq.s32.totalorder %s56, 0
      %p413 = por %p411, %p412
      %p414 = scmp.ne.s32.totalorder %s402, %s403
      %p415 = scmp.eq.s32.totalorder %s57, 1
      %p416 = por %p414, %p415
      %p418 = scmp.ne.s32.totalorder %s403, %s417
      %p419 = scmp.eq.s32.totalorder %s57, 0
      %p420 = por %p418, %p419
      %s422 = sadd.s32 %s421, 1
      %p425 = scmp.eq.s32.totalorder %s51, 1
      %p426 = scmp.ne.s32.totalorder %s421, %s423
      %p427 = scmp.eq.s32.totalorder %s51, 0
      %p428 = por %p426, %p427
      %p429 = scmp.ne.s32.totalorder %s421, %s423
      %p430 = scmp.eq.s32.totalorder %s56, 1
      %p431 = por %p429, %p430
      %p432 = scmp.ne.s32.totalorder %s423, %s424
      %p433 = scmp.eq.s32.totalorder %s56, 0
      %p434 = por %p432, %p433
      %p435 = scmp.ne.s32.totalorder %s423, %s424
      %p436 = scmp.eq.s32.totalorder %s57, 1
      %p437 = por %p435, %p436
      %p439 = scmp.ne.s32.totalorder %s424, %s438
      %p440 = scmp.eq.s32.totalorder %s57, 0
      %p441 = por %p439, %p440
      %s443 = sadd.s32 %s442, 1
      %p446 = scmp.eq.s32.totalorder %s51, 1
      %p447 = scmp.ne.s32.totalorder %s442, %s444
      %p448 = scmp.eq.s32.totalorder %s51, 0
      %p449 = por %p447, %p448
      %p450 = scmp.ne.s32.totalorder %s442, %s444
      %p451 = scmp.eq.s32.totalorder %s56, 1
      %p452 = por %p450, %p451
      %p453 = scmp.ne.s32.totalorder %s444, %s445
      %p454 = scmp.eq.s32.totalorder %s56, 0
      %p455 = por %p453, %p454
      %p456 = scmp.ne.s32.totalorder %s444, %s445
      %p457 = scmp.eq.s32.totalorder %s57, 1
      %p458 = por %p456, %p457
      %p460 = scmp.ne.s32.totalorder %s445, %s459
      %p461 = scmp.eq.s32.totalorder %s57, 0
      %p462 = por %p460, %p461
      %s464 = sadd.s32 %s463, 1
      %p467 = scmp.eq.s32.totalorder %s51, 1
      %p468 = scmp.ne.s32.totalorder %s463, %s465
      %p469 = scmp.eq.s32.totalorder %s51, 0
      %p470 = por %p468, %p469
      %p471 = scmp.ne.s32.totalorder %s463, %s465
      %p472 = scmp.eq.s32.totalorder %s56, 1
      %p473 = por %p471, %p472
      %p474 = scmp.ne.s32.totalorder %s465, %s466
      %p475 = scmp.eq.s32.totalorder %s56, 0
      %p476 = por %p474, %p475
      %p477 = scmp.ne.s32.totalorder %s465, %s466
      %p478 = scmp.eq.s32.totalorder %s57, 1
      %p479 = por %p477, %p478
      %p481 = scmp.ne.s32.totalorder %s466, %s480
      %p482 = scmp.eq.s32.totalorder %s57, 0
      %p483 = por %p481, %p482
      %s485 = sadd.s32 %s484, 1
      %p488 = scmp.eq.s32.totalorder %s51, 1
      %p489 = scmp.ne.s32.totalorder %s484, %s486
      %p490 = scmp.eq.s32.totalorder %s51, 0
      %p491 = por %p489, %p490
      %p492 = scmp.ne.s32.totalorder %s484, %s486
      %p493 = scmp.eq.s32.totalorder %s56, 1
      %p494 = por %p492, %p493
      %p495 = scmp.ne.s32.totalorder %s486, %s487
      %p496 = scmp.eq.s32.totalorder %s56, 0
      %p497 = por %p495, %p496
      %p498 = scmp.ne.s32.totalorder %s486, %s487
      %p499 = scmp.eq.s32.totalorder %s57, 1
      %p500 = por %p498, %p499
      %p502 = scmp.ne.s32.totalorder %s487, %s501
      %p503 = scmp.eq.s32.totalorder %s57, 0
      %p504 = por %p502, %p503
      %s506 = sadd.s32 %s505, 1
      %p509 = scmp.eq.s32.totalorder %s51, 1
      %p510 = scmp.ne.s32.totalorder %s505, %s507
      %p511 = scmp.eq.s32.totalorder %s51, 0
      %p512 = por %p510, %p511
      %p513 = scmp.ne.s32.totalorder %s505, %s507
      %p514 = scmp.eq.s32.totalorder %s56, 1
      %p515 = por %p513, %p514
      %p516 = scmp.ne.s32.totalorder %s507, %s508
      %p517 = scmp.eq.s32.totalorder %s56, 0
      %p518 = por %p516, %p517
      %p519 = scmp.ne.s32.totalorder %s507, %s508
      %p520 = scmp.eq.s32.totalorder %s57, 1
      %p521 = por %p519, %p520
      %p523 = scmp.ne.s32.totalorder %s508, %s522
      %p524 = scmp.eq.s32.totalorder %s57, 0
      %p525 = por %p523, %p524
      %s527 = sadd.s32 %s526, 1
      %p530 = scmp.eq.s32.totalorder %s51, 1
      %p531 = scmp.ne.s32.totalorder %s526, %s528
      %p532 = scmp.eq.s32.totalorder %s51, 0
      %p533 = por %p531, %p532
      %p534 = scmp.ne.s32.totalorder %s526, %s528
      %p535 = scmp.eq.s32.totalorder %s56, 1
      %p536 = por %p534, %p535
      %p537 = scmp.ne.s32.totalorder %s528, %s529
      %p538 = scmp.eq.s32.totalorder %s56, 0
      %p539 = por %p537, %p538
      %p540 = scmp.ne.s32.totalorder %s528, %s529
      %p541 = scmp.eq.s32.totalorder %s57, 1
      %p542 = por %p540, %p541
      %p544 = scmp.ne.s32.totalorder %s529, %s543
      %p545 = scmp.eq.s32.totalorder %s57, 0
      %p546 = por %p544, %p545
      %s548 = sadd.s32 %s547, 1
      %p551 = scmp.eq.s32.totalorder %s51, 1
      %p552 = scmp.ne.s32.totalorder %s547, %s549
      %p553 = scmp.eq.s32.totalorder %s51, 0
      %p554 = por %p552, %p553
      %p555 = scmp.ne.s32.totalorder %s547, %s549
      %p556 = scmp.eq.s32.totalorder %s56, 1
      %p557 = por %p555, %p556
      %p558 = scmp.ne.s32.totalorder %s549, %s550
      %p559 = scmp.eq.s32.totalorder %s56, 0
      %p560 = por %p558, %p559
      %p561 = scmp.ne.s32.totalorder %s549, %s550
      %p562 = scmp.eq.s32.totalorder %s57, 1
      %p563 = por %p561, %p562
      %p565 = scmp.ne.s32.totalorder %s550, %s564
      %p566 = scmp.eq.s32.totalorder %s57, 0
      %p567 = por %p565, %p566
      %s569 = sadd.s32 %s568, 1
      %p572 = scmp.eq.s32.totalorder %s51, 1
      %p573 = scmp.ne.s32.totalorder %s568, %s570
      %p574 = scmp.eq.s32.totalorder %s51, 0
      %p575 = por %p573, %p574
      %p576 = scmp.ne.s32.totalorder %s568, %s570
      %p577 = scmp.eq.s32.totalorder %s56, 1
      %p578 = por %p576, %p577
      %p579 = scmp.ne.s32.totalorder %s570, %s571
      %p580 = scmp.eq.s32.totalorder %s56, 0
      %p581 = por %p579, %p580
      %p582 = scmp.ne.s32.totalorder %s570, %s571
      %p583 = scmp.eq.s32.totalorder %s57, 1
      %p584 = por %p582, %p583
      %p586 = scmp.ne.s32.totalorder %s571, %s585
      %p587 = scmp.eq.s32.totalorder %s57, 0
      %p588 = por %p586, %p587
      %s590 = sadd.s32 %s589, 1
      %p593 = scmp.eq.s32.totalorder %s51, 1
      %p594 = scmp.ne.s32.totalorder %s589, %s591
      %p595 = scmp.eq.s32.totalorder %s51, 0
      %p596 = por %p594, %p595
      %p597 = scmp.ne.s32.totalorder %s589, %s591
      %p598 = scmp.eq.s32.totalorder %s56, 1
      %p599 = por %p597, %p598
      %p600 = scmp.ne.s32.totalorder %s591, %s592
      %p601 = scmp.eq.s32.totalorder %s56, 0
      %p602 = por %p600, %p601
      %p603 = scmp.ne.s32.totalorder %s591, %s592
      %p604 = scmp.eq.s32.totalorder %s57, 1
      %p605 = por %p603, %p604
      %p607 = scmp.ne.s32.totalorder %s592, %s606
      %p608 = scmp.eq.s32.totalorder %s57, 0
      %p609 = por %p607, %p608
      %s610 = ssub.s32 %s51, %s58
      %p611 = scmp.eq.s32.totalorder %s610, 0
      %s613 = sadd.s32 %s612, 1
      %s614 = scalar_select %p611, %s612, %s613
      %p617 = pneg %p611
      %p618 = scmp.eq.s32.totalorder %s51, 1
      %p619 = por %p617, %p618
      %p620 = scmp.ne.s32.totalorder %s612, %s615
      %p621 = scmp.eq.s32.totalorder %s51, 0
      %p622 = por %p620, %p621
      %p623 = scmp.ne.s32.totalorder %s612, %s615
      %p624 = scmp.eq.s32.totalorder %s56, 1
      %p625 = por %p623, %p624
      %p626 = scmp.ne.s32.totalorder %s615, %s616
      %p627 = scmp.eq.s32.totalorder %s56, 0
      %p628 = por %p626, %p627
      %p629 = scmp.ne.s32.totalorder %s615, %s616
      %p630 = scmp.eq.s32.totalorder %s57, 1
      %p631 = por %p629, %p630
      %p633 = scmp.ne.s32.totalorder %s616, %s632
      %p634 = scmp.eq.s32.totalorder %s57, 0
      %p635 = por %p633, %p634
      %p636 = scmp.le.s32.totalorder 1, %s51
      %p637 = scmp.lt.s32.totalorder %s51, 3
      %p638 = pnand %p636, %p637
      %p639 = pneg %p638
      // Predicated region
      $region9: #{tpu_custom_call.1} parent=5 // pred_check
        _
      $region10: #{tpu_custom_call.1} parent=5 // pred_check_branch
        %641 = sbr.rel (%p638) target = $region12
      $region11: #{tpu_custom_call.1} parent=5 // pred_region
        %s642 = ssub.s32 %s51, 1
        // Predicated region
        $region13: #{tpu_custom_call.1} parent=11 // pred_check
          %p643 = pneg %p98
        $region14: #{tpu_custom_call.1} parent=11 // pred_check_branch
          %645 = sbr.rel (%p643) target = $region16
        $region15: #{tpu_custom_call.1} parent=11 // pred_region
          %s647 = ssub.s32 64, 64
          %648 = vsyncadd [#allocation6], %s647
          %s650 = sshll.u32 [#allocation5], 4
          %s651 = int_to_ptr.vmem [resolvable:$true] %s650
          %653 = dma.hbm_to_vmem [thread:$0]  %s1, 64, %s651, [#allocation6]
        $region16: #{tpu_custom_call.1} parent=11 // pred_fallthru
          _
        // Predicated region
        $region17: #{tpu_custom_call.1} parent=11 // pred_check
          %p654 = pneg %p119
        $region18: #{tpu_custom_call.1} parent=11 // pred_check_branch
          %656 = sbr.rel (%p654) target = $region20
        $region19: #{tpu_custom_call.1} parent=11 // pred_region
          %s658 = ssub.s32 64, 64
          %659 = vsyncadd [#allocation6], %s658
          %s661 = sshll.u32 [#allocation7], 4
          %s662 = int_to_ptr.vmem [resolvable:$true] %s661
          %664 = dma.hbm_to_vmem [thread:$0]  %s2, 64, %s662, [#allocation6]
        $region20: #{tpu_custom_call.1} parent=11 // pred_fallthru
          _
        // Predicated region
        $region21: #{tpu_custom_call.1} parent=11 // pred_check
          %p665 = pneg %p140
        $region22: #{tpu_custom_call.1} parent=11 // pred_check_branch
          %667 = sbr.rel (%p665) target = $region24
        $region23: #{tpu_custom_call.1} parent=11 // pred_region
          %s669 = ssub.s32 16, 16
          %670 = vsyncadd [#allocation9], %s669
          %s672 = sshll.u32 [#allocation8], 4
          %s673 = int_to_ptr.vmem [resolvable:$true] %s672
          %675 = dma.hbm_to_vmem [thread:$0]  %s3, 16, %s673, [#allocation9]
        $region24: #{tpu_custom_call.1} parent=11 // pred_fallthru
          _
        // Predicated region
        $region25: #{tpu_custom_call.1} parent=11 // pred_check
          %p676 = pneg %p161
        $region26: #{tpu_custom_call.1} parent=11 // pred_check_branch
          %678 = sbr.rel (%p676) target = $region28
        $region27: #{tpu_custom_call.1} parent=11 // pred_region
          %s680 = ssub.s32 512, 512
          %681 = vsyncadd [#allocation9], %s680
          %s682 = sshll.u32 [#allocation10], 4
          %s683 = int_to_ptr.vmem [resolvable:$true] %s682
          %688 = dma.hbm_to_vmem [thread:$0]  %s4, 512, %s683, [#allocation9], 64, 64, 4
        $region28: #{tpu_custom_call.1} parent=11 // pred_fallthru
          _
        // Predicated region
        $region29: #{tpu_custom_call.1} parent=11 // pred_check
          %p689 = pneg %p182
        $region30: #{tpu_custom_call.1} parent=11 // pred_check_branch
          %691 = sbr.rel (%p689) target = $region32
        $region31: #{tpu_custom_call.1} parent=11 // pred_region
          %s693 = ssub.s32 32, 32
          %694 = vsyncadd [#allocation12], %s693
          %s695 = sshll.u32 [#allocation11], 4
          %s696 = int_to_ptr.vmem [resolvable:$true] %s695
          %701 = dma.hbm_to_vmem [thread:$0]  %s5, 32, %s696, [#allocation12], 16, 16, 1
        $region32: #{tpu_custom_call.1} parent=11 // pred_fallthru
          _
        // Predicated region
        $region33: #{tpu_custom_call.1} parent=11 // pred_check
          %p702 = pneg %p203
        $region34: #{tpu_custom_call.1} parent=11 // pred_check_branch
          %704 = sbr.rel (%p702) target = $region36
        $region35: #{tpu_custom_call.1} parent=11 // pred_region
          %s706 = ssub.s32 512, 512
          %707 = vsyncadd [#allocation12], %s706
          %s708 = sshll.u32 [#allocation13], 4
          %s709 = int_to_ptr.vmem [resolvable:$true] %s708
          %714 = dma.hbm_to_vmem [thread:$0]  %s6, 512, %s709, [#allocation12], 64, 64, 4
        $region36: #{tpu_custom_call.1} parent=11 // pred_fallthru
          _
        // Predicated region
        $region37: #{tpu_custom_call.1} parent=11 // pred_check
          %p715 = pneg %p224
        $region38: #{tpu_custom_call.1} parent=11 // pred_check_branch
          %717 = sbr.rel (%p715) target = $region40
        $region39: #{tpu_custom_call.1} parent=11 // pred_region
          %s719 = ssub.s32 32, 32
          %720 = vsyncadd [#allocation15], %s719
          %s721 = sshll.u32 [#allocation14], 4
          %s722 = int_to_ptr.vmem [resolvable:$true] %s721
          %727 = dma.hbm_to_vmem [thread:$0]  %s7, 32, %s722, [#allocation15], 16, 16, 1
        $region40: #{tpu_custom_call.1} parent=11 // pred_fallthru
          _
        // Predicated region
        $region41: #{tpu_custom_call.1} parent=11 // pred_check
          %p728 = pneg %p245
        $region42: #{tpu_custom_call.1} parent=11 // pred_check_branch
          %730 = sbr.rel (%p728) target = $region44
        $region43: #{tpu_custom_call.1} parent=11 // pred_region
          %s732 = ssub.s32 512, 512
          %733 = vsyncadd [#allocation15], %s732
          %s734 = sshll.u32 [#allocation16], 4
          %s735 = int_to_ptr.vmem [resolvable:$true] %s734
          %740 = dma.hbm_to_vmem [thread:$0]  %s8, 512, %s735, [#allocation15], 64, 64, 4
        $region44: #{tpu_custom_call.1} parent=11 // pred_fallthru
          _
        // Predicated region
        $region45: #{tpu_custom_call.1} parent=11 // pred_check
          %p741 = pneg %p266
        $region46: #{tpu_custom_call.1} parent=11 // pred_check_branch
          %743 = sbr.rel (%p741) target = $region48
        $region47: #{tpu_custom_call.1} parent=11 // pred_region
          %s745 = ssub.s32 32, 32
          %746 = vsyncadd [#allocation18], %s745
          %s747 = sshll.u32 [#allocation17], 4
          %s748 = int_to_ptr.vmem [resolvable:$true] %s747
          %753 = dma.hbm_to_vmem [thread:$0]  %s9, 32, %s748, [#allocation18], 16, 16, 1
        $region48: #{tpu_custom_call.1} parent=11 // pred_fallthru
          _
        // Predicated region
        $region49: #{tpu_custom_call.1} parent=11 // pred_check
          %p754 = pneg %p287
        $region50: #{tpu_custom_call.1} parent=11 // pred_check_branch
          %756 = sbr.rel (%p754) target = $region52
        $region51: #{tpu_custom_call.1} parent=11 // pred_region
          %s758 = ssub.s32 1024, 1024
          %759 = vsyncadd [#allocation18], %s758
          %s760 = sshll.u32 [#allocation19], 4
          %s761 = int_to_ptr.vmem [resolvable:$true] %s760
          %766 = dma.hbm_to_vmem [thread:$0]  %s10, 1024, %s761, [#allocation18], 64, 64, 4
        $region52: #{tpu_custom_call.1} parent=11 // pred_fallthru
          _
        // Predicated region
        $region53: #{tpu_custom_call.1} parent=11 // pred_check
          %p767 = pneg %p308
        $region54: #{tpu_custom_call.1} parent=11 // pred_check_branch
          %769 = sbr.rel (%p767) target = $region56
        $region55: #{tpu_custom_call.1} parent=11 // pred_region
          %s771 = ssub.s32 32, 32
          %772 = vsyncadd [#allocation21], %s771
          %s773 = sshll.u32 [#allocation20], 4
          %s774 = int_to_ptr.vmem [resolvable:$true] %s773
          %779 = dma.hbm_to_vmem [thread:$0]  %s11, 32, %s774, [#allocation21], 16, 16, 1
        $region56: #{tpu_custom_call.1} parent=11 // pred_fallthru
          _
        // Predicated region
        $region57: #{tpu_custom_call.1} parent=11 // pred_check
          %p780 = pneg %p329
        $region58: #{tpu_custom_call.1} parent=11 // pred_check_branch
          %782 = sbr.rel (%p780) target = $region60
        $region59: #{tpu_custom_call.1} parent=11 // pred_region
          %s784 = ssub.s32 32, 32
          %785 = vsyncadd [#allocation21], %s784
          %s786 = sshll.u32 [#allocation22], 4
          %s787 = int_to_ptr.vmem [resolvable:$true] %s786
          %792 = dma.hbm_to_vmem [thread:$0]  %s12, 32, %s787, [#allocation21], 16, 16, 1
        $region60: #{tpu_custom_call.1} parent=11 // pred_fallthru
          _
        // Predicated region
        $region61: #{tpu_custom_call.1} parent=11 // pred_check
          %p793 = pneg %p350
        $region62: #{tpu_custom_call.1} parent=11 // pred_check_branch
          %795 = sbr.rel (%p793) target = $region64
        $region63: #{tpu_custom_call.1} parent=11 // pred_region
          %s797 = ssub.s32 32, 32
          %798 = vsyncadd [#allocation24], %s797
          %s799 = sshll.u32 [#allocation23], 4
          %s800 = int_to_ptr.vmem [resolvable:$true] %s799
          %805 = dma.hbm_to_vmem [thread:$0]  %s13, 32, %s800, [#allocation24], 16, 16, 1
        $region64: #{tpu_custom_call.1} parent=11 // pred_fallthru
          _
        // Predicated region
        $region65: #{tpu_custom_call.1} parent=11 // pred_check
          %p806 = pneg %p371
        $region66: #{tpu_custom_call.1} parent=11 // pred_check_branch
          %808 = sbr.rel (%p806) target = $region68
        $region67: #{tpu_custom_call.1} parent=11 // pred_region
          %s810 = ssub.s32 32, 32
          %811 = vsyncadd [#allocation24], %s810
          %s812 = sshll.u32 [#allocation25], 4
          %s813 = int_to_ptr.vmem [resolvable:$true] %s812
          %818 = dma.hbm_to_vmem [thread:$0]  %s14, 32, %s813, [#allocation24], 16, 16, 1
        $region68: #{tpu_custom_call.1} parent=11 // pred_fallthru
          _
        // Predicated region
        $region69: #{tpu_custom_call.1} parent=11 // pred_check
          %p819 = pneg %p392
        $region70: #{tpu_custom_call.1} parent=11 // pred_check_branch
          %821 = sbr.rel (%p819) target = $region72
        $region71: #{tpu_custom_call.1} parent=11 // pred_region
          %s823 = ssub.s32 32, 32
          %824 = vsyncadd [#allocation27], %s823
          %s825 = sshll.u32 [#allocation26], 4
          %s826 = int_to_ptr.vmem [resolvable:$true] %s825
          %831 = dma.hbm_to_vmem [thread:$0]  %s15, 32, %s826, [#allocation27], 16, 16, 1
        $region72: #{tpu_custom_call.1} parent=11 // pred_fallthru
          _
        // Predicated region
        $region73: #{tpu_custom_call.1} parent=11 // pred_check
          %p832 = pneg %p413
        $region74: #{tpu_custom_call.1} parent=11 // pred_check_branch
          %834 = sbr.rel (%p832) target = $region76
        $region75: #{tpu_custom_call.1} parent=11 // pred_region
          %s836 = ssub.s32 256, 256
          %837 = vsyncadd [#allocation27], %s836
          %s838 = sshll.u32 [#allocation28], 4
          %s839 = int_to_ptr.vmem [resolvable:$true] %s838
          %844 = dma.hbm_to_vmem [thread:$0]  %s16, 256, %s839, [#allocation27], 64, 64, 4
        $region76: #{tpu_custom_call.1} parent=11 // pred_fallthru
          _
        // Predicated region
        $region77: #{tpu_custom_call.1} parent=11 // pred_check
          %p845 = pneg %p434
        $region78: #{tpu_custom_call.1} parent=11 // pred_check_branch
          %847 = sbr.rel (%p845) target = $region80
        $region79: #{tpu_custom_call.1} parent=11 // pred_region
          %s849 = ssub.s32 16, 16
          %850 = vsyncadd [#allocation30], %s849
          %s852 = sshll.u32 [#allocation29], 4
          %s853 = int_to_ptr.vmem [resolvable:$true] %s852
          %855 = dma.hbm_to_vmem [thread:$0]  %s17, 16, %s853, [#allocation30]
        $region80: #{tpu_custom_call.1} parent=11 // pred_fallthru
          _
        // Predicated region
        $region81: #{tpu_custom_call.1} parent=11 // pred_check
          %p856 = pneg %p455
        $region82: #{tpu_custom_call.1} parent=11 // pred_check_branch
          %858 = sbr.rel (%p856) target = $region84
        $region83: #{tpu_custom_call.1} parent=11 // pred_region
          %s860 = ssub.s32 256, 256
          %861 = vsyncadd [#allocation30], %s860
          %s862 = sshll.u32 [#allocation31], 4
          %s863 = int_to_ptr.vmem [resolvable:$true] %s862
          %868 = dma.hbm_to_vmem [thread:$0]  %s18, 256, %s863, [#allocation30], 64, 64, 4
        $region84: #{tpu_custom_call.1} parent=11 // pred_fallthru
          _
        // Predicated region
        $region85: #{tpu_custom_call.1} parent=11 // pred_check
          %p869 = pneg %p476
        $region86: #{tpu_custom_call.1} parent=11 // pred_check_branch
          %871 = sbr.rel (%p869) target = $region88
        $region87: #{tpu_custom_call.1} parent=11 // pred_region
          %s873 = ssub.s32 16, 16
          %874 = vsyncadd [#allocation33], %s873
          %s876 = sshll.u32 [#allocation32], 4
          %s877 = int_to_ptr.vmem [resolvable:$true] %s876
          %879 = dma.hbm_to_vmem [thread:$0]  %s19, 16, %s877, [#allocation33]
        $region88: #{tpu_custom_call.1} parent=11 // pred_fallthru
          _
        // Predicated region
        $region89: #{tpu_custom_call.1} parent=11 // pred_check
          %p880 = pneg %p497
        $region90: #{tpu_custom_call.1} parent=11 // pred_check_branch
          %882 = sbr.rel (%p880) target = $region92
        $region91: #{tpu_custom_call.1} parent=11 // pred_region
          %s884 = ssub.s32 16, 16
          %885 = vsyncadd [#allocation33], %s884
          %s887 = sshll.u32 [#allocation34], 4
          %s888 = int_to_ptr.vmem [resolvable:$true] %s887
          %890 = dma.hbm_to_vmem [thread:$0]  %s20, 16, %s888, [#allocation33]
        $region92: #{tpu_custom_call.1} parent=11 // pred_fallthru
          _
        // Predicated region
        $region93: #{tpu_custom_call.1} parent=11 // pred_check
          %p891 = pneg %p518
        $region94: #{tpu_custom_call.1} parent=11 // pred_check_branch
          %893 = sbr.rel (%p891) target = $region96
        $region95: #{tpu_custom_call.1} parent=11 // pred_region
          %s895 = ssub.s32 16, 16
          %896 = vsyncadd [#allocation36], %s895
          %s898 = sshll.u32 [#allocation35], 4
          %s899 = int_to_ptr.vmem [resolvable:$true] %s898
          %901 = dma.hbm_to_vmem [thread:$0]  %s21, 16, %s899, [#allocation36]
        $region96: #{tpu_custom_call.1} parent=11 // pred_fallthru
          _
        // Predicated region
        $region97: #{tpu_custom_call.1} parent=11 // pred_check
          %p902 = pneg %p539
        $region98: #{tpu_custom_call.1} parent=11 // pred_check_branch
          %904 = sbr.rel (%p902) target = $region100
        $region99: #{tpu_custom_call.1} parent=11 // pred_region
          %s906 = ssub.s32 256, 256
          %907 = vsyncadd [#allocation36], %s906
          %s908 = sshll.u32 [#allocation37], 4
          %s909 = int_to_ptr.vmem [resolvable:$true] %s908
          %914 = dma.hbm_to_vmem [thread:$0]  %s22, 256, %s909, [#allocation36], 64, 64, 4
        $region100: #{tpu_custom_call.1} parent=11 // pred_fallthru
          _
        // Predicated region
        $region101: #{tpu_custom_call.1} parent=11 // pred_check
          %p915 = pneg %p560
        $region102: #{tpu_custom_call.1} parent=11 // pred_check_branch
          %917 = sbr.rel (%p915) target = $region104
        $region103: #{tpu_custom_call.1} parent=11 // pred_region
          %s919 = ssub.s32 16, 16
          %920 = vsyncadd [#allocation39], %s919
          %s922 = sshll.u32 [#allocation38], 4
          %s923 = int_to_ptr.vmem [resolvable:$true] %s922
          %925 = dma.hbm_to_vmem [thread:$0]  %s23, 16, %s923, [#allocation39]
        $region104: #{tpu_custom_call.1} parent=11 // pred_fallthru
          _
        // Predicated region
        $region105: #{tpu_custom_call.1} parent=11 // pred_check
          %p926 = pneg %p581
        $region106: #{tpu_custom_call.1} parent=11 // pred_check_branch
          %928 = sbr.rel (%p926) target = $region108
        $region107: #{tpu_custom_call.1} parent=11 // pred_region
          %s930 = ssub.s32 128, 128
          %931 = vsyncadd [#allocation39], %s930
          %s932 = sshll.u32 [#allocation40], 4
          %s933 = int_to_ptr.vmem [resolvable:$true] %s932
          %938 = dma.hbm_to_vmem [thread:$0]  %s24, 128, %s933, [#allocation39], 64, 64, 4
        $region108: #{tpu_custom_call.1} parent=11 // pred_fallthru
          _
        // Predicated region
        $region109: #{tpu_custom_call.1} parent=11 // pred_check
          %p939 = pneg %p602
        $region110: #{tpu_custom_call.1} parent=11 // pred_check_branch
          %941 = sbr.rel (%p939) target = $region112
        $region111: #{tpu_custom_call.1} parent=11 // pred_region
          %s943 = ssub.s32 16, 16
          %944 = vsyncadd [#allocation42], %s943
          %s946 = sshll.u32 [#allocation41], 4
          %s947 = int_to_ptr.vmem [resolvable:$true] %s946
          %949 = dma.hbm_to_vmem [thread:$0]  %s25, 16, %s947, [#allocation42]
        $region112: #{tpu_custom_call.1} parent=11 // pred_fallthru
          _
      $region12: #{tpu_custom_call.1} parent=5 // pred_fallthru
        _
      %p950 = scmp.lt.s32.totalorder %s51, 2
      // Predicated region
      $region113: #{tpu_custom_call.1} parent=5 // pred_check
        %p951 = pneg %p950
      $region114: #{tpu_custom_call.1} parent=5 // pred_check_branch
        %953 = sbr.rel (%p951) target = $region116
      $region115: #{tpu_custom_call.1} parent=5 // pred_region
        // Predicated region
        $region117: #{tpu_custom_call.1} parent=115 // pred_check
          %p954 = pneg %p71
        $region118: #{tpu_custom_call.1} parent=115 // pred_check_branch
          %956 = sbr.rel (%p954) target = $region120
        $region119: #{tpu_custom_call.1} parent=115 // pred_region
          %s957 = sand.u32 %s61, 1
          %s958 = scalar_lea.sflag [#allocation3], %s957
          %s959 = sand.u32 %s61, 1
          %s960 = smul.addr %s959, 8
          %s961 = scalar_lea.vmem [#allocation2], %s960
          %s963 = ssub.s32 128, 128
          %964 = vsyncadd %s958, %s963
          %s965 = smul.addr %s51, 2
          %s966 = smul.addr %s965, 64
          %s967 = scalar_lea.hbm %s0, %s966
          %s968 = sshll.u32 %s961, 4
          %s969 = int_to_ptr.vmem [resolvable:$true] %s968
          %974 = dma.hbm_to_vmem [thread:$0]  %s967, 128, %s969, %s958, 64, 64, 4
        $region120: #{tpu_custom_call.1} parent=115 // pred_fallthru
          _
      $region116: #{tpu_custom_call.1} parent=5 // pred_fallthru
        _
      %p975 = scmp.le.s32.totalorder 1, %s51
      %p976 = scmp.lt.s32.totalorder %s51, 3
      %p977 = pnand %p975, %p976
      %p978 = pneg %p977
      // Predicated region
      $region121: #{tpu_custom_call.1} parent=5 // pred_check
        _
      $region122: #{tpu_custom_call.1} parent=5 // pred_check_branch
        %980 = sbr.rel (%p977) target = $region124
      $region123: #{tpu_custom_call.1} parent=5 // pred_region
        %s981 = ssub.s32 %s51, 1
        %s982 = sand.u32 %s64, 1
        %s983 = scalar_lea.sflag [#allocation3], %s982
        %s984 = sand.u32 %s64, 1
        %s985 = smul.addr %s984, 8
        %s986 = scalar_lea.vmem [#allocation2], %s985
        // Predicated region
        $region125: #{tpu_custom_call.1} parent=123 // pred_check
          %p987 = pneg %p77
        $region126: #{tpu_custom_call.1} parent=123 // pred_check_branch
          %989 = sbr.rel (%p987) target = $region128
        $region127: #{tpu_custom_call.1} parent=123 // pred_region
          %990 = dma.done %s983, 128
        $region128: #{tpu_custom_call.1} parent=123 // pred_fallthru
          _
        // Predicated region
        $region129: #{tpu_custom_call.1} parent=123 // pred_check
          %p991 = pneg %p98
        $region130: #{tpu_custom_call.1} parent=123 // pred_check_branch
          %993 = sbr.rel (%p991) target = $region132
        $region131: #{tpu_custom_call.1} parent=123 // pred_region
          %994 = dma.done [#allocation6], 64
        $region132: #{tpu_custom_call.1} parent=123 // pred_fallthru
          _
        // Predicated region
        $region133: #{tpu_custom_call.1} parent=123 // pred_check
          %p995 = pneg %p119
        $region134: #{tpu_custom_call.1} parent=123 // pred_check_branch
          %997 = sbr.rel (%p995) target = $region136
        $region135: #{tpu_custom_call.1} parent=123 // pred_region
          %998 = dma.done [#allocation6], 64
        $region136: #{tpu_custom_call.1} parent=123 // pred_fallthru
          _
        // Predicated region
        $region137: #{tpu_custom_call.1} parent=123 // pred_check
          %p999 = pneg %p140
        $region138: #{tpu_custom_call.1} parent=123 // pred_check_branch
          %1001 = sbr.rel (%p999) target = $region140
        $region139: #{tpu_custom_call.1} parent=123 // pred_region
          %1002 = dma.done [#allocation9], 16
        $region140: #{tpu_custom_call.1} parent=123 // pred_fallthru
          _
        // Predicated region
        $region141: #{tpu_custom_call.1} parent=123 // pred_check
          %p1003 = pneg %p161
        $region142: #{tpu_custom_call.1} parent=123 // pred_check_branch
          %1005 = sbr.rel (%p1003) target = $region144
        $region143: #{tpu_custom_call.1} parent=123 // pred_region
          %1006 = dma.done [#allocation9], 512
        $region144: #{tpu_custom_call.1} parent=123 // pred_fallthru
          _
        // Predicated region
        $region145: #{tpu_custom_call.1} parent=123 // pred_check
          %p1007 = pneg %p182
        $region146: #{tpu_custom_call.1} parent=123 // pred_check_branch
          %1009 = sbr.rel (%p1007) target = $region148
        $region147: #{tpu_custom_call.1} parent=123 // pred_region
          %1010 = dma.done [#allocation12], 32
        $region148: #{tpu_custom_call.1} parent=123 // pred_fallthru
          _
        // Predicated region
        $region149: #{tpu_custom_call.1} parent=123 // pred_check
          %p1011 = pneg %p203
        $region150: #{tpu_custom_call.1} parent=123 // pred_check_branch
          %1013 = sbr.rel (%p1011) target = $region152
        $region151: #{tpu_custom_call.1} parent=123 // pred_region
          %1014 = dma.done [#allocation12], 512
        $region152: #{tpu_custom_call.1} parent=123 // pred_fallthru
          _
        // Predicated region
        $region153: #{tpu_custom_call.1} parent=123 // pred_check
          %p1015 = pneg %p224
        $region154: #{tpu_custom_call.1} parent=123 // pred_check_branch
          %1017 = sbr.rel (%p1015) target = $region156
        $region155: #{tpu_custom_call.1} parent=123 // pred_region
          %1018 = dma.done [#allocation15], 32
        $region156: #{tpu_custom_call.1} parent=123 // pred_fallthru
          _
        // Predicated region
        $region157: #{tpu_custom_call.1} parent=123 // pred_check
          %p1019 = pneg %p245
        $region158: #{tpu_custom_call.1} parent=123 // pred_check_branch
          %1021 = sbr.rel (%p1019) target = $region160
        $region159: #{tpu_custom_call.1} parent=123 // pred_region
          %1022 = dma.done [#allocation15], 512
        $region160: #{tpu_custom_call.1} parent=123 // pred_fallthru
          _
        // Predicated region
        $region161: #{tpu_custom_call.1} parent=123 // pred_check
          %p1023 = pneg %p266
        $region162: #{tpu_custom_call.1} parent=123 // pred_check_branch
          %1025 = sbr.rel (%p1023) target = $region164
        $region163: #{tpu_custom_call.1} parent=123 // pred_region
          %1026 = dma.done [#allocation18], 32
        $region164: #{tpu_custom_call.1} parent=123 // pred_fallthru
          _
        // Predicated region
        $region165: #{tpu_custom_call.1} parent=123 // pred_check
          %p1027 = pneg %p287
        $region166: #{tpu_custom_call.1} parent=123 // pred_check_branch
          %1029 = sbr.rel (%p1027) target = $region168
        $region167: #{tpu_custom_call.1} parent=123 // pred_region
          %1030 = dma.done [#allocation18], 1024
        $region168: #{tpu_custom_call.1} parent=123 // pred_fallthru
          _
        // Predicated region
        $region169: #{tpu_custom_call.1} parent=123 // pred_check
          %p1031 = pneg %p308
        $region170: #{tpu_custom_call.1} parent=123 // pred_check_branch
          %1033 = sbr.rel (%p1031) target = $region172
        $region171: #{tpu_custom_call.1} parent=123 // pred_region
          %1034 = dma.done [#allocation21], 32
        $region172: #{tpu_custom_call.1} parent=123 // pred_fallthru
          _
        // Predicated region
        $region173: #{tpu_custom_call.1} parent=123 // pred_check
          %p1035 = pneg %p329
        $region174: #{tpu_custom_call.1} parent=123 // pred_check_branch
          %1037 = sbr.rel (%p1035) target = $region176
        $region175: #{tpu_custom_call.1} parent=123 // pred_region
          %1038 = dma.done [#allocation21], 32
        $region176: #{tpu_custom_call.1} parent=123 // pred_fallthru
          _
        // Predicated region
        $region177: #{tpu_custom_call.1} parent=123 // pred_check
          %p1039 = pneg %p350
        $region178: #{tpu_custom_call.1} parent=123 // pred_check_branch
          %1041 = sbr.rel (%p1039) target = $region180
        $region179: #{tpu_custom_call.1} parent=123 // pred_region
          %1042 = dma.done [#allocation24], 32
        $region180: #{tpu_custom_call.1} parent=123 // pred_fallthru
          _
        // Predicated region
        $region181: #{tpu_custom_call.1} parent=123 // pred_check
          %p1043 = pneg %p371
        $region182: #{tpu_custom_call.1} parent=123 // pred_check_branch
          %1045 = sbr.rel (%p1043) target = $region184
        $region183: #{tpu_custom_call.1} parent=123 // pred_region
          %1046 = dma.done [#allocation24], 32
        $region184: #{tpu_custom_call.1} parent=123 // pred_fallthru
          _
        // Predicated region
        $region185: #{tpu_custom_call.1} parent=123 // pred_check
          %p1047 = pneg %p392
        $region186: #{tpu_custom_call.1} parent=123 // pred_check_branch
          %1049 = sbr.rel (%p1047) target = $region188
        $region187: #{tpu_custom_call.1} parent=123 // pred_region
          %1050 = dma.done [#allocation27], 32
        $region188: #{tpu_custom_call.1} parent=123 // pred_fallthru
          _
        // Predicated region
        $region189: #{tpu_custom_call.1} parent=123 // pred_check
          %p1051 = pneg %p413
        $region190: #{tpu_custom_call.1} parent=123 // pred_check_branch
          %1053 = sbr.rel (%p1051) target = $region192
        $region191: #{tpu_custom_call.1} parent=123 // pred_region
          %1054 = dma.done [#allocation27], 256
        $region192: #{tpu_custom_call.1} parent=123 // pred_fallthru
          _
        // Predicated region
        $region193: #{tpu_custom_call.1} parent=123 // pred_check
          %p1055 = pneg %p434
        $region194: #{tpu_custom_call.1} parent=123 // pred_check_branch
          %1057 = sbr.rel (%p1055) target = $region196
        $region195: #{tpu_custom_call.1} parent=123 // pred_region
          %1058 = dma.done [#allocation30], 16
        $region196: #{tpu_custom_call.1} parent=123 // pred_fallthru
          _
        // Predicated region
        $region197: #{tpu_custom_call.1} parent=123 // pred_check
          %p1059 = pneg %p455
        $region198: #{tpu_custom_call.1} parent=123 // pred_check_branch
          %1061 = sbr.rel (%p1059) target = $region200
        $region199: #{tpu_custom_call.1} parent=123 // pred_region
          %1062 = dma.done [#allocation30], 256
        $region200: #{tpu_custom_call.1} parent=123 // pred_fallthru
          _
        // Predicated region
        $region201: #{tpu_custom_call.1} parent=123 // pred_check
          %p1063 = pneg %p476
        $region202: #{tpu_custom_call.1} parent=123 // pred_check_branch
          %1065 = sbr.rel (%p1063) target = $region204
        $region203: #{tpu_custom_call.1} parent=123 // pred_region
          %1066 = dma.done [#allocation33], 16
        $region204: #{tpu_custom_call.1} parent=123 // pred_fallthru
          _
        // Predicated region
        $region205: #{tpu_custom_call.1} parent=123 // pred_check
          %p1067 = pneg %p497
        $region206: #{tpu_custom_call.1} parent=123 // pred_check_branch
          %1069 = sbr.rel (%p1067) target = $region208
        $region207: #{tpu_custom_call.1} parent=123 // pred_region
          %1070 = dma.done [#allocation33], 16
        $region208: #{tpu_custom_call.1} parent=123 // pred_fallthru
          _
        // Predicated region
        $region209: #{tpu_custom_call.1} parent=123 // pred_check
          %p1071 = pneg %p518
        $region210: #{tpu_custom_call.1} parent=123 // pred_check_branch
          %1073 = sbr.rel (%p1071) target = $region212
        $region211: #{tpu_custom_call.1} parent=123 // pred_region
          %1074 = dma.done [#allocation36], 16
        $region212: #{tpu_custom_call.1} parent=123 // pred_fallthru
          _
        // Predicated region
        $region213: #{tpu_custom_call.1} parent=123 // pred_check
          %p1075 = pneg %p539
        $region214: #{tpu_custom_call.1} parent=123 // pred_check_branch
          %1077 = sbr.rel (%p1075) target = $region216
        $region215: #{tpu_custom_call.1} parent=123 // pred_region
          %1078 = dma.done [#allocation36], 256
        $region216: #{tpu_custom_call.1} parent=123 // pred_fallthru
          _
        // Predicated region
        $region217: #{tpu_custom_call.1} parent=123 // pred_check
          %p1079 = pneg %p560
        $region218: #{tpu_custom_call.1} parent=123 // pred_check_branch
          %1081 = sbr.rel (%p1079) target = $region220
        $region219: #{tpu_custom_call.1} parent=123 // pred_region
          %1082 = dma.done [#allocation39], 16
        $region220: #{tpu_custom_call.1} parent=123 // pred_fallthru
          _
        // Predicated region
        $region221: #{tpu_custom_call.1} parent=123 // pred_check
          %p1083 = pneg %p581
        $region222: #{tpu_custom_call.1} parent=123 // pred_check_branch
          %1085 = sbr.rel (%p1083) target = $region224
        $region223: #{tpu_custom_call.1} parent=123 // pred_region
          %1086 = dma.done [#allocation39], 128
        $region224: #{tpu_custom_call.1} parent=123 // pred_fallthru
          _
        // Predicated region
        $region225: #{tpu_custom_call.1} parent=123 // pred_check
          %p1087 = pneg %p602
        $region226: #{tpu_custom_call.1} parent=123 // pred_check_branch
          %1089 = sbr.rel (%p1087) target = $region228
        $region227: #{tpu_custom_call.1} parent=123 // pred_region
          %1090 = dma.done [#allocation42], 16
        $region228: #{tpu_custom_call.1} parent=123 // pred_fallthru
          _
        %s1091 = sand.u32 %s64, 1
        %s1092 = scalar_lea.sflag [#allocation3], %s1091
        %s1093 = sand.u32 %s64, 1
        %s1094 = smul.addr %s1093, 8
        %s1095 = scalar_lea.vmem [#allocation2], %s1094
        %p1096 = pneg %p77
        %p1097 = pneg %p74
        %p1098 = pneg %p98
        %p1099 = pneg %p95
        %p1100 = pneg %p119
        %p1101 = pneg %p116
        %p1102 = pneg %p140
        %p1103 = pneg %p137
        %p1104 = pneg %p161
        %p1105 = pneg %p158
        %p1106 = pneg %p182
        %p1107 = pneg %p179
        %p1108 = pneg %p203
        %p1109 = pneg %p200
        %p1110 = pneg %p224
        %p1111 = pneg %p221
        %p1112 = pneg %p245
        %p1113 = pneg %p242
        %p1114 = pneg %p266
        %p1115 = pneg %p263
        %p1116 = pneg %p287
        %p1117 = pneg %p284
        %p1118 = pneg %p308
        %p1119 = pneg %p305
        %p1120 = pneg %p329
        %p1121 = pneg %p326
        %p1122 = pneg %p350
        %p1123 = pneg %p347
        %p1124 = pneg %p371
        %p1125 = pneg %p368
        %p1126 = pneg %p392
        %p1127 = pneg %p389
        %p1128 = pneg %p413
        %p1129 = pneg %p410
        %p1130 = pneg %p434
        %p1131 = pneg %p431
        %p1132 = pneg %p455
        %p1133 = pneg %p452
        %p1134 = pneg %p476
        %p1135 = pneg %p473
        %p1136 = pneg %p497
        %p1137 = pneg %p494
        %p1138 = pneg %p518
        %p1139 = pneg %p515
        %p1140 = pneg %p539
        %p1141 = pneg %p536
        %p1142 = pneg %p560
        %p1143 = pneg %p557
        %p1144 = pneg %p581
        %p1145 = pneg %p578
        %p1146 = pneg %p602
        %p1147 = pneg %p599
        %p1148 = pneg %p628
        %p1149 = pneg %p625
        %s1150 = sand.u32 %s615, 1
        %s1151 = scalar_lea.sflag [#allocation4], %s1150
        %s1152 = sand.u32 %s615, 1
        %s1153 = scalar_lea.vmem [#allocation43], %s1152
        %v1155 = vld [vmem:[%s986] sm:$0xf]
        %v1156 = vld [vmem:[%s986 + $0x4] sm:$0xf]
        %v1157 = vld [vmem:[#allocation7] sm:$0xf]
        %v1158 = vld [vmem:[#allocation8] sm:$0x1]
        %v1160 = vlaneseq
        %v1161 = vshrl.u32 %v1160, 7
        %v1162 = vsub.s32 0, %v1161
        %v1163 = vrot.slane %v1158, %v1162
        %v1167 = vunpack.c.l.b16 %v1155
        %v1168 = vunpack.c.l.b16 %v1156
        %v1169 = vpack.c.b16 %v1168, %v1167
        %vm1170 = vcmask 64512
        %v1172 = vsel %vm1170, %v1169, 0
        %vm1174 = vcmask 1043456
        %v1176 = vsel %vm1174, %v1157, 0
        %1178 = vmatprep.subr.bf16.mxu0 0
        %1179 = vmatpush1.bf16.msra.mxu0 %v1176
        %1180 = vmatprep.subr.bf16.mxu0 0
        %1181 = vmatpush1.bf16.msra.mxu0 0
        %1182 = vmatprep.subr.bf16.mxu0 0
        %1183 = vmatpush1.bf16.msra.mxu0 0
        %1184 = vmatprep.subr.bf16.mxu0 0
        %1185 = vmatpush1.bf16.msra.mxu0 0
        %1186 = vmatprep.subr.bf16.mxu0 0
        %1187 = vmatpush1.bf16.msra.mxu0 0
        %1188 = vmatprep.subr.bf16.mxu0 0
        %1189 = vmatpush1.bf16.msra.mxu0 0
        %1190 = vmatprep.subr.bf16.mxu0 0
        %1191 = vmatpush1.bf16.msra.mxu0 0
        %1192 = vmatprep.subr.bf16.mxu0 0
        %1193 = vmatpush1.bf16.msra.mxu0 0
        %1194 = vmatprep.subr.bf16.mxu0 0
        %1195 = vmatpush1.bf16.msra.mxu0 0
        %1196 = vmatprep.subr.bf16.mxu0 0
        %1197 = vmatpush1.bf16.msra.mxu0 0
        %1198 = vmatprep.subr.bf16.mxu0 0
        %1199 = vmatpush1.bf16.msra.mxu0 0
        %1200 = vmatprep.subr.bf16.mxu0 0
        %1201 = vmatpush1.bf16.msra.mxu0 0
        %1202 = vmatprep.subr.bf16.mxu0 0
        %1203 = vmatpush1.bf16.msra.mxu0 0
        %1204 = vmatprep.subr.bf16.mxu0 0
        %1205 = vmatpush1.bf16.msra.mxu0 0
        %1206 = vmatprep.subr.bf16.mxu0 0
        %1207 = vmatpush1.bf16.msra.mxu0 0
        %1208 = vmatprep.subr.bf16.mxu0 0
        %1209 = vmatpush1.bf16.msra.mxu0 0
        %1210 = vmatprep.mubr.bf16.mxu0 0
        %1211 = vmatmul.mubr.bf16.gmra.mrb[0].mxu0 %v1172
        %v1212 = vpop.f32.mrb[0].mxu0
        %v1213 = vadd.f32 %v1163, %v1212
        %v1214 = vpop.f32.mrb[0].mxu0
        %v1215 = vpop.f32.mrb[0].mxu0
        %v1216 = vadd.f32 %v1163, %v1215
        %v1217 = vpop.f32.mrb[0].mxu0
        %1218 = vdwg.mxu0
        loop: start=0, step=1, limit=2
        $region229: #{tpu_custom_call.1} parent=123 // loop_pre_header
          _
        $region230: #{tpu_custom_call.1} parent=123 // loop_header
          %s1220 = sphi 0, %s1224
          %p1221 = scmp.ge.s32.totalorder %s1220, 2
          %v1225 = vphi %v1213, %v2160
          %v1226 = vphi %v1216, %v2161
        $region231: #{tpu_custom_call.1} parent=123 // loop_header_branch
          %1223 = sbr.rel (%p1221) target = $region235
        $region232: #{tpu_custom_call.1} parent=123 // loop_body
          %s1227 = smul.u32 %s1220, 4
          %s1228 = smul.addr %s1227, 4
          %s1229 = scalar_lea.vmem [#allocation10], %s1228
          %v1230 = vld [vmem:[%s1229] sm:$0xf]
          %v1231 = vld [vmem:[%s1229 + $0x4] sm:$0xf]
          %v1232 = vld [vmem:[%s1229 + $0x8] sm:$0xf]
          %v1233 = vld [vmem:[%s1229 + $0xc] sm:$0xf]
          %s1234 = scalar_lea.vmem [#allocation11], %s1220
          %v1235 = vld [vmem:[%s1234] sm:$0x1]
          %s1236 = smul.addr %s1227, 4
          %s1237 = scalar_lea.vmem [#allocation13], %s1236
          %v1238 = vld [vmem:[%s1237] sm:$0xf]
          %v1239 = vld [vmem:[%s1237 + $0x4] sm:$0xf]
          %v1240 = vld [vmem:[%s1237 + $0x8] sm:$0xf]
          %v1241 = vld [vmem:[%s1237 + $0xc] sm:$0xf]
          %s1242 = scalar_lea.vmem [#allocation14], %s1220
          %v1243 = vld [vmem:[%s1242] sm:$0x1]
          %v1244 = vpack.c.bf16 %v1226, %v1225
          %v1246 = vlaneseq
          %v1247 = vshrl.u32 %v1246, 7
          %v1248 = vsub.s32 0, %v1247
          %v1249 = vrot.slane %v1235, %v1248
          %v1255 = vunpack.c.l.b16 %v1230
          %v1256 = vunpack.c.l.b16 %v1231
          %v1257 = vunpack.c.l.b16 %v1232
          %v1258 = vunpack.c.l.b16 %v1233
          %v1259 = vpack.c.b16 %v1256, %v1255
          %v1260 = vpack.c.b16 %v1258, %v1257
          %vm1263 = vcmask 261120
          %v1265 = vsel %vm1263, %v1244, 0
          %1267 = vmatprep.subr.bf16.mxu0 0
          %1268 = vmatpush1.bf16.msra.mxu0 %v1259
          %1269 = vmatprep.subr.bf16.mxu0 0
          %1270 = vmatpush1.bf16.msra.mxu0 %v1260
          %1271 = vmatprep.subr.bf16.mxu0 0
          %1272 = vmatpush1.bf16.msra.mxu0 0
          %1273 = vmatprep.subr.bf16.mxu0 0
          %1274 = vmatpush1.bf16.msra.mxu0 0
          %1275 = vmatprep.subr.bf16.mxu0 0
          %1276 = vmatpush1.bf16.msra.mxu0 0
          %1277 = vmatprep.subr.bf16.mxu0 0
          %1278 = vmatpush1.bf16.msra.mxu0 0
          %1279 = vmatprep.subr.bf16.mxu0 0
          %1280 = vmatpush1.bf16.msra.mxu0 0
          %1281 = vmatprep.subr.bf16.mxu0 0
          %1282 = vmatpush1.bf16.msra.mxu0 0
          %1283 = vmatprep.subr.bf16.mxu0 0
          %1284 = vmatpush1.bf16.msra.mxu0 0
          %1285 = vmatprep.subr.bf16.mxu0 0
          %1286 = vmatpush1.bf16.msra.mxu0 0
          %1287 = vmatprep.subr.bf16.mxu0 0
          %1288 = vmatpush1.bf16.msra.mxu0 0
          %1289 = vmatprep.subr.bf16.mxu0 0
          %1290 = vmatpush1.bf16.msra.mxu0 0
          %1291 = vmatprep.subr.bf16.mxu0 0
          %1292 = vmatpush1.bf16.msra.mxu0 0
          %1293 = vmatprep.subr.bf16.mxu0 0
          %1294 = vmatpush1.bf16.msra.mxu0 0
          %1295 = vmatprep.subr.bf16.mxu0 0
          %1296 = vmatpush1.bf16.msra.mxu0 0
          %1297 = vmatprep.subr.bf16.mxu0 0
          %1298 = vmatpush1.bf16.msra.mxu0 0
          %1299 = vmatprep.mubr.bf16.mxu0 0
          %1300 = vmatmul.mubr.bf16.gmra.mrb[0].mxu0 %v1265
          %v1301 = vpop.f32.mrb[0].mxu0
          %v1302 = vadd.f32 %v1249, %v1301
          %v1303 = vpop.f32.mrb[0].mxu0
          %v1304 = vpop.f32.mrb[0].mxu0
          %v1305 = vadd.f32 %v1249, %v1304
          %v1306 = vpop.f32.mrb[0].mxu0
          %1307 = vdwg.mxu0
          %v1308 = vpack.c.bf16 %v1305, %v1302
          %1310 = vrot.lane.b32.xlu0 %v1308, 96
          %v1311 = vpop.permute.xlu0 %1310
          %v1313 = vsel %vm1170, %v1308, 0
          %v1316 = vsel %vm1170, %v1311, 0
          %1318 = vmatprep.subr.bf16.mxu0 0
          %1319 = vmatpush1.bf16.xpose.msra.mxu0 %v1316
          %1320 = vmatprep.subr.bf16.mxu0 0
          %1321 = vmatpush1.bf16.xpose.msra.mxu0 0
          %1322 = vmatprep.subr.bf16.mxu0 0
          %1323 = vmatpush1.bf16.xpose.msra.mxu0 0
          %1324 = vmatprep.subr.bf16.mxu0 0
          %1325 = vmatpush1.bf16.xpose.msra.mxu0 0
          %1326 = vmatprep.subr.bf16.mxu0 0
          %1327 = vmatpush1.bf16.xpose.msra.mxu0 0
          %1328 = vmatprep.subr.bf16.mxu0 0
          %1329 = vmatpush1.bf16.xpose.msra.mxu0 0
          %1330 = vmatprep.subr.bf16.mxu0 0
          %1331 = vmatpush1.bf16.xpose.msra.mxu0 0
          %1332 = vmatprep.subr.bf16.mxu0 0
          %1333 = vmatpush1.bf16.xpose.msra.mxu0 0
          %1334 = vmatprep.subr.bf16.mxu0 0
          %1335 = vmatpush1.bf16.xpose.msra.mxu0 0
          %1336 = vmatprep.subr.bf16.mxu0 0
          %1337 = vmatpush1.bf16.xpose.msra.mxu0 0
          %1338 = vmatprep.subr.bf16.mxu0 0
          %1339 = vmatpush1.bf16.xpose.msra.mxu0 0
          %1340 = vmatprep.subr.bf16.mxu0 0
          %1341 = vmatpush1.bf16.xpose.msra.mxu0 0
          %1342 = vmatprep.subr.bf16.mxu0 0
          %1343 = vmatpush1.bf16.xpose.msra.mxu0 0
          %1344 = vmatprep.subr.bf16.mxu0 0
          %1345 = vmatpush1.bf16.xpose.msra.mxu0 0
          %1346 = vmatprep.subr.bf16.mxu0 0
          %1347 = vmatpush1.bf16.xpose.msra.mxu0 0
          %1348 = vmatprep.subr.bf16.mxu0 0
          %1349 = vmatpush1.bf16.xpose.msra.mxu0 0
          %1350 = vmatprep.mubr.bf16.mxu0 0
          %1351 = vmatmul.mubr.bf16.gmra.mrb[0].mxu0 %v1313
          %v1352 = vpop.f32.mrb[0].mxu0
          %v1353 = vadd.f32 0.0, %v1352
          %v1354 = vpop.f32.mrb[0].mxu0
          %v1355 = vpop.f32.mrb[0].mxu0
          %v1356 = vadd.f32 0.0, %v1355
          %v1357 = vpop.f32.mrb[0].mxu0
          %1358 = vdwg.mxu0
          %vm1359 = vcmask 130048
          %v1360 = vsel %vm1359, %v1353, -inf
          %1361 = vmax.xlane.f32.xlu0 %v1360
          %v1362 = vpop.xlane.xlu0 %1361
          %v1363 = vsel %vm1359, %v1356, -inf
          %1364 = vmax.xlane.f32.xlu0 %v1363
          %v1365 = vpop.xlane.xlu0 %1364
          %v1366 = vsub.f32 %v1353, %v1362
          %v1367 = vsub.f32 %v1356, %v1365
          %v1368 = vmul.f32 %v1366, 1.442695
          %v1369 = vpow.pop %v1368
          %v1370 = vmul.f32 %v1367, 1.442695
          %v1371 = vpow.pop %v1370
          %v1372 = vsel %vm1359, %v1369, 0.0
          %1373 = vadd.xlane.f32.xlu0 %v1372
          %v1374 = vpop.xlane.xlu0 %1373
          %v1375 = vsel %vm1359, %v1371, 0.0
          %1376 = vadd.xlane.f32.xlu0 %v1375
          %v1377 = vpop.xlane.xlu0 %1376
          %v1378 = vrcp.pop %v1374
          %v1379 = vrcp.pop %v1377
          %v1380 = vmul.f32 %v1369, %v1378
          %v1381 = vmul.f32 %v1371, %v1379
          %v1382 = vpack.c.bf16 %v1381, %v1380
          %1383 = vrot.lane.b32.xlu0 %v1308, 64
          %v1384 = vpop.permute.xlu0 %1383
          %v1387 = vsel %vm1359, %v1382, 0
          %1389 = vmatprep.subr.bf16.mxu0 0
          %1390 = vmatpush1.bf16.msra.mxu0 %v1384
          %1391 = vmatprep.subr.bf16.mxu0 0
          %1392 = vmatpush1.bf16.msra.mxu0 0
          %1393 = vmatprep.subr.bf16.mxu0 0
          %1394 = vmatpush1.bf16.msra.mxu0 0
          %1395 = vmatprep.subr.bf16.mxu0 0
          %1396 = vmatpush1.bf16.msra.mxu0 0
          %1397 = vmatprep.subr.bf16.mxu0 0
          %1398 = vmatpush1.bf16.msra.mxu0 0
          %1399 = vmatprep.subr.bf16.mxu0 0
          %1400 = vmatpush1.bf16.msra.mxu0 0
          %1401 = vmatprep.subr.bf16.mxu0 0
          %1402 = vmatpush1.bf16.msra.mxu0 0
          %1403 = vmatprep.subr.bf16.mxu0 0
          %1404 = vmatpush1.bf16.msra.mxu0 0
          %1405 = vmatprep.subr.bf16.mxu0 0
          %1406 = vmatpush1.bf16.msra.mxu0 0
          %1407 = vmatprep.subr.bf16.mxu0 0
          %1408 = vmatpush1.bf16.msra.mxu0 0
          %1409 = vmatprep.subr.bf16.mxu0 0
          %1410 = vmatpush1.bf16.msra.mxu0 0
          %1411 = vmatprep.subr.bf16.mxu0 0
          %1412 = vmatpush1.bf16.msra.mxu0 0
          %1413 = vmatprep.subr.bf16.mxu0 0
          %1414 = vmatpush1.bf16.msra.mxu0 0
          %1415 = vmatprep.subr.bf16.mxu0 0
          %1416 = vmatpush1.bf16.msra.mxu0 0
          %1417 = vmatprep.subr.bf16.mxu0 0
          %1418 = vmatpush1.bf16.msra.mxu0 0
          %1419 = vmatprep.subr.bf16.mxu0 0
          %1420 = vmatpush1.bf16.msra.mxu0 0
          %1421 = vmatprep.mubr.bf16.mxu0 0
          %1422 = vmatmul.mubr.bf16.gmra.mrb[0].mxu0 %v1387
          %v1423 = vpop.f32.mrb[0].mxu0
          %v1424 = vadd.f32 0.0, %v1423
          %v1425 = vpop.f32.mrb[0].mxu0
          %v1426 = vpop.f32.mrb[0].mxu0
          %v1427 = vadd.f32 0.0, %v1426
          %v1428 = vpop.f32.mrb[0].mxu0
          %1429 = vdwg.mxu0
          %1430 = vrot.lane.b32.xlu0 %v1308, 120
          %v1431 = vpop.permute.xlu0 %1430
          %1432 = vrot.lane.b32.xlu0 %v1308, 88
          %v1433 = vpop.permute.xlu0 %1432
          %v1435 = vsel %vm1170, %v1431, 0
          %v1438 = vsel %vm1170, %v1433, 0
          %1440 = vmatprep.subr.bf16.mxu0 0
          %1441 = vmatpush1.bf16.xpose.msra.mxu0 %v1438
          %1442 = vmatprep.subr.bf16.mxu0 0
          %1443 = vmatpush1.bf16.xpose.msra.mxu0 0
          %1444 = vmatprep.subr.bf16.mxu0 0
          %1445 = vmatpush1.bf16.xpose.msra.mxu0 0
          %1446 = vmatprep.subr.bf16.mxu0 0
          %1447 = vmatpush1.bf16.xpose.msra.mxu0 0
          %1448 = vmatprep.subr.bf16.mxu0 0
          %1449 = vmatpush1.bf16.xpose.msra.mxu0 0
          %1450 = vmatprep.subr.bf16.mxu0 0
          %1451 = vmatpush1.bf16.xpose.msra.mxu0 0
          %1452 = vmatprep.subr.bf16.mxu0 0
          %1453 = vmatpush1.bf16.xpose.msra.mxu0 0
          %1454 = vmatprep.subr.bf16.mxu0 0
          %1455 = vmatpush1.bf16.xpose.msra.mxu0 0
          %1456 = vmatprep.subr.bf16.mxu0 0
          %1457 = vmatpush1.bf16.xpose.msra.mxu0 0
          %1458 = vmatprep.subr.bf16.mxu0 0
          %1459 = vmatpush1.bf16.xpose.msra.mxu0 0
          %1460 = vmatprep.subr.bf16.mxu0 0
          %1461 = vmatpush1.bf16.xpose.msra.mxu0 0
          %1462 = vmatprep.subr.bf16.mxu0 0
          %1463 = vmatpush1.bf16.xpose.msra.mxu0 0
          %1464 = vmatprep.subr.bf16.mxu0 0
          %1465 = vmatpush1.bf16.xpose.msra.mxu0 0
          %1466 = vmatprep.subr.bf16.mxu0 0
          %1467 = vmatpush1.bf16.xpose.msra.mxu0 0
          %1468 = vmatprep.subr.bf16.mxu0 0
          %1469 = vmatpush1.bf16.xpose.msra.mxu0 0
          %1470 = vmatprep.subr.bf16.mxu0 0
          %1471 = vmatpush1.bf16.xpose.msra.mxu0 0
          %1472 = vmatprep.mubr.bf16.mxu0 0
          %1473 = vmatmul.mubr.bf16.gmra.mrb[0].mxu0 %v1435
          %v1474 = vpop.f32.mrb[0].mxu0
          %v1475 = vadd.f32 0.0, %v1474
          %v1476 = vpop.f32.mrb[0].mxu0
          %v1477 = vpop.f32.mrb[0].mxu0
          %v1478 = vadd.f32 0.0, %v1477
          %v1479 = vpop.f32.mrb[0].mxu0
          %1480 = vdwg.mxu0
          %v1481 = vsel %vm1359, %v1475, -inf
          %1482 = vmax.xlane.f32.xlu0 %v1481
          %v1483 = vpop.xlane.xlu0 %1482
          %v1484 = vsel %vm1359, %v1478, -inf
          %1485 = vmax.xlane.f32.xlu0 %v1484
          %v1486 = vpop.xlane.xlu0 %1485
          %v1487 = vsub.f32 %v1475, %v1483
          %v1488 = vsub.f32 %v1478, %v1486
          %v1489 = vmul.f32 %v1487, 1.442695
          %v1490 = vpow.pop %v1489
          %v1491 = vmul.f32 %v1488, 1.442695
          %v1492 = vpow.pop %v1491
          %v1493 = vsel %vm1359, %v1490, 0.0
          %1494 = vadd.xlane.f32.xlu0 %v1493
          %v1495 = vpop.xlane.xlu0 %1494
          %v1496 = vsel %vm1359, %v1492, 0.0
          %1497 = vadd.xlane.f32.xlu0 %v1496
          %v1498 = vpop.xlane.xlu0 %1497
          %v1499 = vrcp.pop %v1495
          %v1500 = vrcp.pop %v1498
          %v1501 = vmul.f32 %v1490, %v1499
          %v1502 = vmul.f32 %v1492, %v1500
          %v1503 = vpack.c.bf16 %v1502, %v1501
          %1504 = vrot.lane.b32.xlu0 %v1308, 56
          %v1505 = vpop.permute.xlu0 %1504
          %v1508 = vsel %vm1359, %v1503, 0
          %1510 = vmatprep.subr.bf16.mxu0 0
          %1511 = vmatpush1.bf16.msra.mxu0 %v1505
          %1512 = vmatprep.subr.bf16.mxu0 0
          %1513 = vmatpush1.bf16.msra.mxu0 0
          %1514 = vmatprep.subr.bf16.mxu0 0
          %1515 = vmatpush1.bf16.msra.mxu0 0
          %1516 = vmatprep.subr.bf16.mxu0 0
          %1517 = vmatpush1.bf16.msra.mxu0 0
          %1518 = vmatprep.subr.bf16.mxu0 0
          %1519 = vmatpush1.bf16.msra.mxu0 0
          %1520 = vmatprep.subr.bf16.mxu0 0
          %1521 = vmatpush1.bf16.msra.mxu0 0
          %1522 = vmatprep.subr.bf16.mxu0 0
          %1523 = vmatpush1.bf16.msra.mxu0 0
          %1524 = vmatprep.subr.bf16.mxu0 0
          %1525 = vmatpush1.bf16.msra.mxu0 0
          %1526 = vmatprep.subr.bf16.mxu0 0
          %1527 = vmatpush1.bf16.msra.mxu0 0
          %1528 = vmatprep.subr.bf16.mxu0 0
          %1529 = vmatpush1.bf16.msra.mxu0 0
          %1530 = vmatprep.subr.bf16.mxu0 0
          %1531 = vmatpush1.bf16.msra.mxu0 0
          %1532 = vmatprep.subr.bf16.mxu0 0
          %1533 = vmatpush1.bf16.msra.mxu0 0
          %1534 = vmatprep.subr.bf16.mxu0 0
          %1535 = vmatpush1.bf16.msra.mxu0 0
          %1536 = vmatprep.subr.bf16.mxu0 0
          %1537 = vmatpush1.bf16.msra.mxu0 0
          %1538 = vmatprep.subr.bf16.mxu0 0
          %1539 = vmatpush1.bf16.msra.mxu0 0
          %1540 = vmatprep.subr.bf16.mxu0 0
          %1541 = vmatpush1.bf16.msra.mxu0 0
          %1542 = vmatprep.mubr.bf16.mxu0 0
          %1543 = vmatmul.mubr.bf16.gmra.mrb[0].mxu0 %v1508
          %v1544 = vpop.f32.mrb[0].mxu0
          %v1545 = vadd.f32 0.0, %v1544
          %v1546 = vpop.f32.mrb[0].mxu0
          %v1547 = vpop.f32.mrb[0].mxu0
          %v1548 = vadd.f32 0.0, %v1547
          %v1549 = vpop.f32.mrb[0].mxu0
          %1550 = vdwg.mxu0
          %1551 = vrot.lane.b32.xlu0 %v1308, 112
          %v1552 = vpop.permute.xlu0 %1551
          %1553 = vrot.lane.b32.xlu0 %v1308, 80
          %v1554 = vpop.permute.xlu0 %1553
          %v1556 = vsel %vm1170, %v1552, 0
          %v1559 = vsel %vm1170, %v1554, 0
          %1561 = vmatprep.subr.bf16.mxu0 0
          %1562 = vmatpush1.bf16.xpose.msra.mxu0 %v1559
          %1563 = vmatprep.subr.bf16.mxu0 0
          %1564 = vmatpush1.bf16.xpose.msra.mxu0 0
          %1565 = vmatprep.subr.bf16.mxu0 0
          %1566 = vmatpush1.bf16.xpose.msra.mxu0 0
          %1567 = vmatprep.subr.bf16.mxu0 0
          %1568 = vmatpush1.bf16.xpose.msra.mxu0 0
          %1569 = vmatprep.subr.bf16.mxu0 0
          %1570 = vmatpush1.bf16.xpose.msra.mxu0 0
          %1571 = vmatprep.subr.bf16.mxu0 0
          %1572 = vmatpush1.bf16.xpose.msra.mxu0 0
          %1573 = vmatprep.subr.bf16.mxu0 0
          %1574 = vmatpush1.bf16.xpose.msra.mxu0 0
          %1575 = vmatprep.subr.bf16.mxu0 0
          %1576 = vmatpush1.bf16.xpose.msra.mxu0 0
          %1577 = vmatprep.subr.bf16.mxu0 0
          %1578 = vmatpush1.bf16.xpose.msra.mxu0 0
          %1579 = vmatprep.subr.bf16.mxu0 0
          %1580 = vmatpush1.bf16.xpose.msra.mxu0 0
          %1581 = vmatprep.subr.bf16.mxu0 0
          %1582 = vmatpush1.bf16.xpose.msra.mxu0 0
          %1583 = vmatprep.subr.bf16.mxu0 0
          %1584 = vmatpush1.bf16.xpose.msra.mxu0 0
          %1585 = vmatprep.subr.bf16.mxu0 0
          %1586 = vmatpush1.bf16.xpose.msra.mxu0 0
          %1587 = vmatprep.subr.bf16.mxu0 0
          %1588 = vmatpush1.bf16.xpose.msra.mxu0 0
          %1589 = vmatprep.subr.bf16.mxu0 0
          %1590 = vmatpush1.bf16.xpose.msra.mxu0 0
          %1591 = vmatprep.subr.bf16.mxu0 0
          %1592 = vmatpush1.bf16.xpose.msra.mxu0 0
          %1593 = vmatprep.mubr.bf16.mxu0 0
          %1594 = vmatmul.mubr.bf16.gmra.mrb[0].mxu0 %v1556
          %v1595 = vpop.f32.mrb[0].mxu0
          %v1596 = vadd.f32 0.0, %v1595
          %v1597 = vpop.f32.mrb[0].mxu0
          %v1598 = vpop.f32.mrb[0].mxu0
          %v1599 = vadd.f32 0.0, %v1598
          %v1600 = vpop.f32.mrb[0].mxu0
          %1601 = vdwg.mxu0
          %v1602 = vsel %vm1359, %v1596, -inf
          %1603 = vmax.xlane.f32.xlu0 %v1602
          %v1604 = vpop.xlane.xlu0 %1603
          %v1605 = vsel %vm1359, %v1599, -inf
          %1606 = vmax.xlane.f32.xlu0 %v1605
          %v1607 = vpop.xlane.xlu0 %1606
          %v1608 = vsub.f32 %v1596, %v1604
          %v1609 = vsub.f32 %v1599, %v1607
          %v1610 = vmul.f32 %v1608, 1.442695
          %v1611 = vpow.pop %v1610
          %v1612 = vmul.f32 %v1609, 1.442695
          %v1613 = vpow.pop %v1612
          %v1614 = vsel %vm1359, %v1611, 0.0
          %1615 = vadd.xlane.f32.xlu0 %v1614
          %v1616 = vpop.xlane.xlu0 %1615
          %v1617 = vsel %vm1359, %v1613, 0.0
          %1618 = vadd.xlane.f32.xlu0 %v1617
          %v1619 = vpop.xlane.xlu0 %1618
          %v1620 = vrcp.pop %v1616
          %v1621 = vrcp.pop %v1619
          %v1622 = vmul.f32 %v1611, %v1620
          %v1623 = vmul.f32 %v1613, %v1621
          %v1624 = vpack.c.bf16 %v1623, %v1622
          %1625 = vrot.lane.b32.xlu0 %v1308, 48
          %v1626 = vpop.permute.xlu0 %1625
          %v1629 = vsel %vm1359, %v1624, 0
          %1631 = vmatprep.subr.bf16.mxu0 0
          %1632 = vmatpush1.bf16.msra.mxu0 %v1626
          %1633 = vmatprep.subr.bf16.mxu0 0
          %1634 = vmatpush1.bf16.msra.mxu0 0
          %1635 = vmatprep.subr.bf16.mxu0 0
          %1636 = vmatpush1.bf16.msra.mxu0 0
          %1637 = vmatprep.subr.bf16.mxu0 0
          %1638 = vmatpush1.bf16.msra.mxu0 0
          %1639 = vmatprep.subr.bf16.mxu0 0
          %1640 = vmatpush1.bf16.msra.mxu0 0
          %1641 = vmatprep.subr.bf16.mxu0 0
          %1642 = vmatpush1.bf16.msra.mxu0 0
          %1643 = vmatprep.subr.bf16.mxu0 0
          %1644 = vmatpush1.bf16.msra.mxu0 0
          %1645 = vmatprep.subr.bf16.mxu0 0
          %1646 = vmatpush1.bf16.msra.mxu0 0
          %1647 = vmatprep.subr.bf16.mxu0 0
          %1648 = vmatpush1.bf16.msra.mxu0 0
          %1649 = vmatprep.subr.bf16.mxu0 0
          %1650 = vmatpush1.bf16.msra.mxu0 0
          %1651 = vmatprep.subr.bf16.mxu0 0
          %1652 = vmatpush1.bf16.msra.mxu0 0
          %1653 = vmatprep.subr.bf16.mxu0 0
          %1654 = vmatpush1.bf16.msra.mxu0 0
          %1655 = vmatprep.subr.bf16.mxu0 0
          %1656 = vmatpush1.bf16.msra.mxu0 0
          %1657 = vmatprep.subr.bf16.mxu0 0
          %1658 = vmatpush1.bf16.msra.mxu0 0
          %1659 = vmatprep.subr.bf16.mxu0 0
          %1660 = vmatpush1.bf16.msra.mxu0 0
          %1661 = vmatprep.subr.bf16.mxu0 0
          %1662 = vmatpush1.bf16.msra.mxu0 0
          %1663 = vmatprep.mubr.bf16.mxu0 0
          %1664 = vmatmul.mubr.bf16.gmra.mrb[0].mxu0 %v1629
          %v1665 = vpop.f32.mrb[0].mxu0
          %v1666 = vadd.f32 0.0, %v1665
          %v1667 = vpop.f32.mrb[0].mxu0
          %v1668 = vpop.f32.mrb[0].mxu0
          %v1669 = vadd.f32 0.0, %v1668
          %v1670 = vpop.f32.mrb[0].mxu0
          %1671 = vdwg.mxu0
          %1672 = vrot.lane.b32.xlu0 %v1308, 104
          %v1673 = vpop.permute.xlu0 %1672
          %1674 = vrot.lane.b32.xlu0 %v1308, 72
          %v1675 = vpop.permute.xlu0 %1674
          %v1677 = vsel %vm1170, %v1673, 0
          %v1680 = vsel %vm1170, %v1675, 0
          %1682 = vmatprep.subr.bf16.mxu0 0
          %1683 = vmatpush1.bf16.xpose.msra.mxu0 %v1680
          %1684 = vmatprep.subr.bf16.mxu0 0
          %1685 = vmatpush1.bf16.xpose.msra.mxu0 0
          %1686 = vmatprep.subr.bf16.mxu0 0
          %1687 = vmatpush1.bf16.xpose.msra.mxu0 0
          %1688 = vmatprep.subr.bf16.mxu0 0
          %1689 = vmatpush1.bf16.xpose.msra.mxu0 0
          %1690 = vmatprep.subr.bf16.mxu0 0
          %1691 = vmatpush1.bf16.xpose.msra.mxu0 0
          %1692 = vmatprep.subr.bf16.mxu0 0
          %1693 = vmatpush1.bf16.xpose.msra.mxu0 0
          %1694 = vmatprep.subr.bf16.mxu0 0
          %1695 = vmatpush1.bf16.xpose.msra.mxu0 0
          %1696 = vmatprep.subr.bf16.mxu0 0
          %1697 = vmatpush1.bf16.xpose.msra.mxu0 0
          %1698 = vmatprep.subr.bf16.mxu0 0
          %1699 = vmatpush1.bf16.xpose.msra.mxu0 0
          %1700 = vmatprep.subr.bf16.mxu0 0
          %1701 = vmatpush1.bf16.xpose.msra.mxu0 0
          %1702 = vmatprep.subr.bf16.mxu0 0
          %1703 = vmatpush1.bf16.xpose.msra.mxu0 0
          %1704 = vmatprep.subr.bf16.mxu0 0
          %1705 = vmatpush1.bf16.xpose.msra.mxu0 0
          %1706 = vmatprep.subr.bf16.mxu0 0
          %1707 = vmatpush1.bf16.xpose.msra.mxu0 0
          %1708 = vmatprep.subr.bf16.mxu0 0
          %1709 = vmatpush1.bf16.xpose.msra.mxu0 0
          %1710 = vmatprep.subr.bf16.mxu0 0
          %1711 = vmatpush1.bf16.xpose.msra.mxu0 0
          %1712 = vmatprep.subr.bf16.mxu0 0
          %1713 = vmatpush1.bf16.xpose.msra.mxu0 0
          %1714 = vmatprep.mubr.bf16.mxu0 0
          %1715 = vmatmul.mubr.bf16.gmra.mrb[0].mxu0 %v1677
          %v1716 = vpop.f32.mrb[0].mxu0
          %v1717 = vadd.f32 0.0, %v1716
          %v1718 = vpop.f32.mrb[0].mxu0
          %v1719 = vpop.f32.mrb[0].mxu0
          %v1720 = vadd.f32 0.0, %v1719
          %v1721 = vpop.f32.mrb[0].mxu0
          %1722 = vdwg.mxu0
          %v1723 = vsel %vm1359, %v1717, -inf
          %1724 = vmax.xlane.f32.xlu0 %v1723
          %v1725 = vpop.xlane.xlu0 %1724
          %v1726 = vsel %vm1359, %v1720, -inf
          %1727 = vmax.xlane.f32.xlu0 %v1726
          %v1728 = vpop.xlane.xlu0 %1727
          %v1729 = vsub.f32 %v1717, %v1725
          %v1730 = vsub.f32 %v1720, %v1728
          %v1731 = vmul.f32 %v1729, 1.442695
          %v1732 = vpow.pop %v1731
          %v1733 = vmul.f32 %v1730, 1.442695
          %v1734 = vpow.pop %v1733
          %v1735 = vsel %vm1359, %v1732, 0.0
          %1736 = vadd.xlane.f32.xlu0 %v1735
          %v1737 = vpop.xlane.xlu0 %1736
          %v1738 = vsel %vm1359, %v1734, 0.0
          %1739 = vadd.xlane.f32.xlu0 %v1738
          %v1740 = vpop.xlane.xlu0 %1739
          %v1741 = vrcp.pop %v1737
          %v1742 = vrcp.pop %v1740
          %v1743 = vmul.f32 %v1732, %v1741
          %v1744 = vmul.f32 %v1734, %v1742
          %v1745 = vpack.c.bf16 %v1744, %v1743
          %1746 = vrot.lane.b32.xlu0 %v1308, 40
          %v1747 = vpop.permute.xlu0 %1746
          %v1750 = vsel %vm1359, %v1745, 0
          %1752 = vmatprep.subr.bf16.mxu0 0
          %1753 = vmatpush1.bf16.msra.mxu0 %v1747
          %1754 = vmatprep.subr.bf16.mxu0 0
          %1755 = vmatpush1.bf16.msra.mxu0 0
          %1756 = vmatprep.subr.bf16.mxu0 0
          %1757 = vmatpush1.bf16.msra.mxu0 0
          %1758 = vmatprep.subr.bf16.mxu0 0
          %1759 = vmatpush1.bf16.msra.mxu0 0
          %1760 = vmatprep.subr.bf16.mxu0 0
          %1761 = vmatpush1.bf16.msra.mxu0 0
          %1762 = vmatprep.subr.bf16.mxu0 0
          %1763 = vmatpush1.bf16.msra.mxu0 0
          %1764 = vmatprep.subr.bf16.mxu0 0
          %1765 = vmatpush1.bf16.msra.mxu0 0
          %1766 = vmatprep.subr.bf16.mxu0 0
          %1767 = vmatpush1.bf16.msra.mxu0 0
          %1768 = vmatprep.subr.bf16.mxu0 0
          %1769 = vmatpush1.bf16.msra.mxu0 0
          %1770 = vmatprep.subr.bf16.mxu0 0
          %1771 = vmatpush1.bf16.msra.mxu0 0
          %1772 = vmatprep.subr.bf16.mxu0 0
          %1773 = vmatpush1.bf16.msra.mxu0 0
          %1774 = vmatprep.subr.bf16.mxu0 0
          %1775 = vmatpush1.bf16.msra.mxu0 0
          %1776 = vmatprep.subr.bf16.mxu0 0
          %1777 = vmatpush1.bf16.msra.mxu0 0
          %1778 = vmatprep.subr.bf16.mxu0 0
          %1779 = vmatpush1.bf16.msra.mxu0 0
          %1780 = vmatprep.subr.bf16.mxu0 0
          %1781 = vmatpush1.bf16.msra.mxu0 0
          %1782 = vmatprep.subr.bf16.mxu0 0
          %1783 = vmatpush1.bf16.msra.mxu0 0
          %1784 = vmatprep.mubr.bf16.mxu0 0
          %1785 = vmatmul.mubr.bf16.gmra.mrb[0].mxu0 %v1750
          %v1786 = vpop.f32.mrb[0].mxu0
          %v1787 = vadd.f32 0.0, %v1786
          %v1788 = vpop.f32.mrb[0].mxu0
          %v1789 = vpop.f32.mrb[0].mxu0
          %v1790 = vadd.f32 0.0, %v1789
          %v1791 = vpop.f32.mrb[0].mxu0
          %1792 = vdwg.mxu0
          %1795 = vrot.lane.b32.xlu0 %v1545, 8
          %v1796 = vpop.permute.xlu0 %1795
          %1797 = vrot.lane.b32.xlu0 %v1548, 8
          %v1798 = vpop.permute.xlu0 %1797
          %1803 = vrot.lane.b32.xlu0 %v1666, 16
          %v1804 = vpop.permute.xlu0 %1803
          %1805 = vrot.lane.b32.xlu0 %v1669, 16
          %v1806 = vpop.permute.xlu0 %1805
          %1811 = vrot.lane.b32.xlu0 %v1787, 24
          %v1812 = vpop.permute.xlu0 %1811
          %1813 = vrot.lane.b32.xlu0 %v1790, 24
          %v1814 = vpop.permute.xlu0 %1813
          %v1817 = vsel %vm1170, %v1424, %v1796
          %v1818 = vsel %vm1170, %v1427, %v1798
          %v1819 = vsel %vm1359, %v1817, %v1804
          %v1820 = vsel %vm1359, %v1818, %v1806
          %vm1821 = vcmask 195584
          %v1822 = vsel %vm1821, %v1819, %v1812
          %v1823 = vsel %vm1821, %v1820, %v1814
          %v1824 = vpack.c.bf16 %v1823, %v1822
          %v1826 = vlaneseq
          %v1827 = vshrl.u32 %v1826, 7
          %v1828 = vsub.s32 0, %v1827
          %v1829 = vrot.slane %v1243, %v1828
          %v1835 = vunpack.c.l.b16 %v1238
          %v1836 = vunpack.c.l.b16 %v1239
          %v1837 = vunpack.c.l.b16 %v1240
          %v1838 = vunpack.c.l.b16 %v1241
          %v1839 = vpack.c.b16 %v1836, %v1835
          %v1840 = vpack.c.b16 %v1838, %v1837
          %v1844 = vsel %vm1263, %v1824, 0
          %1846 = vmatprep.subr.bf16.mxu0 0
          %1847 = vmatpush1.bf16.msra.mxu0 %v1839
          %1848 = vmatprep.subr.bf16.mxu0 0
          %1849 = vmatpush1.bf16.msra.mxu0 %v1840
          %1850 = vmatprep.subr.bf16.mxu0 0
          %1851 = vmatpush1.bf16.msra.mxu0 0
          %1852 = vmatprep.subr.bf16.mxu0 0
          %1853 = vmatpush1.bf16.msra.mxu0 0
          %1854 = vmatprep.subr.bf16.mxu0 0
          %1855 = vmatpush1.bf16.msra.mxu0 0
          %1856 = vmatprep.subr.bf16.mxu0 0
          %1857 = vmatpush1.bf16.msra.mxu0 0
          %1858 = vmatprep.subr.bf16.mxu0 0
          %1859 = vmatpush1.bf16.msra.mxu0 0
          %1860 = vmatprep.subr.bf16.mxu0 0
          %1861 = vmatpush1.bf16.msra.mxu0 0
          %1862 = vmatprep.subr.bf16.mxu0 0
          %1863 = vmatpush1.bf16.msra.mxu0 0
          %1864 = vmatprep.subr.bf16.mxu0 0
          %1865 = vmatpush1.bf16.msra.mxu0 0
          %1866 = vmatprep.subr.bf16.mxu0 0
          %1867 = vmatpush1.bf16.msra.mxu0 0
          %1868 = vmatprep.subr.bf16.mxu0 0
          %1869 = vmatpush1.bf16.msra.mxu0 0
          %1870 = vmatprep.subr.bf16.mxu0 0
          %1871 = vmatpush1.bf16.msra.mxu0 0
          %1872 = vmatprep.subr.bf16.mxu0 0
          %1873 = vmatpush1.bf16.msra.mxu0 0
          %1874 = vmatprep.subr.bf16.mxu0 0
          %1875 = vmatpush1.bf16.msra.mxu0 0
          %1876 = vmatprep.subr.bf16.mxu0 0
          %1877 = vmatpush1.bf16.msra.mxu0 0
          %1878 = vmatprep.mubr.bf16.mxu0 0
          %1879 = vmatmul.mubr.bf16.gmra.mrb[0].mxu0 %v1844
          %v1880 = vpop.f32.mrb[0].mxu0
          %v1881 = vadd.f32 %v1829, %v1880
          %v1882 = vpop.f32.mrb[0].mxu0
          %v1883 = vpop.f32.mrb[0].mxu0
          %v1884 = vadd.f32 %v1829, %v1883
          %v1885 = vpop.f32.mrb[0].mxu0
          %1886 = vdwg.mxu0
          %v1887 = vadd.f32 %v1225, %v1881
          %v1888 = vadd.f32 %v1226, %v1884
          %s1889 = scalar_lea.vmem [#allocation22], %s1220
          %v1890 = vld [vmem:[%s1889] sm:$0x1]
          %s1891 = scalar_lea.vmem [#allocation23], %s1220
          %v1892 = vld [vmem:[%s1891] sm:$0x1]
          %v1893 = vsel %vm1263, %v1887, 0.0
          %1894 = vadd.xlane.f32.xlu0 %v1893
          %v1895 = vpop.xlane.xlu0 %1894
          %v1896 = vsel %vm1263, %v1888, 0.0
          %1897 = vadd.xlane.f32.xlu0 %v1896
          %v1898 = vpop.xlane.xlu0 %1897
          %v1899 = vrcp.pop 32.0
          %v1900 = vmul.f32 %v1895, %v1899
          %v1901 = vmul.f32 %v1898, %v1899
          %v1902 = vsub.f32 %v1887, %v1900
          %v1903 = vsub.f32 %v1888, %v1901
          %v1904 = vmul.f32 %v1902, %v1902
          %v1905 = vmul.f32 %v1903, %v1903
          %v1906 = vsel %vm1263, %v1904, 0.0
          %1907 = vadd.xlane.f32.xlu0 %v1906
          %v1908 = vpop.xlane.xlu0 %1907
          %v1909 = vsel %vm1263, %v1905, 0.0
          %1910 = vadd.xlane.f32.xlu0 %v1909
          %v1911 = vpop.xlane.xlu0 %1910
          %v1912 = vmul.f32 %v1908, %v1899
          %v1913 = vmul.f32 %v1911, %v1899
          %v1914 = vadd.f32 %v1912, 1e-05
          %v1915 = vadd.f32 %v1913, 1e-05
          %v1916 = vrsqrt.pop %v1914
          %v1917 = vrsqrt.pop %v1915
          %v1918 = vmul.f32 %v1902, %v1916
          %v1919 = vmul.f32 %v1903, %v1917
          %v1921 = vlaneseq
          %v1922 = vshrl.u32 %v1921, 7
          %v1923 = vsub.s32 0, %v1922
          %v1924 = vrot.slane %v1890, %v1923
          %v1926 = vmul.f32 %v1918, %v1924
          %v1927 = vmul.f32 %v1919, %v1924
          %v1929 = vlaneseq
          %v1930 = vshrl.u32 %v1929, 7
          %v1931 = vsub.s32 0, %v1930
          %v1932 = vrot.slane %v1892, %v1931
          %v1934 = vadd.f32 %v1926, %v1932
          %v1935 = vadd.f32 %v1927, %v1932
          %v1936 = vpack.c.bf16 %v1935, %v1934
          %s1937 = smul.addr %s1227, 4
          %s1938 = scalar_lea.vmem [#allocation16], %s1937
          %v1939 = vld [vmem:[%s1938] sm:$0xf]
          %v1940 = vld [vmem:[%s1938 + $0x4] sm:$0xf]
          %v1941 = vld [vmem:[%s1938 + $0x8] sm:$0xf]
          %v1942 = vld [vmem:[%s1938 + $0xc] sm:$0xf]
          %s1943 = scalar_lea.vmem [#allocation17], %s1220
          %v1944 = vld [vmem:[%s1943] sm:$0x1]
          %v1946 = vlaneseq
          %v1947 = vshrl.u32 %v1946, 7
          %v1948 = vsub.s32 0, %v1947
          %v1949 = vrot.slane %v1944, %v1948
          %v1955 = vunpack.c.l.b16 %v1939
          %v1956 = vunpack.c.l.b16 %v1940
          %v1957 = vunpack.c.l.b16 %v1941
          %v1958 = vunpack.c.l.b16 %v1942
          %v1959 = vpack.c.b16 %v1956, %v1955
          %v1960 = vpack.c.b16 %v1958, %v1957
          %v1964 = vsel %vm1263, %v1936, 0
          %1966 = vmatprep.subr.bf16.mxu0 0
          %1967 = vmatpush1.bf16.msra.mxu0 %v1959
          %1968 = vmatprep.subr.bf16.mxu0 0
          %1969 = vmatpush1.bf16.msra.mxu0 %v1960
          %1970 = vmatprep.subr.bf16.mxu0 0
          %1971 = vmatpush1.bf16.msra.mxu0 0
          %1972 = vmatprep.subr.bf16.mxu0 0
          %1973 = vmatpush1.bf16.msra.mxu0 0
          %1974 = vmatprep.subr.bf16.mxu0 0
          %1975 = vmatpush1.bf16.msra.mxu0 0
          %1976 = vmatprep.subr.bf16.mxu0 0
          %1977 = vmatpush1.bf16.msra.mxu0 0
          %1978 = vmatprep.subr.bf16.mxu0 0
          %1979 = vmatpush1.bf16.msra.mxu0 0
          %1980 = vmatprep.subr.bf16.mxu0 0
          %1981 = vmatpush1.bf16.msra.mxu0 0
          %1982 = vmatprep.subr.bf16.mxu0 0
          %1983 = vmatpush1.bf16.msra.mxu0 0
          %1984 = vmatprep.subr.bf16.mxu0 0
          %1985 = vmatpush1.bf16.msra.mxu0 0
          %1986 = vmatprep.subr.bf16.mxu0 0
          %1987 = vmatpush1.bf16.msra.mxu0 0
          %1988 = vmatprep.subr.bf16.mxu0 0
          %1989 = vmatpush1.bf16.msra.mxu0 0
          %1990 = vmatprep.subr.bf16.mxu0 0
          %1991 = vmatpush1.bf16.msra.mxu0 0
          %1992 = vmatprep.subr.bf16.mxu0 0
          %1993 = vmatpush1.bf16.msra.mxu0 0
          %1994 = vmatprep.subr.bf16.mxu0 0
          %1995 = vmatpush1.bf16.msra.mxu0 0
          %1996 = vmatprep.subr.bf16.mxu0 0
          %1997 = vmatpush1.bf16.msra.mxu0 0
          %1998 = vmatprep.mubr.bf16.mxu0 0
          %1999 = vmatmul.mubr.bf16.gmra.mrb[0].mxu0 %v1964
          %v2000 = vpop.f32.mrb[0].mxu0
          %v2001 = vadd.f32 %v1949, %v2000
          %v2002 = vpop.f32.mrb[0].mxu0
          %v2003 = vpop.f32.mrb[0].mxu0
          %v2004 = vadd.f32 %v1949, %v2003
          %v2005 = vpop.f32.mrb[0].mxu0
          %2006 = vdwg.mxu0
          %v2007 = vmul.f32 %v2001, 0.5
          %v2008 = vmul.f32 %v2004, 0.5
          %v2009 = vmul.f32 %v2001, 0.044715
          %v2010 = vmul.f32 %v2004, 0.044715
          %v2011 = vmul.f32 %v2009, %v2001
          %v2012 = vmul.f32 %v2010, %v2004
          %v2013 = vmul.f32 %v2011, %v2001
          %v2014 = vmul.f32 %v2012, %v2004
          %v2015 = vadd.f32 %v2001, %v2013
          %v2016 = vadd.f32 %v2004, %v2014
          %v2017 = vmul.f32 %v2015, 0.7978846
          %v2018 = vmul.f32 %v2016, 0.7978846
          %v2019 = vtanh.pop %v2017
          %v2020 = vtanh.pop %v2018
          %v2021 = vadd.f32 %v2019, 1.0
          %v2022 = vadd.f32 %v2020, 1.0
          %v2023 = vmul.f32 %v2007, %v2021
          %v2024 = vmul.f32 %v2008, %v2022
          %v2025 = vpack.c.bf16 %v2024, %v2023
          %s2026 = smul.u32 %s1220, 8
          %s2027 = smul.addr %s2026, 4
          %s2028 = scalar_lea.vmem [#allocation19], %s2027
          %v2029 = vld [vmem:[%s2028] sm:$0xf]
          %v2030 = vld [vmem:[%s2028 + $0x4] sm:$0xf]
          %v2031 = vld [vmem:[%s2028 + $0x8] sm:$0xf]
          %v2032 = vld [vmem:[%s2028 + $0xc] sm:$0xf]
          %v2033 = vld [vmem:[%s2028 + $0x10] sm:$0xf]
          %v2034 = vld [vmem:[%s2028 + $0x14] sm:$0xf]
          %v2035 = vld [vmem:[%s2028 + $0x18] sm:$0xf]
          %v2036 = vld [vmem:[%s2028 + $0x1c] sm:$0xf]
          %s2037 = scalar_lea.vmem [#allocation20], %s1220
          %v2038 = vld [vmem:[%s2037] sm:$0x1]
          %v2040 = vlaneseq
          %v2041 = vshrl.u32 %v2040, 7
          %v2042 = vsub.s32 0, %v2041
          %v2043 = vrot.slane %v2038, %v2042
          %v2053 = vunpack.c.l.b16 %v2029
          %v2054 = vunpack.c.l.b16 %v2030
          %v2055 = vunpack.c.l.b16 %v2031
          %v2056 = vunpack.c.l.b16 %v2032
          %v2057 = vunpack.c.l.b16 %v2033
          %v2058 = vunpack.c.l.b16 %v2034
          %v2059 = vunpack.c.l.b16 %v2035
          %v2060 = vunpack.c.l.b16 %v2036
          %v2061 = vpack.c.b16 %v2054, %v2053
          %v2062 = vpack.c.b16 %v2056, %v2055
          %v2063 = vpack.c.b16 %v2058, %v2057
          %v2064 = vpack.c.b16 %v2060, %v2059
          %vm2069 = vcmask 523264
          %v2071 = vsel %vm2069, %v2025, 0
          %2073 = vmatprep.subr.bf16.mxu0 0
          %2074 = vmatpush1.bf16.msra.mxu0 %v2061
          %2075 = vmatprep.subr.bf16.mxu0 0
          %2076 = vmatpush1.bf16.msra.mxu0 %v2062
          %2077 = vmatprep.subr.bf16.mxu0 0
          %2078 = vmatpush1.bf16.msra.mxu0 %v2063
          %2079 = vmatprep.subr.bf16.mxu0 0
          %2080 = vmatpush1.bf16.msra.mxu0 %v2064
          %2081 = vmatprep.subr.bf16.mxu0 0
          %2082 = vmatpush1.bf16.msra.mxu0 0
          %2083 = vmatprep.subr.bf16.mxu0 0
          %2084 = vmatpush1.bf16.msra.mxu0 0
          %2085 = vmatprep.subr.bf16.mxu0 0
          %2086 = vmatpush1.bf16.msra.mxu0 0
          %2087 = vmatprep.subr.bf16.mxu0 0
          %2088 = vmatpush1.bf16.msra.mxu0 0
          %2089 = vmatprep.subr.bf16.mxu0 0
          %2090 = vmatpush1.bf16.msra.mxu0 0
          %2091 = vmatprep.subr.bf16.mxu0 0
          %2092 = vmatpush1.bf16.msra.mxu0 0
          %2093 = vmatprep.subr.bf16.mxu0 0
          %2094 = vmatpush1.bf16.msra.mxu0 0
          %2095 = vmatprep.subr.bf16.mxu0 0
          %2096 = vmatpush1.bf16.msra.mxu0 0
          %2097 = vmatprep.subr.bf16.mxu0 0
          %2098 = vmatpush1.bf16.msra.mxu0 0
          %2099 = vmatprep.subr.bf16.mxu0 0
          %2100 = vmatpush1.bf16.msra.mxu0 0
          %2101 = vmatprep.subr.bf16.mxu0 0
          %2102 = vmatpush1.bf16.msra.mxu0 0
          %2103 = vmatprep.subr.bf16.mxu0 0
          %2104 = vmatpush1.bf16.msra.mxu0 0
          %2105 = vmatprep.mubr.bf16.mxu0 0
          %2106 = vmatmul.mubr.bf16.gmra.mrb[0].mxu0 %v2071
          %v2107 = vpop.f32.mrb[0].mxu0
          %v2108 = vadd.f32 %v2043, %v2107
          %v2109 = vpop.f32.mrb[0].mxu0
          %v2110 = vpop.f32.mrb[0].mxu0
          %v2111 = vadd.f32 %v2043, %v2110
          %v2112 = vpop.f32.mrb[0].mxu0
          %2113 = vdwg.mxu0
          %v2114 = vadd.f32 %v1934, %v2108
          %v2115 = vadd.f32 %v1935, %v2111
          %s2116 = scalar_lea.vmem [#allocation25], %s1220
          %v2117 = vld [vmem:[%s2116] sm:$0x1]
          %s2118 = scalar_lea.vmem [#allocation26], %s1220
          %v2119 = vld [vmem:[%s2118] sm:$0x1]
          %v2120 = vsel %vm1263, %v2114, 0.0
          %2121 = vadd.xlane.f32.xlu0 %v2120
          %v2122 = vpop.xlane.xlu0 %2121
          %v2123 = vsel %vm1263, %v2115, 0.0
          %2124 = vadd.xlane.f32.xlu0 %v2123
          %v2125 = vpop.xlane.xlu0 %2124
          %v2126 = vmul.f32 %v2122, %v1899
          %v2127 = vmul.f32 %v2125, %v1899
          %v2128 = vsub.f32 %v2114, %v2126
          %v2129 = vsub.f32 %v2115, %v2127
          %v2130 = vmul.f32 %v2128, %v2128
          %v2131 = vmul.f32 %v2129, %v2129
          %v2132 = vsel %vm1263, %v2130, 0.0
          %2133 = vadd.xlane.f32.xlu0 %v2132
          %v2134 = vpop.xlane.xlu0 %2133
          %v2135 = vsel %vm1263, %v2131, 0.0
          %2136 = vadd.xlane.f32.xlu0 %v2135
          %v2137 = vpop.xlane.xlu0 %2136
          %v2138 = vmul.f32 %v2134, %v1899
          %v2139 = vmul.f32 %v2137, %v1899
          %v2140 = vadd.f32 %v2138, 1e-05
          %v2141 = vadd.f32 %v2139, 1e-05
          %v2142 = vrsqrt.pop %v2140
          %v2143 = vrsqrt.pop %v2141
          %v2144 = vmul.f32 %v2128, %v2142
          %v2145 = vmul.f32 %v2129, %v2143
          %v2147 = vlaneseq
          %v2148 = vshrl.u32 %v2147, 7
          %v2149 = vsub.s32 0, %v2148
          %v2150 = vrot.slane %v2117, %v2149
          %v2152 = vmul.f32 %v2144, %v2150
          %v2153 = vmul.f32 %v2145, %v2150
          %v2155 = vlaneseq
          %v2156 = vshrl.u32 %v2155, 7
          %v2157 = vsub.s32 0, %v2156
          %v2158 = vrot.slane %v2119, %v2157
          %v2160 = vadd.f32 %v2152, %v2158
          %v2161 = vadd.f32 %v2153, %v2158
        $region233: #{tpu_custom_call.1} parent=123 // loop_footer
          %s1224 = sadd.s32 1, %s1220
        $region234: #{tpu_custom_call.1} parent=123 // loop_footer_branch
          %1219 = sbr.rel target = $region230
        $region235: #{tpu_custom_call.1} parent=123 // loop_exit
          _
        %v2162 = vld [vmem:[#allocation5] sm:$0xf]
        %v2163 = vpack.c.bf16 %v1226, %v1225
        %vm2164 = vcmask 130048
        %v2166 = vsel %vm2164, %v2162, 0
        %2168 = vmatprep.subr.bf16.mxu0 0
        %2169 = vmatpush1.bf16.msra.mxu0 %v2163
        %2170 = vmatprep.subr.bf16.mxu0 0
        %2171 = vmatpush1.bf16.msra.mxu0 0
        %2172 = vmatprep.subr.bf16.mxu0 0
        %2173 = vmatpush1.bf16.msra.mxu0 0
        %2174 = vmatprep.subr.bf16.mxu0 0
        %2175 = vmatpush1.bf16.msra.mxu0 0
        %2176 = vmatprep.subr.bf16.mxu0 0
        %2177 = vmatpush1.bf16.msra.mxu0 0
        %2178 = vmatprep.subr.bf16.mxu0 0
        %2179 = vmatpush1.bf16.msra.mxu0 0
        %2180 = vmatprep.subr.bf16.mxu0 0
        %2181 = vmatpush1.bf16.msra.mxu0 0
        %2182 = vmatprep.subr.bf16.mxu0 0
        %2183 = vmatpush1.bf16.msra.mxu0 0
        %2184 = vmatprep.subr.bf16.mxu0 0
        %2185 = vmatpush1.bf16.msra.mxu0 0
        %2186 = vmatprep.subr.bf16.mxu0 0
        %2187 = vmatpush1.bf16.msra.mxu0 0
        %2188 = vmatprep.subr.bf16.mxu0 0
        %2189 = vmatpush1.bf16.msra.mxu0 0
        %2190 = vmatprep.subr.bf16.mxu0 0
        %2191 = vmatpush1.bf16.msra.mxu0 0
        %2192 = vmatprep.subr.bf16.mxu0 0
        %2193 = vmatpush1.bf16.msra.mxu0 0
        %2194 = vmatprep.subr.bf16.mxu0 0
        %2195 = vmatpush1.bf16.msra.mxu0 0
        %2196 = vmatprep.subr.bf16.mxu0 0
        %2197 = vmatpush1.bf16.msra.mxu0 0
        %2198 = vmatprep.subr.bf16.mxu0 0
        %2199 = vmatpush1.bf16.msra.mxu0 0
        %2200 = vmatprep.mubr.bf16.mxu0 0
        %2201 = vmatmul.mubr.bf16.gmra.mrb[0].mxu0 %v2166
        %v2202 = vpop.f32.mrb[0].mxu0
        %v2203 = vadd.f32 0.0, %v2202
        %v2204 = vpop.f32.mrb[0].mxu0
        %v2205 = vpop.f32.mrb[0].mxu0
        %v2206 = vpop.f32.mrb[0].mxu0
        %2207 = vdwg.mxu0
        %v2208 = vld [vmem:[#allocation28] sm:$0xf]
        %v2209 = vld [vmem:[#allocation28 + $0x4] sm:$0xf]
        %v2210 = vld [vmem:[#allocation28 + $0x8] sm:$0xf]
        %v2211 = vld [vmem:[#allocation28 + $0xc] sm:$0xf]
        %v2212 = vld [vmem:[#allocation29] sm:$0x1]
        %v2213 = vld [vmem:[#allocation31] sm:$0xf]
        %v2214 = vld [vmem:[#allocation31 + $0x4] sm:$0xf]
        %v2215 = vld [vmem:[#allocation31 + $0x8] sm:$0xf]
        %v2216 = vld [vmem:[#allocation31 + $0xc] sm:$0xf]
        %v2217 = vld [vmem:[#allocation32] sm:$0x1]
        %v2218 = vpack.c.bf16 %v2203, %v2203
        %v2220 = vlaneseq
        %v2221 = vshrl.u32 %v2220, 7
        %v2222 = vsub.s32 0, %v2221
        %v2223 = vrot.slane %v2212, %v2222
        %v2229 = vunpack.c.l.b16 %v2208
        %v2230 = vunpack.c.l.b16 %v2209
        %v2231 = vunpack.c.l.b16 %v2210
        %v2232 = vunpack.c.l.b16 %v2211
        %v2233 = vpack.c.b16 %v2230, %v2229
        %v2234 = vpack.c.b16 %v2232, %v2231
        %vm2237 = vcmask 261120
        %v2239 = vsel %vm2237, %v2218, 0
        %2241 = vmatprep.subr.bf16.mxu0 0
        %2242 = vmatpush1.bf16.msra.mxu0 %v2233
        %2243 = vmatprep.subr.bf16.mxu0 0
        %2244 = vmatpush1.bf16.msra.mxu0 %v2234
        %2245 = vmatprep.subr.bf16.mxu0 0
        %2246 = vmatpush1.bf16.msra.mxu0 0
        %2247 = vmatprep.subr.bf16.mxu0 0
        %2248 = vmatpush1.bf16.msra.mxu0 0
        %2249 = vmatprep.subr.bf16.mxu0 0
        %2250 = vmatpush1.bf16.msra.mxu0 0
        %2251 = vmatprep.subr.bf16.mxu0 0
        %2252 = vmatpush1.bf16.msra.mxu0 0
        %2253 = vmatprep.subr.bf16.mxu0 0
        %2254 = vmatpush1.bf16.msra.mxu0 0
        %2255 = vmatprep.subr.bf16.mxu0 0
        %2256 = vmatpush1.bf16.msra.mxu0 0
        %2257 = vmatprep.subr.bf16.mxu0 0
        %2258 = vmatpush1.bf16.msra.mxu0 0
        %2259 = vmatprep.subr.bf16.mxu0 0
        %2260 = vmatpush1.bf16.msra.mxu0 0
        %2261 = vmatprep.subr.bf16.mxu0 0
        %2262 = vmatpush1.bf16.msra.mxu0 0
        %2263 = vmatprep.subr.bf16.mxu0 0
        %2264 = vmatpush1.bf16.msra.mxu0 0
        %2265 = vmatprep.subr.bf16.mxu0 0
        %2266 = vmatpush1.bf16.msra.mxu0 0
        %2267 = vmatprep.subr.bf16.mxu0 0
        %2268 = vmatpush1.bf16.msra.mxu0 0
        %2269 = vmatprep.subr.bf16.mxu0 0
        %2270 = vmatpush1.bf16.msra.mxu0 0
        %2271 = vmatprep.subr.bf16.mxu0 0
        %2272 = vmatpush1.bf16.msra.mxu0 0
        %2273 = vmatprep.mubr.bf16.mxu0 0
        %2274 = vmatmul.mubr.bf16.gmra.mrb[0].mxu0 %v2239
        %v2275 = vpop.f32.mrb[0].mxu0
        %v2276 = vadd.f32 %v2223, %v2275
        %v2277 = vpop.f32.mrb[0].mxu0
        %v2278 = vpop.f32.mrb[0].mxu0
        %v2279 = vpop.f32.mrb[0].mxu0
        %2280 = vdwg.mxu0
        %v2281 = vpack.c.bf16 %v2276, %v2276
        %2283 = vrot.lane.b32.xlu0 %v2281, 96
        %v2284 = vpop.permute.xlu0 %2283
        %v2286 = vsel %vm1170, %v2281, 0
        %v2289 = vsel %vm1170, %v2284, 0
        %2291 = vmatprep.subr.bf16.mxu0 0
        %2292 = vmatpush1.bf16.xpose.msra.mxu0 %v2289
        %2293 = vmatprep.subr.bf16.mxu0 0
        %2294 = vmatpush1.bf16.xpose.msra.mxu0 0
        %2295 = vmatprep.subr.bf16.mxu0 0
        %2296 = vmatpush1.bf16.xpose.msra.mxu0 0
        %2297 = vmatprep.subr.bf16.mxu0 0
        %2298 = vmatpush1.bf16.xpose.msra.mxu0 0
        %2299 = vmatprep.subr.bf16.mxu0 0
        %2300 = vmatpush1.bf16.xpose.msra.mxu0 0
        %2301 = vmatprep.subr.bf16.mxu0 0
        %2302 = vmatpush1.bf16.xpose.msra.mxu0 0
        %2303 = vmatprep.subr.bf16.mxu0 0
        %2304 = vmatpush1.bf16.xpose.msra.mxu0 0
        %2305 = vmatprep.subr.bf16.mxu0 0
        %2306 = vmatpush1.bf16.xpose.msra.mxu0 0
        %2307 = vmatprep.subr.bf16.mxu0 0
        %2308 = vmatpush1.bf16.xpose.msra.mxu0 0
        %2309 = vmatprep.subr.bf16.mxu0 0
        %2310 = vmatpush1.bf16.xpose.msra.mxu0 0
        %2311 = vmatprep.subr.bf16.mxu0 0
        %2312 = vmatpush1.bf16.xpose.msra.mxu0 0
        %2313 = vmatprep.subr.bf16.mxu0 0
        %2314 = vmatpush1.bf16.xpose.msra.mxu0 0
        %2315 = vmatprep.subr.bf16.mxu0 0
        %2316 = vmatpush1.bf16.xpose.msra.mxu0 0
        %2317 = vmatprep.subr.bf16.mxu0 0
        %2318 = vmatpush1.bf16.xpose.msra.mxu0 0
        %2319 = vmatprep.subr.bf16.mxu0 0
        %2320 = vmatpush1.bf16.xpose.msra.mxu0 0
        %2321 = vmatprep.subr.bf16.mxu0 0
        %2322 = vmatpush1.bf16.xpose.msra.mxu0 0
        %2323 = vmatprep.mubr.bf16.mxu0 0
        %2324 = vmatmul.mubr.bf16.gmra.mrb[0].mxu0 %v2286
        %v2325 = vpop.f32.mrb[0].mxu0
        %v2326 = vadd.f32 0.0, %v2325
        %v2327 = vpop.f32.mrb[0].mxu0
        %v2328 = vpop.f32.mrb[0].mxu0
        %v2329 = vpop.f32.mrb[0].mxu0
        %2330 = vdwg.mxu0
        %v2331 = vsel %vm1170, %v2326, -inf
        %2332 = vmax.xlane.f32.xlu0 %v2331
        %v2333 = vpop.xlane.xlu0 %2332
        %v2334 = vsub.f32 %v2326, %v2333
        %v2335 = vmul.f32 %v2334, 1.442695
        %v2336 = vpow.pop %v2335
        %v2337 = vsel %vm1170, %v2336, 0.0
        %2338 = vadd.xlane.f32.xlu0 %v2337
        %v2339 = vpop.xlane.xlu0 %2338
        %v2340 = vrcp.pop %v2339
        %v2341 = vmul.f32 %v2336, %v2340
        %v2342 = vpack.c.bf16 %v2341, %v2341
        %2343 = vrot.lane.b32.xlu0 %v2281, 64
        %v2344 = vpop.permute.xlu0 %2343
        %v2346 = vsel %vm1170, %v2342, 0
        %v2349 = vsel %vm1174, %v2344, 0
        %2351 = vmatprep.subr.bf16.mxu0 0
        %2352 = vmatpush1.bf16.msra.mxu0 %v2349
        %2353 = vmatprep.subr.bf16.mxu0 0
        %2354 = vmatpush1.bf16.msra.mxu0 0
        %2355 = vmatprep.subr.bf16.mxu0 0
        %2356 = vmatpush1.bf16.msra.mxu0 0
        %2357 = vmatprep.subr.bf16.mxu0 0
        %2358 = vmatpush1.bf16.msra.mxu0 0
        %2359 = vmatprep.subr.bf16.mxu0 0
        %2360 = vmatpush1.bf16.msra.mxu0 0
        %2361 = vmatprep.subr.bf16.mxu0 0
        %2362 = vmatpush1.bf16.msra.mxu0 0
        %2363 = vmatprep.subr.bf16.mxu0 0
        %2364 = vmatpush1.bf16.msra.mxu0 0
        %2365 = vmatprep.subr.bf16.mxu0 0
        %2366 = vmatpush1.bf16.msra.mxu0 0
        %2367 = vmatprep.subr.bf16.mxu0 0
        %2368 = vmatpush1.bf16.msra.mxu0 0
        %2369 = vmatprep.subr.bf16.mxu0 0
        %2370 = vmatpush1.bf16.msra.mxu0 0
        %2371 = vmatprep.subr.bf16.mxu0 0
        %2372 = vmatpush1.bf16.msra.mxu0 0
        %2373 = vmatprep.subr.bf16.mxu0 0
        %2374 = vmatpush1.bf16.msra.mxu0 0
        %2375 = vmatprep.subr.bf16.mxu0 0
        %2376 = vmatpush1.bf16.msra.mxu0 0
        %2377 = vmatprep.subr.bf16.mxu0 0
        %2378 = vmatpush1.bf16.msra.mxu0 0
        %2379 = vmatprep.subr.bf16.mxu0 0
        %2380 = vmatpush1.bf16.msra.mxu0 0
        %2381 = vmatprep.subr.bf16.mxu0 0
        %2382 = vmatpush1.bf16.msra.mxu0 0
        %2383 = vmatprep.mubr.bf16.mxu0 0
        %2384 = vmatmul.mubr.bf16.gmra.mrb[0].mxu0 %v2346
        %v2385 = vpop.f32.mrb[0].mxu0
        %v2386 = vadd.f32 0.0, %v2385
        %v2387 = vpop.f32.mrb[0].mxu0
        %v2388 = vpop.f32.mrb[0].mxu0
        %v2389 = vpop.f32.mrb[0].mxu0
        %2390 = vdwg.mxu0
        %2391 = vrot.lane.b32.xlu0 %v2281, 120
        %v2392 = vpop.permute.xlu0 %2391
        %2393 = vrot.lane.b32.xlu0 %v2281, 88
        %v2394 = vpop.permute.xlu0 %2393
        %v2396 = vsel %vm1170, %v2392, 0
        %v2399 = vsel %vm1170, %v2394, 0
        %2401 = vmatprep.subr.bf16.mxu0 0
        %2402 = vmatpush1.bf16.xpose.msra.mxu0 %v2399
        %2403 = vmatprep.subr.bf16.mxu0 0
        %2404 = vmatpush1.bf16.xpose.msra.mxu0 0
        %2405 = vmatprep.subr.bf16.mxu0 0
        %2406 = vmatpush1.bf16.xpose.msra.mxu0 0
        %2407 = vmatprep.subr.bf16.mxu0 0
        %2408 = vmatpush1.bf16.xpose.msra.mxu0 0
        %2409 = vmatprep.subr.bf16.mxu0 0
        %2410 = vmatpush1.bf16.xpose.msra.mxu0 0
        %2411 = vmatprep.subr.bf16.mxu0 0
        %2412 = vmatpush1.bf16.xpose.msra.mxu0 0
        %2413 = vmatprep.subr.bf16.mxu0 0
        %2414 = vmatpush1.bf16.xpose.msra.mxu0 0
        %2415 = vmatprep.subr.bf16.mxu0 0
        %2416 = vmatpush1.bf16.xpose.msra.mxu0 0
        %2417 = vmatprep.subr.bf16.mxu0 0
        %2418 = vmatpush1.bf16.xpose.msra.mxu0 0
        %2419 = vmatprep.subr.bf16.mxu0 0
        %2420 = vmatpush1.bf16.xpose.msra.mxu0 0
        %2421 = vmatprep.subr.bf16.mxu0 0
        %2422 = vmatpush1.bf16.xpose.msra.mxu0 0
        %2423 = vmatprep.subr.bf16.mxu0 0
        %2424 = vmatpush1.bf16.xpose.msra.mxu0 0
        %2425 = vmatprep.subr.bf16.mxu0 0
        %2426 = vmatpush1.bf16.xpose.msra.mxu0 0
        %2427 = vmatprep.subr.bf16.mxu0 0
        %2428 = vmatpush1.bf16.xpose.msra.mxu0 0
        %2429 = vmatprep.subr.bf16.mxu0 0
        %2430 = vmatpush1.bf16.xpose.msra.mxu0 0
        %2431 = vmatprep.subr.bf16.mxu0 0
        %2432 = vmatpush1.bf16.xpose.msra.mxu0 0
        %2433 = vmatprep.mubr.bf16.mxu0 0
        %2434 = vmatmul.mubr.bf16.gmra.mrb[0].mxu0 %v2396
        %v2435 = vpop.f32.mrb[0].mxu0
        %v2436 = vadd.f32 0.0, %v2435
        %v2437 = vpop.f32.mrb[0].mxu0
        %v2438 = vpop.f32.mrb[0].mxu0
        %v2439 = vpop.f32.mrb[0].mxu0
        %2440 = vdwg.mxu0
        %v2441 = vsel %vm1170, %v2436, -inf
        %2442 = vmax.xlane.f32.xlu0 %v2441
        %v2443 = vpop.xlane.xlu0 %2442
        %v2444 = vsub.f32 %v2436, %v2443
        %v2445 = vmul.f32 %v2444, 1.442695
        %v2446 = vpow.pop %v2445
        %v2447 = vsel %vm1170, %v2446, 0.0
        %2448 = vadd.xlane.f32.xlu0 %v2447
        %v2449 = vpop.xlane.xlu0 %2448
        %v2450 = vrcp.pop %v2449
        %v2451 = vmul.f32 %v2446, %v2450
        %v2452 = vpack.c.bf16 %v2451, %v2451
        %2453 = vrot.lane.b32.xlu0 %v2281, 56
        %v2454 = vpop.permute.xlu0 %2453
        %v2456 = vsel %vm1170, %v2452, 0
        %v2459 = vsel %vm1174, %v2454, 0
        %2461 = vmatprep.subr.bf16.mxu0 0
        %2462 = vmatpush1.bf16.msra.mxu0 %v2459
        %2463 = vmatprep.subr.bf16.mxu0 0
        %2464 = vmatpush1.bf16.msra.mxu0 0
        %2465 = vmatprep.subr.bf16.mxu0 0
        %2466 = vmatpush1.bf16.msra.mxu0 0
        %2467 = vmatprep.subr.bf16.mxu0 0
        %2468 = vmatpush1.bf16.msra.mxu0 0
        %2469 = vmatprep.subr.bf16.mxu0 0
        %2470 = vmatpush1.bf16.msra.mxu0 0
        %2471 = vmatprep.subr.bf16.mxu0 0
        %2472 = vmatpush1.bf16.msra.mxu0 0
        %2473 = vmatprep.subr.bf16.mxu0 0
        %2474 = vmatpush1.bf16.msra.mxu0 0
        %2475 = vmatprep.subr.bf16.mxu0 0
        %2476 = vmatpush1.bf16.msra.mxu0 0
        %2477 = vmatprep.subr.bf16.mxu0 0
        %2478 = vmatpush1.bf16.msra.mxu0 0
        %2479 = vmatprep.subr.bf16.mxu0 0
        %2480 = vmatpush1.bf16.msra.mxu0 0
        %2481 = vmatprep.subr.bf16.mxu0 0
        %2482 = vmatpush1.bf16.msra.mxu0 0
        %2483 = vmatprep.subr.bf16.mxu0 0
        %2484 = vmatpush1.bf16.msra.mxu0 0
        %2485 = vmatprep.subr.bf16.mxu0 0
        %2486 = vmatpush1.bf16.msra.mxu0 0
        %2487 = vmatprep.subr.bf16.mxu0 0
        %2488 = vmatpush1.bf16.msra.mxu0 0
        %2489 = vmatprep.subr.bf16.mxu0 0
        %2490 = vmatpush1.bf16.msra.mxu0 0
        %2491 = vmatprep.subr.bf16.mxu0 0
        %2492 = vmatpush1.bf16.msra.mxu0 0
        %2493 = vmatprep.mubr.bf16.mxu0 0
        %2494 = vmatmul.mubr.bf16.gmra.mrb[0].mxu0 %v2456
        %v2495 = vpop.f32.mrb[0].mxu0
        %v2496 = vadd.f32 0.0, %v2495
        %v2497 = vpop.f32.mrb[0].mxu0
        %v2498 = vpop.f32.mrb[0].mxu0
        %v2499 = vpop.f32.mrb[0].mxu0
        %2500 = vdwg.mxu0
        %2501 = vrot.lane.b32.xlu0 %v2281, 112
        %v2502 = vpop.permute.xlu0 %2501
        %2503 = vrot.lane.b32.xlu0 %v2281, 80
        %v2504 = vpop.permute.xlu0 %2503
        %v2506 = vsel %vm1170, %v2502, 0
        %v2509 = vsel %vm1170, %v2504, 0
        %2511 = vmatprep.subr.bf16.mxu0 0
        %2512 = vmatpush1.bf16.xpose.msra.mxu0 %v2509
        %2513 = vmatprep.subr.bf16.mxu0 0
        %2514 = vmatpush1.bf16.xpose.msra.mxu0 0
        %2515 = vmatprep.subr.bf16.mxu0 0
        %2516 = vmatpush1.bf16.xpose.msra.mxu0 0
        %2517 = vmatprep.subr.bf16.mxu0 0
        %2518 = vmatpush1.bf16.xpose.msra.mxu0 0
        %2519 = vmatprep.subr.bf16.mxu0 0
        %2520 = vmatpush1.bf16.xpose.msra.mxu0 0
        %2521 = vmatprep.subr.bf16.mxu0 0
        %2522 = vmatpush1.bf16.xpose.msra.mxu0 0
        %2523 = vmatprep.subr.bf16.mxu0 0
        %2524 = vmatpush1.bf16.xpose.msra.mxu0 0
        %2525 = vmatprep.subr.bf16.mxu0 0
        %2526 = vmatpush1.bf16.xpose.msra.mxu0 0
        %2527 = vmatprep.subr.bf16.mxu0 0
        %2528 = vmatpush1.bf16.xpose.msra.mxu0 0
        %2529 = vmatprep.subr.bf16.mxu0 0
        %2530 = vmatpush1.bf16.xpose.msra.mxu0 0
        %2531 = vmatprep.subr.bf16.mxu0 0
        %2532 = vmatpush1.bf16.xpose.msra.mxu0 0
        %2533 = vmatprep.subr.bf16.mxu0 0
        %2534 = vmatpush1.bf16.xpose.msra.mxu0 0
        %2535 = vmatprep.subr.bf16.mxu0 0
        %2536 = vmatpush1.bf16.xpose.msra.mxu0 0
        %2537 = vmatprep.subr.bf16.mxu0 0
        %2538 = vmatpush1.bf16.xpose.msra.mxu0 0
        %2539 = vmatprep.subr.bf16.mxu0 0
        %2540 = vmatpush1.bf16.xpose.msra.mxu0 0
        %2541 = vmatprep.subr.bf16.mxu0 0
        %2542 = vmatpush1.bf16.xpose.msra.mxu0 0
        %2543 = vmatprep.mubr.bf16.mxu0 0
        %2544 = vmatmul.mubr.bf16.gmra.mrb[0].mxu0 %v2506
        %v2545 = vpop.f32.mrb[0].mxu0
        %v2546 = vadd.f32 0.0, %v2545
        %v2547 = vpop.f32.mrb[0].mxu0
        %v2548 = vpop.f32.mrb[0].mxu0
        %v2549 = vpop.f32.mrb[0].mxu0
        %2550 = vdwg.mxu0
        %v2551 = vsel %vm1170, %v2546, -inf
        %2552 = vmax.xlane.f32.xlu0 %v2551
        %v2553 = vpop.xlane.xlu0 %2552
        %v2554 = vsub.f32 %v2546, %v2553
        %v2555 = vmul.f32 %v2554, 1.442695
        %v2556 = vpow.pop %v2555
        %v2557 = vsel %vm1170, %v2556, 0.0
        %2558 = vadd.xlane.f32.xlu0 %v2557
        %v2559 = vpop.xlane.xlu0 %2558
        %v2560 = vrcp.pop %v2559
        %v2561 = vmul.f32 %v2556, %v2560
        %v2562 = vpack.c.bf16 %v2561, %v2561
        %2563 = vrot.lane.b32.xlu0 %v2281, 48
        %v2564 = vpop.permute.xlu0 %2563
        %v2566 = vsel %vm1170, %v2562, 0
        %v2569 = vsel %vm1174, %v2564, 0
        %2571 = vmatprep.subr.bf16.mxu0 0
        %2572 = vmatpush1.bf16.msra.mxu0 %v2569
        %2573 = vmatprep.subr.bf16.mxu0 0
        %2574 = vmatpush1.bf16.msra.mxu0 0
        %2575 = vmatprep.subr.bf16.mxu0 0
        %2576 = vmatpush1.bf16.msra.mxu0 0
        %2577 = vmatprep.subr.bf16.mxu0 0
        %2578 = vmatpush1.bf16.msra.mxu0 0
        %2579 = vmatprep.subr.bf16.mxu0 0
        %2580 = vmatpush1.bf16.msra.mxu0 0
        %2581 = vmatprep.subr.bf16.mxu0 0
        %2582 = vmatpush1.bf16.msra.mxu0 0
        %2583 = vmatprep.subr.bf16.mxu0 0
        %2584 = vmatpush1.bf16.msra.mxu0 0
        %2585 = vmatprep.subr.bf16.mxu0 0
        %2586 = vmatpush1.bf16.msra.mxu0 0
        %2587 = vmatprep.subr.bf16.mxu0 0
        %2588 = vmatpush1.bf16.msra.mxu0 0
        %2589 = vmatprep.subr.bf16.mxu0 0
        %2590 = vmatpush1.bf16.msra.mxu0 0
        %2591 = vmatprep.subr.bf16.mxu0 0
        %2592 = vmatpush1.bf16.msra.mxu0 0
        %2593 = vmatprep.subr.bf16.mxu0 0
        %2594 = vmatpush1.bf16.msra.mxu0 0
        %2595 = vmatprep.subr.bf16.mxu0 0
        %2596 = vmatpush1.bf16.msra.mxu0 0
        %2597 = vmatprep.subr.bf16.mxu0 0
        %2598 = vmatpush1.bf16.msra.mxu0 0
        %2599 = vmatprep.subr.bf16.mxu0 0
        %2600 = vmatpush1.bf16.msra.mxu0 0
        %2601 = vmatprep.subr.bf16.mxu0 0
        %2602 = vmatpush1.bf16.msra.mxu0 0
        %2603 = vmatprep.mubr.bf16.mxu0 0
        %2604 = vmatmul.mubr.bf16.gmra.mrb[0].mxu0 %v2566
        %v2605 = vpop.f32.mrb[0].mxu0
        %v2606 = vadd.f32 0.0, %v2605
        %v2607 = vpop.f32.mrb[0].mxu0
        %v2608 = vpop.f32.mrb[0].mxu0
        %v2609 = vpop.f32.mrb[0].mxu0
        %2610 = vdwg.mxu0
        %2611 = vrot.lane.b32.xlu0 %v2281, 104
        %v2612 = vpop.permute.xlu0 %2611
        %2613 = vrot.lane.b32.xlu0 %v2281, 72
        %v2614 = vpop.permute.xlu0 %2613
        %v2616 = vsel %vm1170, %v2612, 0
        %v2619 = vsel %vm1170, %v2614, 0
        %2621 = vmatprep.subr.bf16.mxu0 0
        %2622 = vmatpush1.bf16.xpose.msra.mxu0 %v2619
        %2623 = vmatprep.subr.bf16.mxu0 0
        %2624 = vmatpush1.bf16.xpose.msra.mxu0 0
        %2625 = vmatprep.subr.bf16.mxu0 0
        %2626 = vmatpush1.bf16.xpose.msra.mxu0 0
        %2627 = vmatprep.subr.bf16.mxu0 0
        %2628 = vmatpush1.bf16.xpose.msra.mxu0 0
        %2629 = vmatprep.subr.bf16.mxu0 0
        %2630 = vmatpush1.bf16.xpose.msra.mxu0 0
        %2631 = vmatprep.subr.bf16.mxu0 0
        %2632 = vmatpush1.bf16.xpose.msra.mxu0 0
        %2633 = vmatprep.subr.bf16.mxu0 0
        %2634 = vmatpush1.bf16.xpose.msra.mxu0 0
        %2635 = vmatprep.subr.bf16.mxu0 0
        %2636 = vmatpush1.bf16.xpose.msra.mxu0 0
        %2637 = vmatprep.subr.bf16.mxu0 0
        %2638 = vmatpush1.bf16.xpose.msra.mxu0 0
        %2639 = vmatprep.subr.bf16.mxu0 0
        %2640 = vmatpush1.bf16.xpose.msra.mxu0 0
        %2641 = vmatprep.subr.bf16.mxu0 0
        %2642 = vmatpush1.bf16.xpose.msra.mxu0 0
        %2643 = vmatprep.subr.bf16.mxu0 0
        %2644 = vmatpush1.bf16.xpose.msra.mxu0 0
        %2645 = vmatprep.subr.bf16.mxu0 0
        %2646 = vmatpush1.bf16.xpose.msra.mxu0 0
        %2647 = vmatprep.subr.bf16.mxu0 0
        %2648 = vmatpush1.bf16.xpose.msra.mxu0 0
        %2649 = vmatprep.subr.bf16.mxu0 0
        %2650 = vmatpush1.bf16.xpose.msra.mxu0 0
        %2651 = vmatprep.subr.bf16.mxu0 0
        %2652 = vmatpush1.bf16.xpose.msra.mxu0 0
        %2653 = vmatprep.mubr.bf16.mxu0 0
        %2654 = vmatmul.mubr.bf16.gmra.mrb[0].mxu0 %v2616
        %v2655 = vpop.f32.mrb[0].mxu0
        %v2656 = vadd.f32 0.0, %v2655
        %v2657 = vpop.f32.mrb[0].mxu0
        %v2658 = vpop.f32.mrb[0].mxu0
        %v2659 = vpop.f32.mrb[0].mxu0
        %2660 = vdwg.mxu0
        %v2661 = vsel %vm1170, %v2656, -inf
        %2662 = vmax.xlane.f32.xlu0 %v2661
        %v2663 = vpop.xlane.xlu0 %2662
        %v2664 = vsub.f32 %v2656, %v2663
        %v2665 = vmul.f32 %v2664, 1.442695
        %v2666 = vpow.pop %v2665
        %v2667 = vsel %vm1170, %v2666, 0.0
        %2668 = vadd.xlane.f32.xlu0 %v2667
        %v2669 = vpop.xlane.xlu0 %2668
        %v2670 = vrcp.pop %v2669
        %v2671 = vmul.f32 %v2666, %v2670
        %v2672 = vpack.c.bf16 %v2671, %v2671
        %2673 = vrot.lane.b32.xlu0 %v2281, 40
        %v2674 = vpop.permute.xlu0 %2673
        %v2676 = vsel %vm1170, %v2672, 0
        %v2679 = vsel %vm1174, %v2674, 0
        %2681 = vmatprep.subr.bf16.mxu0 0
        %2682 = vmatpush1.bf16.msra.mxu0 %v2679
        %2683 = vmatprep.subr.bf16.mxu0 0
        %2684 = vmatpush1.bf16.msra.mxu0 0
        %2685 = vmatprep.subr.bf16.mxu0 0
        %2686 = vmatpush1.bf16.msra.mxu0 0
        %2687 = vmatprep.subr.bf16.mxu0 0
        %2688 = vmatpush1.bf16.msra.mxu0 0
        %2689 = vmatprep.subr.bf16.mxu0 0
        %2690 = vmatpush1.bf16.msra.mxu0 0
        %2691 = vmatprep.subr.bf16.mxu0 0
        %2692 = vmatpush1.bf16.msra.mxu0 0
        %2693 = vmatprep.subr.bf16.mxu0 0
        %2694 = vmatpush1.bf16.msra.mxu0 0
        %2695 = vmatprep.subr.bf16.mxu0 0
        %2696 = vmatpush1.bf16.msra.mxu0 0
        %2697 = vmatprep.subr.bf16.mxu0 0
        %2698 = vmatpush1.bf16.msra.mxu0 0
        %2699 = vmatprep.subr.bf16.mxu0 0
        %2700 = vmatpush1.bf16.msra.mxu0 0
        %2701 = vmatprep.subr.bf16.mxu0 0
        %2702 = vmatpush1.bf16.msra.mxu0 0
        %2703 = vmatprep.subr.bf16.mxu0 0
        %2704 = vmatpush1.bf16.msra.mxu0 0
        %2705 = vmatprep.subr.bf16.mxu0 0
        %2706 = vmatpush1.bf16.msra.mxu0 0
        %2707 = vmatprep.subr.bf16.mxu0 0
        %2708 = vmatpush1.bf16.msra.mxu0 0
        %2709 = vmatprep.subr.bf16.mxu0 0
        %2710 = vmatpush1.bf16.msra.mxu0 0
        %2711 = vmatprep.subr.bf16.mxu0 0
        %2712 = vmatpush1.bf16.msra.mxu0 0
        %2713 = vmatprep.mubr.bf16.mxu0 0
        %2714 = vmatmul.mubr.bf16.gmra.mrb[0].mxu0 %v2676
        %v2715 = vpop.f32.mrb[0].mxu0
        %v2716 = vadd.f32 0.0, %v2715
        %v2717 = vpop.f32.mrb[0].mxu0
        %v2718 = vpop.f32.mrb[0].mxu0
        %v2719 = vpop.f32.mrb[0].mxu0
        %2720 = vdwg.mxu0
        %2722 = vrot.lane.b32.xlu0 %v2496, 8
        %v2723 = vpop.permute.xlu0 %2722
        %2726 = vrot.lane.b32.xlu0 %v2606, 16
        %v2727 = vpop.permute.xlu0 %2726
        %2730 = vrot.lane.b32.xlu0 %v2716, 24
        %v2731 = vpop.permute.xlu0 %2730
        %v2733 = vsel %vm1170, %v2386, %v2723
        %v2734 = vsel %vm2164, %v2733, %v2727
        %vm2735 = vcmask 195584
        %v2736 = vsel %vm2735, %v2734, %v2731
        %v2737 = vpack.c.bf16 %v2736, %v2736
        %v2739 = vlaneseq
        %v2740 = vshrl.u32 %v2739, 7
        %v2741 = vsub.s32 0, %v2740
        %v2742 = vrot.slane %v2217, %v2741
        %v2748 = vunpack.c.l.b16 %v2213
        %v2749 = vunpack.c.l.b16 %v2214
        %v2750 = vunpack.c.l.b16 %v2215
        %v2751 = vunpack.c.l.b16 %v2216
        %v2752 = vpack.c.b16 %v2749, %v2748
        %v2753 = vpack.c.b16 %v2751, %v2750
        %v2757 = vsel %vm2237, %v2737, 0
        %2759 = vmatprep.subr.bf16.mxu0 0
        %2760 = vmatpush1.bf16.msra.mxu0 %v2752
        %2761 = vmatprep.subr.bf16.mxu0 0
        %2762 = vmatpush1.bf16.msra.mxu0 %v2753
        %2763 = vmatprep.subr.bf16.mxu0 0
        %2764 = vmatpush1.bf16.msra.mxu0 0
        %2765 = vmatprep.subr.bf16.mxu0 0
        %2766 = vmatpush1.bf16.msra.mxu0 0
        %2767 = vmatprep.subr.bf16.mxu0 0
        %2768 = vmatpush1.bf16.msra.mxu0 0
        %2769 = vmatprep.subr.bf16.mxu0 0
        %2770 = vmatpush1.bf16.msra.mxu0 0
        %2771 = vmatprep.subr.bf16.mxu0 0
        %2772 = vmatpush1.bf16.msra.mxu0 0
        %2773 = vmatprep.subr.bf16.mxu0 0
        %2774 = vmatpush1.bf16.msra.mxu0 0
        %2775 = vmatprep.subr.bf16.mxu0 0
        %2776 = vmatpush1.bf16.msra.mxu0 0
        %2777 = vmatprep.subr.bf16.mxu0 0
        %2778 = vmatpush1.bf16.msra.mxu0 0
        %2779 = vmatprep.subr.bf16.mxu0 0
        %2780 = vmatpush1.bf16.msra.mxu0 0
        %2781 = vmatprep.subr.bf16.mxu0 0
        %2782 = vmatpush1.bf16.msra.mxu0 0
        %2783 = vmatprep.subr.bf16.mxu0 0
        %2784 = vmatpush1.bf16.msra.mxu0 0
        %2785 = vmatprep.subr.bf16.mxu0 0
        %2786 = vmatpush1.bf16.msra.mxu0 0
        %2787 = vmatprep.subr.bf16.mxu0 0
        %2788 = vmatpush1.bf16.msra.mxu0 0
        %2789 = vmatprep.subr.bf16.mxu0 0
        %2790 = vmatpush1.bf16.msra.mxu0 0
        %2791 = vmatprep.mubr.bf16.mxu0 0
        %2792 = vmatmul.mubr.bf16.gmra.mrb[0].mxu0 %v2757
        %v2793 = vpop.f32.mrb[0].mxu0
        %v2794 = vadd.f32 %v2742, %v2793
        %v2795 = vpop.f32.mrb[0].mxu0
        %v2796 = vpop.f32.mrb[0].mxu0
        %v2797 = vpop.f32.mrb[0].mxu0
        %2798 = vdwg.mxu0
        %v2800 = vrot.slane %v2794, 1
        %v2802 = vadd.f32 %v2794, %v2800
        %v2803 = vrot.slane %v2794, 2
        %v2805 = vadd.f32 %v2802, %v2803
        %v2806 = vrot.slane %v2794, 3
        %v2808 = vadd.f32 %v2805, %v2806
        %v2809 = vrot.slane %v2794, 4
        %v2811 = vadd.f32 %v2808, %v2809
        %v2812 = vrot.slane %v2794, 5
        %v2814 = vadd.f32 %v2811, %v2812
        %v2815 = vrot.slane %v2794, 6
        %v2817 = vadd.f32 %v2814, %v2815
        %v2818 = vrot.slane %v2794, 7
        %v2820 = vadd.f32 %v2817, %v2818
        %v2821 = vmul.f32 %v2820, 0.125
        %v2822 = vld [vmem:[#allocation34] sm:$0x1]
        %v2823 = vld [vmem:[#allocation35] sm:$0x1]
        %vm2824 = vcmask 253952
        %v2825 = vsel %vm2824, %v2821, 0.0
        %2826 = vadd.xlane.f32.xlu0 %v2825
        %v2827 = vpop.xlane.xlu0 %2826
        %v2828 = vrcp.pop 32.0
        %v2829 = vmul.f32 %v2827, %v2828
        %v2830 = vsub.f32 %v2821, %v2829
        %v2831 = vmul.f32 %v2830, %v2830
        %v2832 = vsel %vm2824, %v2831, 0.0
        %2833 = vadd.xlane.f32.xlu0 %v2832
        %v2834 = vpop.xlane.xlu0 %2833
        %v2835 = vmul.f32 %v2834, %v2828
        %v2836 = vadd.f32 %v2835, 1e-05
        %v2837 = vrsqrt.pop %v2836
        %v2838 = vmul.f32 %v2830, %v2837
        %v2839 = vmul.f32 %v2838, %v2822
        %v2840 = vadd.f32 %v2839, %v2823
        %v2841 = vpack.c.bf16 %v2840, %v2840
        %v2842 = vld [vmem:[#allocation37] sm:$0xf]
        %v2843 = vld [vmem:[#allocation37 + $0x4] sm:$0xf]
        %v2844 = vld [vmem:[#allocation37 + $0x8] sm:$0xf]
        %v2845 = vld [vmem:[#allocation37 + $0xc] sm:$0xf]
        %v2846 = vld [vmem:[#allocation38] sm:$0x1]
        %v2851 = vunpack.c.l.b16 %v2842
        %v2852 = vunpack.c.l.b16 %v2843
        %v2853 = vunpack.c.l.b16 %v2844
        %v2854 = vunpack.c.l.b16 %v2845
        %v2855 = vpack.c.b16 %v2852, %v2851
        %v2856 = vpack.c.b16 %v2854, %v2853
        %v2860 = vsel %vm2237, %v2841, 0
        %2862 = vmatprep.subr.bf16.mxu0 0
        %2863 = vmatpush1.bf16.msra.mxu0 %v2855
        %2864 = vmatprep.subr.bf16.mxu0 0
        %2865 = vmatpush1.bf16.msra.mxu0 %v2856
        %2866 = vmatprep.subr.bf16.mxu0 0
        %2867 = vmatpush1.bf16.msra.mxu0 0
        %2868 = vmatprep.subr.bf16.mxu0 0
        %2869 = vmatpush1.bf16.msra.mxu0 0
        %2870 = vmatprep.subr.bf16.mxu0 0
        %2871 = vmatpush1.bf16.msra.mxu0 0
        %2872 = vmatprep.subr.bf16.mxu0 0
        %2873 = vmatpush1.bf16.msra.mxu0 0
        %2874 = vmatprep.subr.bf16.mxu0 0
        %2875 = vmatpush1.bf16.msra.mxu0 0
        %2876 = vmatprep.subr.bf16.mxu0 0
        %2877 = vmatpush1.bf16.msra.mxu0 0
        %2878 = vmatprep.subr.bf16.mxu0 0
        %2879 = vmatpush1.bf16.msra.mxu0 0
        %2880 = vmatprep.subr.bf16.mxu0 0
        %2881 = vmatpush1.bf16.msra.mxu0 0
        %2882 = vmatprep.subr.bf16.mxu0 0
        %2883 = vmatpush1.bf16.msra.mxu0 0
        %2884 = vmatprep.subr.bf16.mxu0 0
        %2885 = vmatpush1.bf16.msra.mxu0 0
        %2886 = vmatprep.subr.bf16.mxu0 0
        %2887 = vmatpush1.bf16.msra.mxu0 0
        %2888 = vmatprep.subr.bf16.mxu0 0
        %2889 = vmatpush1.bf16.msra.mxu0 0
        %2890 = vmatprep.subr.bf16.mxu0 0
        %2891 = vmatpush1.bf16.msra.mxu0 0
        %2892 = vmatprep.subr.bf16.mxu0 0
        %2893 = vmatpush1.bf16.msra.mxu0 0
        %2894 = vmatprep.mubr.bf16.mxu0 0
        %2895 = vmatmul.mubr.bf16.gmra.mrb[0].mxu0 %v2860
        %v2896 = vpop.f32.mrb[0].mxu0
        %v2897 = vadd.f32 %v2846, %v2896
        %v2898 = vpop.f32.mrb[0].mxu0
        %v2899 = vpop.f32.mrb[0].mxu0
        %v2900 = vpop.f32.mrb[0].mxu0
        %2901 = vdwg.mxu0
        %v2902 = vmul.f32 %v2897, 0.5
        %v2903 = vmul.f32 %v2897, 0.044715
        %v2904 = vmul.f32 %v2903, %v2897
        %v2905 = vmul.f32 %v2904, %v2897
        %v2906 = vadd.f32 %v2897, %v2905
        %v2907 = vmul.f32 %v2906, 0.7978846
        %v2908 = vtanh.pop %v2907
        %v2909 = vadd.f32 %v2908, 1.0
        %v2910 = vmul.f32 %v2902, %v2909
        %v2911 = vpack.c.bf16 %v2910, %v2910
        %v2912 = vld [vmem:[#allocation40] sm:$0xf]
        %v2913 = vld [vmem:[#allocation40 + $0x4] sm:$0xf]
        %v2914 = vld [vmem:[#allocation41] sm:$0x1]
        %v2917 = vunpack.c.l.b16 %v2912
        %v2918 = vunpack.c.l.b16 %v2913
        %v2919 = vpack.c.b16 %v2918, %v2917
        %v2922 = vsel %vm2164, %v2911, 0
        %2924 = vmatprep.subr.bf16.mxu0 0
        %2925 = vmatpush1.bf16.msra.mxu0 %v2919
        %2926 = vmatprep.subr.bf16.mxu0 0
        %2927 = vmatpush1.bf16.msra.mxu0 0
        %2928 = vmatprep.subr.bf16.mxu0 0
        %2929 = vmatpush1.bf16.msra.mxu0 0
        %2930 = vmatprep.subr.bf16.mxu0 0
        %2931 = vmatpush1.bf16.msra.mxu0 0
        %2932 = vmatprep.subr.bf16.mxu0 0
        %2933 = vmatpush1.bf16.msra.mxu0 0
        %2934 = vmatprep.subr.bf16.mxu0 0
        %2935 = vmatpush1.bf16.msra.mxu0 0
        %2936 = vmatprep.subr.bf16.mxu0 0
        %2937 = vmatpush1.bf16.msra.mxu0 0
        %2938 = vmatprep.subr.bf16.mxu0 0
        %2939 = vmatpush1.bf16.msra.mxu0 0
        %2940 = vmatprep.subr.bf16.mxu0 0
        %2941 = vmatpush1.bf16.msra.mxu0 0
        %2942 = vmatprep.subr.bf16.mxu0 0
        %2943 = vmatpush1.bf16.msra.mxu0 0
        %2944 = vmatprep.subr.bf16.mxu0 0
        %2945 = vmatpush1.bf16.msra.mxu0 0
        %2946 = vmatprep.subr.bf16.mxu0 0
        %2947 = vmatpush1.bf16.msra.mxu0 0
        %2948 = vmatprep.subr.bf16.mxu0 0
        %2949 = vmatpush1.bf16.msra.mxu0 0
        %2950 = vmatprep.subr.bf16.mxu0 0
        %2951 = vmatpush1.bf16.msra.mxu0 0
        %2952 = vmatprep.subr.bf16.mxu0 0
        %2953 = vmatpush1.bf16.msra.mxu0 0
        %2954 = vmatprep.subr.bf16.mxu0 0
        %2955 = vmatpush1.bf16.msra.mxu0 0
        %2956 = vmatprep.mubr.bf16.mxu0 0
        %2957 = vmatmul.mubr.bf16.gmra.mrb[0].mxu0 %v2922
        %v2958 = vpop.f32.mrb[0].mxu0
        %v2959 = vadd.f32 %v2914, %v2958
        %v2960 = vpop.f32.mrb[0].mxu0
        %v2961 = vpop.f32.mrb[0].mxu0
        %v2962 = vpop.f32.mrb[0].mxu0
        %2963 = vdwg.mxu0
        %2964 = vst [vmem:[%s1153] sm:$0x1] %v2959
        %s2965 = sand.u32 %s615, 1
        %s2966 = scalar_lea.sflag [#allocation4], %s2965
        %s2967 = sand.u32 %s615, 1
        %s2968 = scalar_lea.vmem [#allocation43], %s2967
        // Predicated region
        $region236: #{tpu_custom_call.1} parent=123 // pred_check
          %p2969 = pneg %p625
        $region237: #{tpu_custom_call.1} parent=123 // pred_check_branch
          %2971 = sbr.rel (%p2969) target = $region239
        $region238: #{tpu_custom_call.1} parent=123 // pred_region
          %s2973 = ssub.s32 16, 16
          %2974 = vsyncadd %s2966, %s2973
          %s2975 = smul.addr %s56, 16
          %s2976 = scalar_lea.hbm %s26, %s2975
          %s2978 = sshll.u32 %s2968, 4
          %s2979 = int_to_ptr.vmem [resolvable:$true] %s2978
          %2981 = dma.vmem_to_hbm [thread:$0]  %s2979, 16, %s2976, %s2966
        $region239: #{tpu_custom_call.1} parent=123 // pred_fallthru
          _
      $region124: #{tpu_custom_call.1} parent=5 // pred_fallthru
        _
      %p2982 = scmp.le.s32.totalorder 2, %s51
      // Predicated region
      $region240: #{tpu_custom_call.1} parent=5 // pred_check
        %p2983 = pneg %p2982
      $region241: #{tpu_custom_call.1} parent=5 // pred_check_branch
        %2985 = sbr.rel (%p2983) target = $region243
      $region242: #{tpu_custom_call.1} parent=5 // pred_region
        %s2986 = ssub.s32 %s51, 2
        // Predicated region
        $region244: #{tpu_custom_call.1} parent=242 // pred_check
          %p2987 = pneg %p631
        $region245: #{tpu_custom_call.1} parent=242 // pred_check_branch
          %2989 = sbr.rel (%p2987) target = $region247
        $region246: #{tpu_custom_call.1} parent=242 // pred_region
          %s2990 = sand.u32 %s616, 1
          %s2991 = scalar_lea.sflag [#allocation4], %s2990
          %s2992 = sand.u32 %s616, 1
          %s2993 = scalar_lea.vmem [#allocation43], %s2992
          %2994 = dma.done %s2991, 16
        $region247: #{tpu_custom_call.1} parent=242 // pred_fallthru
          _
      $region243: #{tpu_custom_call.1} parent=5 // pred_fallthru
        _
    $region6: #{tpu_custom_call.1} parent=1 // loop_footer
      %s55 = sadd.s32 1, %s51
    $region7: #{tpu_custom_call.1} parent=1 // loop_footer_branch
      %50 = sbr.rel target = $region3
    $region8: #{tpu_custom_call.1} parent=1 // loop_exit
      _
    %2995 = vsyncpa [#allocation3], 1
    %s2996 = scalar_lea.sflag [#allocation3], 1
    %2997 = vsyncpa %s2996, 1
    %2998 = vsyncpa [#allocation6], 1
    %2999 = vsyncpa [#allocation9], 1
    %3000 = vsyncpa [#allocation12], 1
    %3001 = vsyncpa [#allocation15], 1
    %3002 = vsyncpa [#allocation18], 1
    %3003 = vsyncpa [#allocation21], 1
    %3004 = vsyncpa [#allocation24], 1
    %3005 = vsyncpa [#allocation27], 1
    %3006 = vsyncpa [#allocation30], 1
    %3007 = vsyncpa [#allocation33], 1
    %3008 = vsyncpa [#allocation36], 1
    %3009 = vsyncpa [#allocation39], 1
    %3010 = vsyncpa [#allocation42], 1
    %3011 = vsyncpa [#allocation4], 1
    %s3012 = scalar_lea.sflag [#allocation4], 1
    %3013 = vsyncpa %s3012, 1

</llo_original>
